<compile_context>
chip_gen: v5e
topology: v5e:2x2
jax: 0.10.0
libtpu: 0.0.40
codegen_flags: <defaults>
</compile_context>

<pallas_src>
import math

import jax
import jax.numpy as jnp
from jax.experimental import pallas as pl
from jax.experimental.pallas import tpu as pltpu

# Latent-resolution plane layout: each sample's 7x7 map lives in a 9x9 zero-padded plane
# (margin 1 for the 3x3 / phase-decomposed taps), flattened row-major and lane-aligned to a
# 128-column stride per sample.
_HP = 9                       # padded plane height == width
_PLANE = _HP * _HP            # 81
_SAMPLE_STRIDE = 128          # lane-aligned per-sample stride (>= _PLANE)
_MAX_SHIFT = _HP + 1          # largest |lane offset| used by any in-kernel shift (|fa|,|fb| <= 1)
# Invariant the roll-based shifts rely on: every valid lane plus the largest tap offset stays
# inside the sample's own 128-lane window, so wrap-around only lands in masked lanes.  The
# mask must also be re-applied after every layer whose output feeds a shift (it is).
assert _PLANE - 1 + _MAX_SHIFT < _SAMPLE_STRIDE

_MAX_BLOCK_SAMPLES = 8        # samples per grid block (live VMEM is a few hundred KB/sample)

# ---------------------------------------------------------------------------------------
# static tap plans (shared by the wrapper-side weight packers and the kernel patch builders)
# ---------------------------------------------------------------------------------------
# stride-2 conv (k=4, pad=1), input-phase decomposition: kernel tap di -> (input phase, offset)
_S2_TAP = {0: (1, -1), 1: (0, 0), 2: (1, 0), 3: (0, 1)}
# ConvTranspose2d (k=4, s=2, p=1), output-phase decomposition: output phase -> [(di, offset)]
_T2_TAP = {0: [(1, 0), (3, -1)], 1: [(0, 1), (2, 0)]}


def _build_tconv2_plan():
    """Plan for the 2nd transposed conv, whose input is itself stored as 4 phase planes."""
    combos_1d = []            # distinct (input plane phase, plane offset) along one axis
    taps_1d = {}              # (sigma, p2) -> [(di, index into combos_1d)]
    for sigma in range(2):
        for p2 in range(2):
            lst = []
            for di, oa in _T2_TAP[p2]:
                s = sigma + oa
                c = (s % 2, s // 2)
                if c not in combos_1d:
                    combos_1d.append(c)
                lst.append((di, combos_1d.index(c)))
            taps_1d[(sigma, p2)] = lst
    combos_2d = [(rho * 2 + tau, fa, fb)
                 for (rho, fa) in combos_1d for (tau, fb) in combos_1d]
    return combos_1d, taps_1d, combos_2d


_TC2_COMBOS_1D, _TC2_TAPS_1D, _TC2_COMBOS_2D = _build_tconv2_plan()


# ---------------------------------------------------------------------------------------
# weight packing (plain JAX, tiny; run ONCE at model init via prepare_params)
# ---------------------------------------------------------------------------------------
def _pack_dense(w):
    """(kh, kw, cin, cout) -> (cout, kh*kw*cin); row order = (tap-major, channel-minor)."""
    kh, kw, cin, cout = w.shape
    return w.reshape(kh * kw * cin, cout).T.astype(jnp.float32)


def _pack_conv1(w):
    """First 4x4/s2 conv -> (4*cout, 64): one row block per output phase plane; columns index
    (shift variant v = fa*2+fb, space-to-depth plane r*4+s) of the in-kernel conv1 stack."""
    cout = w.shape[3]
    out = jnp.zeros((4 * cout, 64), jnp.float32)
    for p in range(2):
        for q in range(2):
            pi = p * 2 + q
            for di in range(4):
                fa, r = divmod(2 * p + di, 4)
                for dj in range(4):
                    fb, s = divmod(2 * q + dj, 4)
                    col = (fa * 2 + fb) * 16 + r * 4 + s
                    out = out.at[pi * cout:(pi + 1) * cout, col].set(w[di, dj, 0, :])
    return out


def _pack_tconv1(w):
    """ConvTranspose2d(k=4,s=2,p=1) -> (4*cout, 9*cin): one row block per output phase plane,
    columns indexed by the 3x3 neighbourhood tap of the (7x7) input plane."""
    kh, kw, cin, cout = w.shape
    out = jnp.zeros((4 * cout, 9 * cin), jnp.float32)
    for p in range(2):
        for q in range(2):
            pi = p * 2 + q
            for di, fa in _T2_TAP[p]:
                for dj, fb in _T2_TAP[q]:
                    t9 = (fa + 1) * 3 + (fb + 1)
                    out = out.at[pi * cout:(pi + 1) * cout,
                                 t9 * cin:(t9 + 1) * cin].set(w[di, dj].T)
    return out


def _pack_tconv2(w):
    """2nd ConvTranspose2d -> (16, 16*cin): one row per 4x4 output sub-phase, columns indexed
    by the (input phase plane, offset) combos used for the in-kernel patch stack."""
    kh, kw, cin, cout = w.shape
    n1 = len(_TC2_COMBOS_1D)
    out = jnp.zeros((16, n1 * n1 * cin), jnp.float32)
    for ur in range(4):
        sigma, p2 = ur // 2, ur % 2
        for uc in range(4):
            tau, q2 = uc // 2, uc % 2
            sp = ur * 4 + uc
            for di, rci in _TC2_TAPS_1D[(sigma, p2)]:
                for dj, cci in _TC2_TAPS_1D[(tau, q2)]:
                    c = rci * n1 + cci
                    out = out.at[sp, c * cin:(c + 1) * cin].set(w[di, dj, :, 0])
    return out


_WEIGHT_ORDER = ('w1', 'b1', 'w2', 'b2', 'w3', 'b3',
                 'er1a', 'er1b', 'er2a', 'er2b',
                 'emb', 'embt',
                 'wd1', 'bd1', 'dr1a', 'dr1b', 'dr2a', 'dr2b',
                 'wt1', 'bt1', 'wt2', 'bt2')


def prepare_params(params):
    """One-time packing of the weights into the kernel's matmul layouts.
    Call once at model init (kept OUT of the jitted per-step path)."""
    f32 = jnp.float32

    def col_bias(b, reps=1):
        b = jnp.asarray(b, f32).reshape(1, -1)
        return jnp.tile(b, (reps, 1)).reshape(-1, 1)

    return dict(
        w1=_pack_conv1(params['enc_conv1_w']), b1=col_bias(params['enc_conv1_b'], 4),
        w2=_pack_dense(params['enc_conv2_w']), b2=col_bias(params['enc_conv2_b']),
        w3=_pack_dense(params['enc_conv3_w']), b3=col_bias(params['enc_conv3_b']),
        er1a=_pack_dense(params['enc_res1_w1']), er1b=_pack_dense(params['enc_res1_w2']),
        er2a=_pack_dense(params['enc_res2_w1']), er2b=_pack_dense(params['enc_res2_w2']),
        emb=params['emb'].astype(f32), embt=params['emb'].T.astype(f32),
        wd1=_pack_dense(params['dec_conv1_w']), bd1=col_bias(params['dec_conv1_b']),
        dr1a=_pack_dense(params['dec_res1_w1']), dr1b=_pack_dense(params['dec_res1_w2']),
        dr2a=_pack_dense(params['dec_res2_w1']), dr2b=_pack_dense(params['dec_res2_w2']),
        wt1=_pack_tconv1(params['dec_tconv1_w']), bt1=col_bias(params['dec_tconv1_b'], 4),
        wt2=_pack_tconv2(params['dec_tconv2_w']), bt2=col_bias(params['dec_tconv2_b'], 16),
    )


# ---------------------------------------------------------------------------------------
# the fused Pallas kernel (one grid step = one block of samples, all activations in VMEM)
# ---------------------------------------------------------------------------------------
def _vqvae_kernel(mask_ref, p1_ref,
                  w1_ref, b1_ref, w2_ref, b2_ref, w3_ref, b3_ref,
                  er1a_ref, er1b_ref, er2a_ref, er2b_ref,
                  emb_ref, embt_ref,
                  wd1_ref, bd1_ref, dr1a_ref, dr1b_ref, dr2a_ref, dr2b_ref,
                  wt1_ref, bt1_ref, wt2_ref, bt2_ref,
                  ze_ref, zq_ref, xhat_ref, idx_ref,
                  patch_ref):
    mask = mask_ref[...]                    # (1, M): 1.0 on valid 7x7 lanes, 0 on padding
    mp = mask.shape[1]
    hi = jax.lax.Precision.HIGHEST          # exact f32 for the VQ distance / lookup dots

    def mm(w, x):                           # MXU matmul, f32 accumulation
        return jnp.dot(w, x, preferred_element_type=jnp.float32)

    def shift(x, fa, fb):
        # value at padded-plane offset (+fa, +fb); wrap-around lands only in masked lanes.
        off = fa * _HP + fb
        if off == 0:
            return x
        return pltpu.roll(x, (-off) % mp, axis=1)

    def fill_patches3x3(x):
        # In-VMEM "im2col" into the shared scratch: 9 shifted taps stacked on sublanes.
        c = x.shape[0]
        for t, (fa, fb) in enumerate((fa, fb) for fa in (-1, 0, 1) for fb in (-1, 0, 1)):
            patch_ref[t * c:(t + 1) * c, :] = shift(x, fa, fb)
        return patch_ref[0:9 * c, :]

    def conv(wcat, stack, bias=None, relu=False):
        y = mm(wcat, stack)
        if bias is not None:
            y = y + bias
        if relu:
            y = jnp.maximum(y, 0.0)
        return y * mask                     # re-zero padding lanes for the next layer

    def resblock(x, wa, wb, post_relu=False):
        t = jnp.maximum(x, 0.0)                            # ReLU once on (C, M), not on patches
        t = jnp.maximum(mm(wa, fill_patches3x3(t)), 0.0)   # 3x3, no bias
        t = mm(wb, t)                                      # 1x1, no bias
        out = (x + t) * mask
        return jnp.maximum(out, 0.0) if post_relu else out

    # -------- encoder --------
    # conv1 (4x4, s2, p1): the 64-row tap stack is the 16 space-to-depth planes under the four
    # (0/+1, 0/+1) lane shifts; a single matmul yields all 4 output phase planes (row blocks).
    p1 = p1_ref[...]                                       # (16, M)
    patch_ref[0:16, :] = p1
    patch_ref[16:32, :] = shift(p1, 0, 1)
    patch_ref[32:48, :] = shift(p1, 1, 0)
    patch_ref[48:64, :] = shift(p1, 1, 1)
    y1 = conv(w1_ref[...], patch_ref[0:64, :], b1_ref[...], relu=True)   # (4*(D//2), M)
    hc = y1.shape[0] // 4

    # conv2 (4x4, s2, p1): input-phase taps over the 4 row blocks of y1 -> single matmul
    t = 0
    for di in range(4):
        p, fa = _S2_TAP[di]
        for dj in range(4):
            q, fb = _S2_TAP[dj]
            row0 = (p * 2 + q) * hc
            patch_ref[t * hc:(t + 1) * hc, :] = shift(y1[row0:row0 + hc, :], fa, fb)
            t += 1
    h = conv(w2_ref[...], patch_ref[0:16 * hc, :], b2_ref[...], relu=True)

    h = conv(w3_ref[...], fill_patches3x3(h), b3_ref[...])               # conv3 (3x3, s1, p1)
    h = resblock(h, er1a_ref[...], er1b_ref[...])
    z_e = resblock(h, er2a_ref[...], er2b_ref[...], post_relu=True)
    ze_ref[...] = z_e

    # -------- vector quantization (all f32, lane-dense: distances (K, M), idx (1, M)) -------
    emb = emb_ref[...]                                     # (K, D)
    nk = emb.shape[0]
    z2 = jnp.sum(z_e * z_e, axis=0, keepdims=True)         # (1, M)
    e2 = jnp.sum(emb * emb, axis=1, keepdims=True)         # (K, 1)
    ez = jnp.dot(emb, z_e, preferred_element_type=jnp.float32, precision=hi)     # (K, M)
    d2 = z2 - 2.0 * ez + e2                                # squared distances
    riota = jax.lax.broadcasted_iota(jnp.int32, d2.shape, 0)
    dmin = jnp.min(d2, axis=0, keepdims=True)
    idx = jnp.min(jnp.where(d2 == dmin, riota, nk), axis=0, keepdims=True)       # first argmin
    idx_ref[...] = idx
    onehot = (riota == idx).astype(jnp.float32)            # (K, M)
    z_q = jnp.dot(embt_ref[...], onehot,
                  preferred_element_type=jnp.float32, precision=hi) * mask
    zq_ref[...] = z_q
    z_q_st = z_e + (z_q - z_e)              # straight-through estimator (forward value)

    # -------- decoder --------
    d = conv(wd1_ref[...], fill_patches3x3(z_q_st), bd1_ref[...])
    d = resblock(d, dr1a_ref[...], dr1b_ref[...])
    d = resblock(d, dr2a_ref[...], dr2b_ref[...])
    d = jnp.maximum(d, 0.0)

    # tconv1 (4x4, s2, p1): 4 output phase planes from one 3x3 tap stack + fused ReLU
    t1 = conv(wt1_ref[...], fill_patches3x3(d), bt1_ref[...], relu=True)   # (4*(D//2), M)
    cin = t1.shape[0] // 4

    # tconv2 (4x4, s2, p1): 16 output sub-phase planes at latent resolution, single matmul
    for t, (pi, fa, fb) in enumerate(_TC2_COMBOS_2D):
        patch_ref[t * cin:(t + 1) * cin, :] = shift(t1[pi * cin:(pi + 1) * cin, :], fa, fb)
    xhat_ref[...] = mm(wt2_ref[...], patch_ref[0:16 * cin, :]) + bt2_ref[...]


# ---------------------------------------------------------------------------------------
# wrapper glue (tiny HBM-side prep + output re-assembly)
# ---------------------------------------------------------------------------------------
def _build_mask(n_samples):
    m = jnp.zeros((_HP, _HP), jnp.float32).at[1:8, 1:8].set(1.0).reshape(_PLANE)
    m = jnp.concatenate([m, jnp.zeros((_SAMPLE_STRIDE - _PLANE,), jnp.float32)])
    return jnp.tile(m, (n_samples,)).reshape(1, n_samples * _SAMPLE_STRIDE)


def _conv1_planes(x):
    """Space-to-depth (factor 4) planes of the zero-padded input in the padded, lane-aligned
    plane layout: (16, N*128).  The kernel rebuilds the 64-row conv1 tap stack from these with
    lane shifts, so no replicated im2col ever leaves HBM."""
    n = x.shape[0]
    xp = jnp.pad(x[:, 0, :, :], ((0, 0), (1, 3), (1, 3)))            # (N, 32, 32)
    s2d = xp.reshape(n, 8, 4, 8, 4).transpose(2, 4, 0, 1, 3)         # (4,4,N,8,8) = [r,s,n,a,b]
    planes = jnp.pad(s2d, ((0, 0), (0, 0), (0, 0), (1, 0), (1, 0)))  # margin-1 placement in 9x9
    planes = planes.reshape(16, n, _PLANE)
    planes = jnp.pad(planes, ((0, 0), (0, 0), (0, _SAMPLE_STRIDE - _PLANE)))
    return planes.reshape(16, n * _SAMPLE_STRIDE).astype(jnp.float32)


def _planes_to_nchw(a, n):
    c = a.shape[0]
    a = a.reshape(c, n, _SAMPLE_STRIDE)[:, :, :_PLANE].reshape(c, n, _HP, _HP)
    return a[:, :, 1:8, 1:8].transpose(1, 0, 2, 3)                   # (N, C, 7, 7)


def vqvae_forward(packed, x):
    """x: (N, 1, 28, 28) float32, NCHW (as in the PyTorch module).  `packed` is the output of
    prepare_params().  Returns (z_e, z_q_st, z_q, x_hat, indices) in NCHW / (N, 49)."""
    n = x.shape[0]
    d_lat = packed['embt'].shape[0]
    assert 9 * d_lat >= 64, "shared scratch must hold the 64-row conv1 tap stack"

    blk = n if n < _MAX_BLOCK_SAMPLES else _MAX_BLOCK_SAMPLES
    n_pad = -(-n // blk) * blk
    if n_pad != n:
        x = jnp.pad(x, ((0, n_pad - n), (0, 0), (0, 0), (0, 0)))
    mpb = blk * _SAMPLE_STRIDE                     # lanes per grid block
    mp_total = n_pad * _SAMPLE_STRIDE
    grid = (n_pad // blk,)

    weights = [packed[k] for k in _WEIGHT_ORDER]
    inputs = [_build_mask(blk), _conv1_planes(x)] + weights

    def lane_spec(rows):                           # blocks advance along the lane (M) axis
        return pl.BlockSpec((rows, mpb), lambda i: (0, i))

    def const_spec(a):                             # whole array, same block every grid step
        nd = a.ndim

        def idx_map(i):
            return (0,) * nd
        return pl.BlockSpec(a.shape, idx_map)

    in_specs = ([pl.BlockSpec((1, mpb), lambda i: (0, 0)),   # mask: one per-block pattern
                 lane_spec(16)]                              # conv1 space-to-depth planes
                + [const_spec(w) for w in weights])
    out_specs = (lane_spec(d_lat), lane_spec(d_lat), lane_spec(16), lane_spec(1))
    out_shape = (jax.ShapeDtypeStruct((d_lat, mp_total), jnp.float32),   # z_e
                 jax.ShapeDtypeStruct((d_lat, mp_total), jnp.float32),   # z_q
                 jax.ShapeDtypeStruct((16, mp_total), jnp.float32),      # x_hat (16 sub-phases)
                 jax.ShapeDtypeStruct((1, mp_total), jnp.int32))         # codebook indices

    # Advisory cost estimate (per-sample MACs at the 7x7 latent resolution).
    nbh = packed['er1a'].shape[0]
    nk = packed['emb'].shape[0]
    hc = d_lat // 2
    macs = 49 * (4 * hc * 64 + d_lat * 16 * hc + 2 * d_lat * 9 * d_lat
                 + 4 * (nbh * 9 * d_lat + d_lat * nbh)
                 + 4 * hc * 9 * d_lat + 16 * 16 * hc + 2 * nk * d_lat)
    bytes_accessed = 4 * (sum(math.prod(a.shape) for a in inputs)
                          + sum(math.prod(s.shape) for s in out_shape))
    cost = pl.CostEstimate(flops=int(2 * macs * n_pad), transcendentals=0,
                           bytes_accessed=int(bytes_accessed))

    ze, zq, xhat16, idx = pl.pallas_call(
        _vqvae_kernel,
        grid=grid,
        in_specs=in_specs,
        out_specs=out_specs,
        out_shape=out_shape,
        scratch_shapes=[pltpu.VMEM((9 * d_lat, mpb), jnp.float32)],   # shared tap-stack scratch
        compiler_params=pltpu.CompilerParams(
            dimension_semantics=("parallel",),            # independent blocks -> both TCs on v7x
            vmem_limit_bytes=min(64, 16 + 2 * blk) * 1024 * 1024),
        cost_estimate=cost,
    )(*inputs)

    z_e = _planes_to_nchw(ze, n_pad)[:n]
    z_q = _planes_to_nchw(zq, n_pad)[:n]
    z_q_st = z_e + (z_q - z_e)            # straight-through value (same expr as kernel decoder input)
    indices = (idx.reshape(n_pad, _SAMPLE_STRIDE)[:, :_PLANE]
               .reshape(n_pad, _HP, _HP)[:, 1:8, 1:8].reshape(n_pad, 49))[:n]
    xh = xhat16.reshape(4, 4, n_pad, _SAMPLE_STRIDE)[:, :, :, :_PLANE]
    xh = xh.reshape(4, 4, n_pad, _HP, _HP)[:, :, :, 1:8, 1:8]          # (ur, uc, N, 7, 7)
    x_hat = xh.transpose(2, 3, 0, 4, 1).reshape(n_pad, 28, 28)[:n, None, :, :]
    return z_e, z_q_st, z_q, x_hat, indices


# ---------------------------------------------------------------------------------------
# deterministic synthetic parameters (shapes follow the PyTorch module's __init__)
# ---------------------------------------------------------------------------------------
def init_params(key, D=16, K=8, nb_res_h=8):
    keys = iter(jax.random.split(key, 32))

    def w(shape, scale=0.05):
        return scale * jax.random.normal(next(keys), shape, jnp.float32)

    return {
        # encoder
        'enc_conv1_w': w((4, 4, 1, D // 2)),  'enc_conv1_b': w((D // 2,)),
        'enc_conv2_w': w((4, 4, D // 2, D)),  'enc_conv2_b': w((D,)),
        'enc_conv3_w': w((3, 3, D, D)),       'enc_conv3_b': w((D,)),
        'enc_res1_w1': w((3, 3, D, nb_res_h)), 'enc_res1_w2': w((1, 1, nb_res_h, D)),
        'enc_res2_w1': w((3, 3, D, nb_res_h)), 'enc_res2_w2': w((1, 1, nb_res_h, D)),
        # codebook, uniform(-1/K, 1/K) as in the reference
        'emb': jax.random.uniform(next(keys), (K, D), jnp.float32, -1.0 / K, 1.0 / K),
        # decoder
        'dec_conv1_w': w((3, 3, D, D)),       'dec_conv1_b': w((D,)),
        'dec_res1_w1': w((3, 3, D, nb_res_h)), 'dec_res1_w2': w((1, 1, nb_res_h, D)),
        'dec_res2_w1': w((3, 3, D, nb_res_h)), 'dec_res2_w2': w((1, 1, nb_res_h, D)),
        'dec_tconv1_w': w((4, 4, D, D // 2)), 'dec_tconv1_b': w((D // 2,)),
        'dec_tconv2_w': w((4, 4, D // 2, 1)), 'dec_tconv2_b': w((1,)),
    }
    # TODO(synk): the AutoRegressive LSTM prior (self._p_z) and sample()/multinomial are not
    # part of VQVAE.forward and are intentionally not implemented.


if __name__ == "__main__":
    key = jax.random.PRNGKey(0)
    pkey, xkey = jax.random.split(key)

    D, K, NB_RES_H = 16, 8, 8
    params = init_params(pkey, D=D, K=K, nb_res_h=NB_RES_H)
    packed = prepare_params(params)          # weight packing hoisted out of the jitted path

    # NCHW input, as in the PyTorch module (input_dim = (None, 1, 28, 28)).
    x = jax.random.normal(xkey, (2, 1, 28, 28), jnp.float32)

    fwd = jax.jit(vqvae_forward)
    z_e, z_q_st, z_q, x_hat, indices = fwd(packed, x)
    jax.block_until_ready((z_e, z_q_st, z_q, x_hat, indices))

    assert z_e.shape == (2, D, 7, 7)
    assert z_q_st.shape == (2, D, 7, 7)
    assert z_q.shape == (2, D, 7, 7)
    assert x_hat.shape == (2, 1, 28, 28)
    assert indices.shape == (2, 49) and indices.dtype == jnp.int32
    # VQ sanity: indices in range and z_q equals the selected codebook row at every position.
    assert int(jnp.min(indices)) >= 0 and int(jnp.max(indices)) < K
    zq_rows = z_q.transpose(0, 2, 3, 1).reshape(-1, D)
    looked_up = params['emb'][indices.reshape(-1)]
    assert float(jnp.max(jnp.abs(zq_rows - looked_up))) < 2e-2

    print("KERNEL_OK")
</pallas_src>

<mosaic_0001>
module attributes {stable_mosaic.version = 11 : i64} {
  func.func @_vqvae_kernel(%arg0: i32, %arg1: memref<1x256xf32, #tpu.memory_space<vmem>>, %arg2: memref<16x256xf32, #tpu.memory_space<vmem>>, %arg3: memref<32x64xf32, #tpu.memory_space<vmem>>, %arg4: memref<32x1xf32, #tpu.memory_space<vmem>>, %arg5: memref<16x128xf32, #tpu.memory_space<vmem>>, %arg6: memref<16x1xf32, #tpu.memory_space<vmem>>, %arg7: memref<16x144xf32, #tpu.memory_space<vmem>>, %arg8: memref<16x1xf32, #tpu.memory_space<vmem>>, %arg9: memref<8x144xf32, #tpu.memory_space<vmem>>, %arg10: memref<16x8xf32, #tpu.memory_space<vmem>>, %arg11: memref<8x144xf32, #tpu.memory_space<vmem>>, %arg12: memref<16x8xf32, #tpu.memory_space<vmem>>, %arg13: memref<8x16xf32, #tpu.memory_space<vmem>>, %arg14: memref<16x8xf32, #tpu.memory_space<vmem>>, %arg15: memref<16x144xf32, #tpu.memory_space<vmem>>, %arg16: memref<16x1xf32, #tpu.memory_space<vmem>>, %arg17: memref<8x144xf32, #tpu.memory_space<vmem>>, %arg18: memref<16x8xf32, #tpu.memory_space<vmem>>, %arg19: memref<8x144xf32, #tpu.memory_space<vmem>>, %arg20: memref<16x8xf32, #tpu.memory_space<vmem>>, %arg21: memref<32x144xf32, #tpu.memory_space<vmem>>, %arg22: memref<32x1xf32, #tpu.memory_space<vmem>>, %arg23: memref<16x128xf32, #tpu.memory_space<vmem>>, %arg24: memref<16x1xf32, #tpu.memory_space<vmem>>, %arg25: memref<16x256xf32, #tpu.memory_space<vmem>>, %arg26: memref<16x256xf32, #tpu.memory_space<vmem>>, %arg27: memref<16x256xf32, #tpu.memory_space<vmem>>, %arg28: memref<1x256xi32, #tpu.memory_space<vmem>>, %arg29: memref<144x256xf32, #tpu.memory_space<vmem>>) attributes {dimension_semantics = [#tpu.dimension_semantics<parallel>], iteration_bounds = array<i64: 1>, scalar_prefetch = 0 : i64, scratch_operands = 1 : i64, tpu.core_type = #tpu.core_type<tc>, window_params = [{pipeline_mode = #tpu.pipeline_mode<synchronous>, transform_indices = @transform_0, window_bounds = array<i64: 1, 256>}, {transform_indices = @transform_1, window_bounds = array<i64: 16, 256>}, {pipeline_mode = #tpu.pipeline_mode<synchronous>, transform_indices = @transform_2, window_bounds = array<i64: 32, 64>}, {pipeline_mode = #tpu.pipeline_mode<synchronous>, transform_indices = @transform_3, window_bounds = array<i64: 32, 1>}, {pipeline_mode = #tpu.pipeline_mode<synchronous>, transform_indices = @transform_4, window_bounds = array<i64: 16, 128>}, {pipeline_mode = #tpu.pipeline_mode<synchronous>, transform_indices = @transform_5, window_bounds = array<i64: 16, 1>}, {pipeline_mode = #tpu.pipeline_mode<synchronous>, transform_indices = @transform_6, window_bounds = array<i64: 16, 144>}, {pipeline_mode = #tpu.pipeline_mode<synchronous>, transform_indices = @transform_7, window_bounds = array<i64: 16, 1>}, {pipeline_mode = #tpu.pipeline_mode<synchronous>, transform_indices = @transform_8, window_bounds = array<i64: 8, 144>}, {pipeline_mode = #tpu.pipeline_mode<synchronous>, transform_indices = @transform_9, window_bounds = array<i64: 16, 8>}, {pipeline_mode = #tpu.pipeline_mode<synchronous>, transform_indices = @transform_10, window_bounds = array<i64: 8, 144>}, {pipeline_mode = #tpu.pipeline_mode<synchronous>, transform_indices = @transform_11, window_bounds = array<i64: 16, 8>}, {pipeline_mode = #tpu.pipeline_mode<synchronous>, transform_indices = @transform_12, window_bounds = array<i64: 8, 16>}, {pipeline_mode = #tpu.pipeline_mode<synchronous>, transform_indices = @transform_13, window_bounds = array<i64: 16, 8>}, {pipeline_mode = #tpu.pipeline_mode<synchronous>, transform_indices = @transform_14, window_bounds = array<i64: 16, 144>}, {pipeline_mode = #tpu.pipeline_mode<synchronous>, transform_indices = @transform_15, window_bounds = array<i64: 16, 1>}, {pipeline_mode = #tpu.pipeline_mode<synchronous>, transform_indices = @transform_16, window_bounds = array<i64: 8, 144>}, {pipeline_mode = #tpu.pipeline_mode<synchronous>, transform_indices = @transform_17, window_bounds = array<i64: 16, 8>}, {pipeline_mode = #tpu.pipeline_mode<synchronous>, transform_indices = @transform_18, window_bounds = array<i64: 8, 144>}, {pipeline_mode = #tpu.pipeline_mode<synchronous>, transform_indices = @transform_19, window_bounds = array<i64: 16, 8>}, {pipeline_mode = #tpu.pipeline_mode<synchronous>, transform_indices = @transform_20, window_bounds = array<i64: 32, 144>}, {pipeline_mode = #tpu.pipeline_mode<synchronous>, transform_indices = @transform_21, window_bounds = array<i64: 32, 1>}, {pipeline_mode = #tpu.pipeline_mode<synchronous>, transform_indices = @transform_22, window_bounds = array<i64: 16, 128>}, {pipeline_mode = #tpu.pipeline_mode<synchronous>, transform_indices = @transform_23, window_bounds = array<i64: 16, 1>}, {transform_indices = @transform_24, window_bounds = array<i64: 16, 256>}, {transform_indices = @transform_25, window_bounds = array<i64: 16, 256>}, {transform_indices = @transform_26, window_bounds = array<i64: 16, 256>}, {transform_indices = @transform_27, window_bounds = array<i64: 1, 256>}]} {
    %c0 = arith.constant 0 : index
    %c0_0 = arith.constant 0 : index
    %0 = vector.load %arg1[%c0, %c0_0] : memref<1x256xf32, #tpu.memory_space<vmem>>, vector<1x256xf32>
    %c0_1 = arith.constant 0 : index
    %c0_2 = arith.constant 0 : index
    %1 = vector.load %arg2[%c0_1, %c0_2] : memref<16x256xf32, #tpu.memory_space<vmem>>, vector<16x256xf32>
    %c0_3 = arith.constant 0 : index
    %c0_4 = arith.constant 0 : index
    %2 = vector.load %arg29[%c0_3, %c0_4] : memref<144x256xf32, #tpu.memory_space<vmem>>, vector<16x256xf32>
    tpu.vector_store %arg29[%c0_3, %c0_4], %1 {strides = array<i32>} : memref<144x256xf32, #tpu.memory_space<vmem>>, vector<16x256xf32>,
    %c255_i32 = arith.constant 255 : i32
    %3 = tpu.dynamic_rotate %1 by %c255_i32 dim 1 : vector<16x256xf32>, i32 -> vector<16x256xf32>
    %c16 = arith.constant 16 : index
    %c0_5 = arith.constant 0 : index
    %4 = vector.load %arg29[%c16, %c0_5] : memref<144x256xf32, #tpu.memory_space<vmem>>, vector<16x256xf32>
    tpu.vector_store %arg29[%c16, %c0_5], %3 {strides = array<i32>} : memref<144x256xf32, #tpu.memory_space<vmem>>, vector<16x256xf32>,
    %c247_i32 = arith.constant 247 : i32
    %5 = tpu.dynamic_rotate %1 by %c247_i32 dim 1 : vector<16x256xf32>, i32 -> vector<16x256xf32>
    %c32 = arith.constant 32 : index
    %c0_6 = arith.constant 0 : index
    %6 = vector.load %arg29[%c32, %c0_6] : memref<144x256xf32, #tpu.memory_space<vmem>>, vector<16x256xf32>
    tpu.vector_store %arg29[%c32, %c0_6], %5 {strides = array<i32>} : memref<144x256xf32, #tpu.memory_space<vmem>>, vector<16x256xf32>,
    %c246_i32 = arith.constant 246 : i32
    %7 = tpu.dynamic_rotate %1 by %c246_i32 dim 1 : vector<16x256xf32>, i32 -> vector<16x256xf32>
    %c48 = arith.constant 48 : index
    %c0_7 = arith.constant 0 : index
    %8 = vector.load %arg29[%c48, %c0_7] : memref<144x256xf32, #tpu.memory_space<vmem>>, vector<16x256xf32>
    tpu.vector_store %arg29[%c48, %c0_7], %7 {strides = array<i32>} : memref<144x256xf32, #tpu.memory_space<vmem>>, vector<16x256xf32>,
    %c0_8 = arith.constant 0 : index
    %c0_9 = arith.constant 0 : index
    %9 = vector.load %arg3[%c0_8, %c0_9] : memref<32x64xf32, #tpu.memory_space<vmem>>, vector<32x64xf32>
    %c0_10 = arith.constant 0 : index
    %c0_11 = arith.constant 0 : index
    %10 = vector.load %arg29[%c0_10, %c0_11] : memref<144x256xf32, #tpu.memory_space<vmem>>, vector<64x256xf32>
    %c0_12 = arith.constant 0 : index
    %c0_13 = arith.constant 0 : index
    %11 = vector.load %arg4[%c0_12, %c0_13] : memref<32x1xf32, #tpu.memory_space<vmem>>, vector<32x1xf32>
    %cst = arith.constant dense<0.000000e+00> : vector<32x256xf32>
    %12 = tpu.matmul %9, %10, %cst {dimension_numbers = #tpu.dot_dimension_numbers<[1], [0], [0], [1], [0, 0, 1, 1], [], []>} : vector<32x64xf32>, vector<64x256xf32>, vector<32x256xf32> -> vector<32x256xf32>
    %13 = vector.broadcast %11 : vector<32x1xf32> to vector<32x256xf32>
    %14 = arith.addf %12, %13 : vector<32x256xf32>
    %cst_14 = arith.constant 0.000000e+00 : f32
    %15 = vector.broadcast %cst_14 : f32 to vector<32x256xf32>
    %16 = arith.maximumf %14, %15 : vector<32x256xf32>
    %17 = vector.broadcast %0 : vector<1x256xf32> to vector<32x256xf32>
    %18 = arith.mulf %16, %17 : vector<32x256xf32>
    %19 = vector.extract_strided_slice %18 {offsets = [24, 0], sizes = [8, 256], strides = [1, 1]} : vector<32x256xf32> to vector<8x256xf32>
    %c10_i32 = arith.constant 10 : i32
    %20 = tpu.dynamic_rotate %19 by %c10_i32 dim 1 : vector<8x256xf32>, i32 -> vector<8x256xf32>
    %c0_15 = arith.constant 0 : index
    %c0_16 = arith.constant 0 : index
    %21 = vector.load %arg29[%c0_15, %c0_16] : memref<144x256xf32, #tpu.memory_space<vmem>>, vector<8x256xf32>
    tpu.vector_store %arg29[%c0_15, %c0_16], %20 {strides = array<i32>} : memref<144x256xf32, #tpu.memory_space<vmem>>, vector<8x256xf32>,
    %22 = vector.extract_strided_slice %18 {offsets = [16, 0], sizes = [8, 256], strides = [1, 1]} : vector<32x256xf32> to vector<8x256xf32>
    %c9_i32 = arith.constant 9 : i32
    %23 = tpu.dynamic_rotate %22 by %c9_i32 dim 1 : vector<8x256xf32>, i32 -> vector<8x256xf32>
    %c8 = arith.constant 8 : index
    %c0_17 = arith.constant 0 : index
    %24 = vector.load %arg29[%c8, %c0_17] : memref<144x256xf32, #tpu.memory_space<vmem>>, vector<8x256xf32>
    tpu.vector_store %arg29[%c8, %c0_17], %23 {strides = array<i32>} : memref<144x256xf32, #tpu.memory_space<vmem>>, vector<8x256xf32>,
    %25 = vector.extract_strided_slice %18 {offsets = [24, 0], sizes = [8, 256], strides = [1, 1]} : vector<32x256xf32> to vector<8x256xf32>
    %c9_i32_18 = arith.constant 9 : i32
    %26 = tpu.dynamic_rotate %25 by %c9_i32_18 dim 1 : vector<8x256xf32>, i32 -> vector<8x256xf32>
    %c16_19 = arith.constant 16 : index
    %c0_20 = arith.constant 0 : index
    %27 = vector.load %arg29[%c16_19, %c0_20] : memref<144x256xf32, #tpu.memory_space<vmem>>, vector<8x256xf32>
    tpu.vector_store %arg29[%c16_19, %c0_20], %26 {strides = array<i32>} : memref<144x256xf32, #tpu.memory_space<vmem>>, vector<8x256xf32>,
    %28 = vector.extract_strided_slice %18 {offsets = [16, 0], sizes = [8, 256], strides = [1, 1]} : vector<32x256xf32> to vector<8x256xf32>
    %c8_i32 = arith.constant 8 : i32
    %29 = tpu.dynamic_rotate %28 by %c8_i32 dim 1 : vector<8x256xf32>, i32 -> vector<8x256xf32>
    %c24 = arith.constant 24 : index
    %c0_21 = arith.constant 0 : index
    %30 = vector.load %arg29[%c24, %c0_21] : memref<144x256xf32, #tpu.memory_space<vmem>>, vector<8x256xf32>
    tpu.vector_store %arg29[%c24, %c0_21], %29 {strides = array<i32>} : memref<144x256xf32, #tpu.memory_space<vmem>>, vector<8x256xf32>,
    %31 = vector.extract_strided_slice %18 {offsets = [8, 0], sizes = [8, 256], strides = [1, 1]} : vector<32x256xf32> to vector<8x256xf32>
    %c1_i32 = arith.constant 1 : i32
    %32 = tpu.dynamic_rotate %31 by %c1_i32 dim 1 : vector<8x256xf32>, i32 -> vector<8x256xf32>
    %c32_22 = arith.constant 32 : index
    %c0_23 = arith.constant 0 : index
    %33 = vector.load %arg29[%c32_22, %c0_23] : memref<144x256xf32, #tpu.memory_space<vmem>>, vector<8x256xf32>
    tpu.vector_store %arg29[%c32_22, %c0_23], %32 {strides = array<i32>} : memref<144x256xf32, #tpu.memory_space<vmem>>, vector<8x256xf32>,
    %34 = vector.extract_strided_slice %18 {offsets = [0, 0], sizes = [8, 256], strides = [1, 1]} : vector<32x256xf32> to vector<8x256xf32>
    %c40 = arith.constant 40 : index
    %c0_24 = arith.constant 0 : index
    %35 = vector.load %arg29[%c40, %c0_24] : memref<144x256xf32, #tpu.memory_space<vmem>>, vector<8x256xf32>
    tpu.vector_store %arg29[%c40, %c0_24], %34 {strides = array<i32>} : memref<144x256xf32, #tpu.memory_space<vmem>>, vector<8x256xf32>,
    %36 = vector.extract_strided_slice %18 {offsets = [8, 0], sizes = [8, 256], strides = [1, 1]} : vector<32x256xf32> to vector<8x256xf32>
    %c48_25 = arith.constant 48 : index
    %c0_26 = arith.constant 0 : index
    %37 = vector.load %arg29[%c48_25, %c0_26] : memref<144x256xf32, #tpu.memory_space<vmem>>, vector<8x256xf32>
    tpu.vector_store %arg29[%c48_25, %c0_26], %36 {strides = array<i32>} : memref<144x256xf32, #tpu.memory_space<vmem>>, vector<8x256xf32>,
    %38 = vector.extract_strided_slice %18 {offsets = [0, 0], sizes = [8, 256], strides = [1, 1]} : vector<32x256xf32> to vector<8x256xf32>
    %c255_i32_27 = arith.constant 255 : i32
    %39 = tpu.dynamic_rotate %38 by %c255_i32_27 dim 1 : vector<8x256xf32>, i32 -> vector<8x256xf32>
    %c56 = arith.constant 56 : index
    %c0_28 = arith.constant 0 : index
    %40 = vector.load %arg29[%c56, %c0_28] : memref<144x256xf32, #tpu.memory_space<vmem>>, vector<8x256xf32>
    tpu.vector_store %arg29[%c56, %c0_28], %39 {strides = array<i32>} : memref<144x256xf32, #tpu.memory_space<vmem>>, vector<8x256xf32>,
    %41 = vector.extract_strided_slice %18 {offsets = [24, 0], sizes = [8, 256], strides = [1, 1]} : vector<32x256xf32> to vector<8x256xf32>
    %c1_i32_29 = arith.constant 1 : i32
    %42 = tpu.dynamic_rotate %41 by %c1_i32_29 dim 1 : vector<8x256xf32>, i32 -> vector<8x256xf32>
    %c64 = arith.constant 64 : index
    %c0_30 = arith.constant 0 : index
    %43 = vector.load %arg29[%c64, %c0_30] : memref<144x256xf32, #tpu.memory_space<vmem>>, vector<8x256xf32>
    tpu.vector_store %arg29[%c64, %c0_30], %42 {strides = array<i32>} : memref<144x256xf32, #tpu.memory_space<vmem>>, vector<8x256xf32>,
    %44 = vector.extract_strided_slice %18 {offsets = [16, 0], sizes = [8, 256], strides = [1, 1]} : vector<32x256xf32> to vector<8x256xf32>
    %c72 = arith.constant 72 : index
    %c0_31 = arith.constant 0 : index
    %45 = vector.load %arg29[%c72, %c0_31] : memref<144x256xf32, #tpu.memory_space<vmem>>, vector<8x256xf32>
    tpu.vector_store %arg29[%c72, %c0_31], %44 {strides = array<i32>} : memref<144x256xf32, #tpu.memory_space<vmem>>, vector<8x256xf32>,
    %46 = vector.extract_strided_slice %18 {offsets = [24, 0], sizes = [8, 256], strides = [1, 1]} : vector<32x256xf32> to vector<8x256xf32>
    %c80 = arith.constant 80 : index
    %c0_32 = arith.constant 0 : index
    %47 = vector.load %arg29[%c80, %c0_32] : memref<144x256xf32, #tpu.memory_space<vmem>>, vector<8x256xf32>
    tpu.vector_store %arg29[%c80, %c0_32], %46 {strides = array<i32>} : memref<144x256xf32, #tpu.memory_space<vmem>>, vector<8x256xf32>,
    %48 = vector.extract_strided_slice %18 {offsets = [16, 0], sizes = [8, 256], strides = [1, 1]} : vector<32x256xf32> to vector<8x256xf32>
    %c255_i32_33 = arith.constant 255 : i32
    %49 = tpu.dynamic_rotate %48 by %c255_i32_33 dim 1 : vector<8x256xf32>, i32 -> vector<8x256xf32>
    %c88 = arith.constant 88 : index
    %c0_34 = arith.constant 0 : index
    %50 = vector.load %arg29[%c88, %c0_34] : memref<144x256xf32, #tpu.memory_space<vmem>>, vector<8x256xf32>
    tpu.vector_store %arg29[%c88, %c0_34], %49 {strides = array<i32>} : memref<144x256xf32, #tpu.memory_space<vmem>>, vector<8x256xf32>,
    %51 = vector.extract_strided_slice %18 {offsets = [8, 0], sizes = [8, 256], strides = [1, 1]} : vector<32x256xf32> to vector<8x256xf32>
    %c248_i32 = arith.constant 248 : i32
    %52 = tpu.dynamic_rotate %51 by %c248_i32 dim 1 : vector<8x256xf32>, i32 -> vector<8x256xf32>
    %c96 = arith.constant 96 : index
    %c0_35 = arith.constant 0 : index
    %53 = vector.load %arg29[%c96, %c0_35] : memref<144x256xf32, #tpu.memory_space<vmem>>, vector<8x256xf32>
    tpu.vector_store %arg29[%c96, %c0_35], %52 {strides = array<i32>} : memref<144x256xf32, #tpu.memory_space<vmem>>, vector<8x256xf32>,
    %54 = vector.extract_strided_slice %18 {offsets = [0, 0], sizes = [8, 256], strides = [1, 1]} : vector<32x256xf32> to vector<8x256xf32>
    %c247_i32_36 = arith.constant 247 : i32
    %55 = tpu.dynamic_rotate %54 by %c247_i32_36 dim 1 : vector<8x256xf32>, i32 -> vector<8x256xf32>
    %c104 = arith.constant 104 : index
    %c0_37 = arith.constant 0 : index
    %56 = vector.load %arg29[%c104, %c0_37] : memref<144x256xf32, #tpu.memory_space<vmem>>, vector<8x256xf32>
    tpu.vector_store %arg29[%c104, %c0_37], %55 {strides = array<i32>} : memref<144x256xf32, #tpu.memory_space<vmem>>, vector<8x256xf32>,
    %57 = vector.extract_strided_slice %18 {offsets = [8, 0], sizes = [8, 256], strides = [1, 1]} : vector<32x256xf32> to vector<8x256xf32>
    %c247_i32_38 = arith.constant 247 : i32
    %58 = tpu.dynamic_rotate %57 by %c247_i32_38 dim 1 : vector<8x256xf32>, i32 -> vector<8x256xf32>
    %c112 = arith.constant 112 : index
    %c0_39 = arith.constant 0 : index
    %59 = vector.load %arg29[%c112, %c0_39] : memref<144x256xf32, #tpu.memory_space<vmem>>, vector<8x256xf32>
    tpu.vector_store %arg29[%c112, %c0_39], %58 {strides = array<i32>} : memref<144x256xf32, #tpu.memory_space<vmem>>, vector<8x256xf32>,
    %60 = vector.extract_strided_slice %18 {offsets = [0, 0], sizes = [8, 256], strides = [1, 1]} : vector<32x256xf32> to vector<8x256xf32>
    %c246_i32_40 = arith.constant 246 : i32
    %61 = tpu.dynamic_rotate %60 by %c246_i32_40 dim 1 : vector<8x256xf32>, i32 -> vector<8x256xf32>
    %c120 = arith.constant 120 : index
    %c0_41 = arith.constant 0 : index
    %62 = vector.load %arg29[%c120, %c0_41] : memref<144x256xf32, #tpu.memory_space<vmem>>, vector<8x256xf32>
    tpu.vector_store %arg29[%c120, %c0_41], %61 {strides = array<i32>} : memref<144x256xf32, #tpu.memory_space<vmem>>, vector<8x256xf32>,
    %c0_42 = arith.constant 0 : index
    %c0_43 = arith.constant 0 : index
    %63 = vector.load %arg5[%c0_42, %c0_43] : memref<16x128xf32, #tpu.memory_space<vmem>>, vector<16x128xf32>
    %c0_44 = arith.constant 0 : index
    %c0_45 = arith.constant 0 : index
    %64 = vector.load %arg29[%c0_44, %c0_45] : memref<144x256xf32, #tpu.memory_space<vmem>>, vector<128x256xf32>
    %c0_46 = arith.constant 0 : index
    %c0_47 = arith.constant 0 : index
    %65 = vector.load %arg6[%c0_46, %c0_47] : memref<16x1xf32, #tpu.memory_space<vmem>>, vector<16x1xf32>
    %cst_48 = arith.constant dense<0.000000e+00> : vector<16x256xf32>
    %66 = tpu.matmul %63, %64, %cst_48 {dimension_numbers = #tpu.dot_dimension_numbers<[1], [0], [0], [1], [0, 0, 1, 1], [], []>} : vector<16x128xf32>, vector<128x256xf32>, vector<16x256xf32> -> vector<16x256xf32>
    %67 = vector.broadcast %65 : vector<16x1xf32> to vector<16x256xf32>
    %68 = arith.addf %66, %67 : vector<16x256xf32>
    %cst_49 = arith.constant 0.000000e+00 : f32
    %69 = vector.broadcast %cst_49 : f32 to vector<16x256xf32>
    %70 = arith.maximumf %68, %69 : vector<16x256xf32>
    %71 = vector.broadcast %0 : vector<1x256xf32> to vector<16x256xf32>
    %72 = arith.mulf %70, %71 : vector<16x256xf32>
    %c0_50 = arith.constant 0 : index
    %c0_51 = arith.constant 0 : index
    %73 = vector.load %arg7[%c0_50, %c0_51] : memref<16x144xf32, #tpu.memory_space<vmem>>, vector<16x144xf32>
    %c10_i32_52 = arith.constant 10 : i32
    %74 = tpu.dynamic_rotate %72 by %c10_i32_52 dim 1 : vector<16x256xf32>, i32 -> vector<16x256xf32>
    %c0_53 = arith.constant 0 : index
    %c0_54 = arith.constant 0 : index
    %75 = vector.load %arg29[%c0_53, %c0_54] : memref<144x256xf32, #tpu.memory_space<vmem>>, vector<16x256xf32>
    tpu.vector_store %arg29[%c0_53, %c0_54], %74 {strides = array<i32>} : memref<144x256xf32, #tpu.memory_space<vmem>>, vector<16x256xf32>,
    %c9_i32_55 = arith.constant 9 : i32
    %76 = tpu.dynamic_rotate %72 by %c9_i32_55 dim 1 : vector<16x256xf32>, i32 -> vector<16x256xf32>
    %c16_56 = arith.constant 16 : index
    %c0_57 = arith.constant 0 : index
    %77 = vector.load %arg29[%c16_56, %c0_57] : memref<144x256xf32, #tpu.memory_space<vmem>>, vector<16x256xf32>
    tpu.vector_store %arg29[%c16_56, %c0_57], %76 {strides = array<i32>} : memref<144x256xf32, #tpu.memory_space<vmem>>, vector<16x256xf32>,
    %c8_i32_58 = arith.constant 8 : i32
    %78 = tpu.dynamic_rotate %72 by %c8_i32_58 dim 1 : vector<16x256xf32>, i32 -> vector<16x256xf32>
    %c32_59 = arith.constant 32 : index
    %c0_60 = arith.constant 0 : index
    %79 = vector.load %arg29[%c32_59, %c0_60] : memref<144x256xf32, #tpu.memory_space<vmem>>, vector<16x256xf32>
    tpu.vector_store %arg29[%c32_59, %c0_60], %78 {strides = array<i32>} : memref<144x256xf32, #tpu.memory_space<vmem>>, vector<16x256xf32>,
    %c1_i32_61 = arith.constant 1 : i32
    %80 = tpu.dynamic_rotate %72 by %c1_i32_61 dim 1 : vector<16x256xf32>, i32 -> vector<16x256xf32>
    %c48_62 = arith.constant 48 : index
    %c0_63 = arith.constant 0 : index
    %81 = vector.load %arg29[%c48_62, %c0_63] : memref<144x256xf32, #tpu.memory_space<vmem>>, vector<16x256xf32>
    tpu.vector_store %arg29[%c48_62, %c0_63], %80 {strides = array<i32>} : memref<144x256xf32, #tpu.memory_space<vmem>>, vector<16x256xf32>,
    %c64_64 = arith.constant 64 : index
    %c0_65 = arith.constant 0 : index
    %82 = vector.load %arg29[%c64_64, %c0_65] : memref<144x256xf32, #tpu.memory_space<vmem>>, vector<16x256xf32>
    tpu.vector_store %arg29[%c64_64, %c0_65], %72 {strides = array<i32>} : memref<144x256xf32, #tpu.memory_space<vmem>>, vector<16x256xf32>,
    %c255_i32_66 = arith.constant 255 : i32
    %83 = tpu.dynamic_rotate %72 by %c255_i32_66 dim 1 : vector<16x256xf32>, i32 -> vector<16x256xf32>
    %c80_67 = arith.constant 80 : index
    %c0_68 = arith.constant 0 : index
    %84 = vector.load %arg29[%c80_67, %c0_68] : memref<144x256xf32, #tpu.memory_space<vmem>>, vector<16x256xf32>
    tpu.vector_store %arg29[%c80_67, %c0_68], %83 {strides = array<i32>} : memref<144x256xf32, #tpu.memory_space<vmem>>, vector<16x256xf32>,
    %c248_i32_69 = arith.constant 248 : i32
    %85 = tpu.dynamic_rotate %72 by %c248_i32_69 dim 1 : vector<16x256xf32>, i32 -> vector<16x256xf32>
    %c96_70 = arith.constant 96 : index
    %c0_71 = arith.constant 0 : index
    %86 = vector.load %arg29[%c96_70, %c0_71] : memref<144x256xf32, #tpu.memory_space<vmem>>, vector<16x256xf32>
    tpu.vector_store %arg29[%c96_70, %c0_71], %85 {strides = array<i32>} : memref<144x256xf32, #tpu.memory_space<vmem>>, vector<16x256xf32>,
    %c247_i32_72 = arith.constant 247 : i32
    %87 = tpu.dynamic_rotate %72 by %c247_i32_72 dim 1 : vector<16x256xf32>, i32 -> vector<16x256xf32>
    %c112_73 = arith.constant 112 : index
    %c0_74 = arith.constant 0 : index
    %88 = vector.load %arg29[%c112_73, %c0_74] : memref<144x256xf32, #tpu.memory_space<vmem>>, vector<16x256xf32>
    tpu.vector_store %arg29[%c112_73, %c0_74], %87 {strides = array<i32>} : memref<144x256xf32, #tpu.memory_space<vmem>>, vector<16x256xf32>,
    %c246_i32_75 = arith.constant 246 : i32
    %89 = tpu.dynamic_rotate %72 by %c246_i32_75 dim 1 : vector<16x256xf32>, i32 -> vector<16x256xf32>
    %c128 = arith.constant 128 : index
    %c0_76 = arith.constant 0 : index
    %90 = vector.load %arg29[%c128, %c0_76] : memref<144x256xf32, #tpu.memory_space<vmem>>, vector<16x256xf32>
    tpu.vector_store %arg29[%c128, %c0_76], %89 {strides = array<i32>} : memref<144x256xf32, #tpu.memory_space<vmem>>, vector<16x256xf32>,
    %c0_77 = arith.constant 0 : index
    %c0_78 = arith.constant 0 : index
    %91 = vector.load %arg29[%c0_77, %c0_78] : memref<144x256xf32, #tpu.memory_space<vmem>>, vector<144x256xf32>
    %c0_79 = arith.constant 0 : index
    %c0_80 = arith.constant 0 : index
    %92 = vector.load %arg8[%c0_79, %c0_80] : memref<16x1xf32, #tpu.memory_space<vmem>>, vector<16x1xf32>
    %cst_81 = arith.constant dense<0.000000e+00> : vector<16x256xf32>
    %93 = tpu.matmul %73, %91, %cst_81 {dimension_numbers = #tpu.dot_dimension_numbers<[1], [0], [0], [1], [0, 0, 1, 1], [], []>} : vector<16x144xf32>, vector<144x256xf32>, vector<16x256xf32> -> vector<16x256xf32>
    %94 = vector.broadcast %92 : vector<16x1xf32> to vector<16x256xf32>
    %95 = arith.addf %93, %94 : vector<16x256xf32>
    %96 = vector.broadcast %0 : vector<1x256xf32> to vector<16x256xf32>
    %97 = arith.mulf %95, %96 : vector<16x256xf32>
    %c0_82 = arith.constant 0 : index
    %c0_83 = arith.constant 0 : index
    %98 = vector.load %arg9[%c0_82, %c0_83] : memref<8x144xf32, #tpu.memory_space<vmem>>, vector<8x144xf32>
    %c0_84 = arith.constant 0 : index
    %c0_85 = arith.constant 0 : index
    %99 = vector.load %arg10[%c0_84, %c0_85] : memref<16x8xf32, #tpu.memory_space<vmem>>, vector<16x8xf32>
    %cst_86 = arith.constant 0.000000e+00 : f32
    %100 = vector.broadcast %cst_86 : f32 to vector<16x256xf32>
    %101 = arith.maximumf %97, %100 : vector<16x256xf32>
    %c10_i32_87 = arith.constant 10 : i32
    %102 = tpu.dynamic_rotate %101 by %c10_i32_87 dim 1 : vector<16x256xf32>, i32 -> vector<16x256xf32>
    %c0_88 = arith.constant 0 : index
    %c0_89 = arith.constant 0 : index
    %103 = vector.load %arg29[%c0_88, %c0_89] : memref<144x256xf32, #tpu.memory_space<vmem>>, vector<16x256xf32>
    tpu.vector_store %arg29[%c0_88, %c0_89], %102 {strides = array<i32>} : memref<144x256xf32, #tpu.memory_space<vmem>>, vector<16x256xf32>,
    %c9_i32_90 = arith.constant 9 : i32
    %104 = tpu.dynamic_rotate %101 by %c9_i32_90 dim 1 : vector<16x256xf32>, i32 -> vector<16x256xf32>
    %c16_91 = arith.constant 16 : index
    %c0_92 = arith.constant 0 : index
    %105 = vector.load %arg29[%c16_91, %c0_92] : memref<144x256xf32, #tpu.memory_space<vmem>>, vector<16x256xf32>
    tpu.vector_store %arg29[%c16_91, %c0_92], %104 {strides = array<i32>} : memref<144x256xf32, #tpu.memory_space<vmem>>, vector<16x256xf32>,
    %c8_i32_93 = arith.constant 8 : i32
    %106 = tpu.dynamic_rotate %101 by %c8_i32_93 dim 1 : vector<16x256xf32>, i32 -> vector<16x256xf32>
    %c32_94 = arith.constant 32 : index
    %c0_95 = arith.constant 0 : index
    %107 = vector.load %arg29[%c32_94, %c0_95] : memref<144x256xf32, #tpu.memory_space<vmem>>, vector<16x256xf32>
    tpu.vector_store %arg29[%c32_94, %c0_95], %106 {strides = array<i32>} : memref<144x256xf32, #tpu.memory_space<vmem>>, vector<16x256xf32>,
    %c1_i32_96 = arith.constant 1 : i32
    %108 = tpu.dynamic_rotate %101 by %c1_i32_96 dim 1 : vector<16x256xf32>, i32 -> vector<16x256xf32>
    %c48_97 = arith.constant 48 : index
    %c0_98 = arith.constant 0 : index
    %109 = vector.load %arg29[%c48_97, %c0_98] : memref<144x256xf32, #tpu.memory_space<vmem>>, vector<16x256xf32>
    tpu.vector_store %arg29[%c48_97, %c0_98], %108 {strides = array<i32>} : memref<144x256xf32, #tpu.memory_space<vmem>>, vector<16x256xf32>,
    %c64_99 = arith.constant 64 : index
    %c0_100 = arith.constant 0 : index
    %110 = vector.load %arg29[%c64_99, %c0_100] : memref<144x256xf32, #tpu.memory_space<vmem>>, vector<16x256xf32>
    tpu.vector_store %arg29[%c64_99, %c0_100], %101 {strides = array<i32>} : memref<144x256xf32, #tpu.memory_space<vmem>>, vector<16x256xf32>,
    %c255_i32_101 = arith.constant 255 : i32
    %111 = tpu.dynamic_rotate %101 by %c255_i32_101 dim 1 : vector<16x256xf32>, i32 -> vector<16x256xf32>
    %c80_102 = arith.constant 80 : index
    %c0_103 = arith.constant 0 : index
    %112 = vector.load %arg29[%c80_102, %c0_103] : memref<144x256xf32, #tpu.memory_space<vmem>>, vector<16x256xf32>
    tpu.vector_store %arg29[%c80_102, %c0_103], %111 {strides = array<i32>} : memref<144x256xf32, #tpu.memory_space<vmem>>, vector<16x256xf32>,
    %c248_i32_104 = arith.constant 248 : i32
    %113 = tpu.dynamic_rotate %101 by %c248_i32_104 dim 1 : vector<16x256xf32>, i32 -> vector<16x256xf32>
    %c96_105 = arith.constant 96 : index
    %c0_106 = arith.constant 0 : index
    %114 = vector.load %arg29[%c96_105, %c0_106] : memref<144x256xf32, #tpu.memory_space<vmem>>, vector<16x256xf32>
    tpu.vector_store %arg29[%c96_105, %c0_106], %113 {strides = array<i32>} : memref<144x256xf32, #tpu.memory_space<vmem>>, vector<16x256xf32>,
    %c247_i32_107 = arith.constant 247 : i32
    %115 = tpu.dynamic_rotate %101 by %c247_i32_107 dim 1 : vector<16x256xf32>, i32 -> vector<16x256xf32>
    %c112_108 = arith.constant 112 : index
    %c0_109 = arith.constant 0 : index
    %116 = vector.load %arg29[%c112_108, %c0_109] : memref<144x256xf32, #tpu.memory_space<vmem>>, vector<16x256xf32>
    tpu.vector_store %arg29[%c112_108, %c0_109], %115 {strides = array<i32>} : memref<144x256xf32, #tpu.memory_space<vmem>>, vector<16x256xf32>,
    %c246_i32_110 = arith.constant 246 : i32
    %117 = tpu.dynamic_rotate %101 by %c246_i32_110 dim 1 : vector<16x256xf32>, i32 -> vector<16x256xf32>
    %c128_111 = arith.constant 128 : index
    %c0_112 = arith.constant 0 : index
    %118 = vector.load %arg29[%c128_111, %c0_112] : memref<144x256xf32, #tpu.memory_space<vmem>>, vector<16x256xf32>
    tpu.vector_store %arg29[%c128_111, %c0_112], %117 {strides = array<i32>} : memref<144x256xf32, #tpu.memory_space<vmem>>, vector<16x256xf32>,
    %c0_113 = arith.constant 0 : index
    %c0_114 = arith.constant 0 : index
    %119 = vector.load %arg29[%c0_113, %c0_114] : memref<144x256xf32, #tpu.memory_space<vmem>>, vector<144x256xf32>
    %cst_115 = arith.constant dense<0.000000e+00> : vector<8x256xf32>
    %120 = tpu.matmul %98, %119, %cst_115 {dimension_numbers = #tpu.dot_dimension_numbers<[1], [0], [0], [1], [0, 0, 1, 1], [], []>} : vector<8x144xf32>, vector<144x256xf32>, vector<8x256xf32> -> vector<8x256xf32>
    %cst_116 = arith.constant 0.000000e+00 : f32
    %121 = vector.broadcast %cst_116 : f32 to vector<8x256xf32>
    %122 = arith.maximumf %120, %121 : vector<8x256xf32>
    %cst_117 = arith.constant dense<0.000000e+00> : vector<16x256xf32>
    %123 = tpu.matmul %99, %122, %cst_117 {dimension_numbers = #tpu.dot_dimension_numbers<[1], [0], [0], [1], [0, 0, 1, 1], [], []>} : vector<16x8xf32>, vector<8x256xf32>, vector<16x256xf32> -> vector<16x256xf32>
    %124 = arith.addf %97, %123 : vector<16x256xf32>
    %125 = vector.broadcast %0 : vector<1x256xf32> to vector<16x256xf32>
    %126 = arith.mulf %124, %125 : vector<16x256xf32>
    %c0_118 = arith.constant 0 : index
    %c0_119 = arith.constant 0 : index
    %127 = vector.load %arg11[%c0_118, %c0_119] : memref<8x144xf32, #tpu.memory_space<vmem>>, vector<8x144xf32>
    %c0_120 = arith.constant 0 : index
    %c0_121 = arith.constant 0 : index
    %128 = vector.load %arg12[%c0_120, %c0_121] : memref<16x8xf32, #tpu.memory_space<vmem>>, vector<16x8xf32>
    %cst_122 = arith.constant 0.000000e+00 : f32
    %129 = vector.broadcast %cst_122 : f32 to vector<16x256xf32>
    %130 = arith.maximumf %126, %129 : vector<16x256xf32>
    %c10_i32_123 = arith.constant 10 : i32
    %131 = tpu.dynamic_rotate %130 by %c10_i32_123 dim 1 : vector<16x256xf32>, i32 -> vector<16x256xf32>
    %c0_124 = arith.constant 0 : index
    %c0_125 = arith.constant 0 : index
    %132 = vector.load %arg29[%c0_124, %c0_125] : memref<144x256xf32, #tpu.memory_space<vmem>>, vector<16x256xf32>
    tpu.vector_store %arg29[%c0_124, %c0_125], %131 {strides = array<i32>} : memref<144x256xf32, #tpu.memory_space<vmem>>, vector<16x256xf32>,
    %c9_i32_126 = arith.constant 9 : i32
    %133 = tpu.dynamic_rotate %130 by %c9_i32_126 dim 1 : vector<16x256xf32>, i32 -> vector<16x256xf32>
    %c16_127 = arith.constant 16 : index
    %c0_128 = arith.constant 0 : index
    %134 = vector.load %arg29[%c16_127, %c0_128] : memref<144x256xf32, #tpu.memory_space<vmem>>, vector<16x256xf32>
    tpu.vector_store %arg29[%c16_127, %c0_128], %133 {strides = array<i32>} : memref<144x256xf32, #tpu.memory_space<vmem>>, vector<16x256xf32>,
    %c8_i32_129 = arith.constant 8 : i32
    %135 = tpu.dynamic_rotate %130 by %c8_i32_129 dim 1 : vector<16x256xf32>, i32 -> vector<16x256xf32>
    %c32_130 = arith.constant 32 : index
    %c0_131 = arith.constant 0 : index
    %136 = vector.load %arg29[%c32_130, %c0_131] : memref<144x256xf32, #tpu.memory_space<vmem>>, vector<16x256xf32>
    tpu.vector_store %arg29[%c32_130, %c0_131], %135 {strides = array<i32>} : memref<144x256xf32, #tpu.memory_space<vmem>>, vector<16x256xf32>,
    %c1_i32_132 = arith.constant 1 : i32
    %137 = tpu.dynamic_rotate %130 by %c1_i32_132 dim 1 : vector<16x256xf32>, i32 -> vector<16x256xf32>
    %c48_133 = arith.constant 48 : index
    %c0_134 = arith.constant 0 : index
    %138 = vector.load %arg29[%c48_133, %c0_134] : memref<144x256xf32, #tpu.memory_space<vmem>>, vector<16x256xf32>
    tpu.vector_store %arg29[%c48_133, %c0_134], %137 {strides = array<i32>} : memref<144x256xf32, #tpu.memory_space<vmem>>, vector<16x256xf32>,
    %c64_135 = arith.constant 64 : index
    %c0_136 = arith.constant 0 : index
    %139 = vector.load %arg29[%c64_135, %c0_136] : memref<144x256xf32, #tpu.memory_space<vmem>>, vector<16x256xf32>
    tpu.vector_store %arg29[%c64_135, %c0_136], %130 {strides = array<i32>} : memref<144x256xf32, #tpu.memory_space<vmem>>, vector<16x256xf32>,
    %c255_i32_137 = arith.constant 255 : i32
    %140 = tpu.dynamic_rotate %130 by %c255_i32_137 dim 1 : vector<16x256xf32>, i32 -> vector<16x256xf32>
    %c80_138 = arith.constant 80 : index
    %c0_139 = arith.constant 0 : index
    %141 = vector.load %arg29[%c80_138, %c0_139] : memref<144x256xf32, #tpu.memory_space<vmem>>, vector<16x256xf32>
    tpu.vector_store %arg29[%c80_138, %c0_139], %140 {strides = array<i32>} : memref<144x256xf32, #tpu.memory_space<vmem>>, vector<16x256xf32>,
    %c248_i32_140 = arith.constant 248 : i32
    %142 = tpu.dynamic_rotate %130 by %c248_i32_140 dim 1 : vector<16x256xf32>, i32 -> vector<16x256xf32>
    %c96_141 = arith.constant 96 : index
    %c0_142 = arith.constant 0 : index
    %143 = vector.load %arg29[%c96_141, %c0_142] : memref<144x256xf32, #tpu.memory_space<vmem>>, vector<16x256xf32>
    tpu.vector_store %arg29[%c96_141, %c0_142], %142 {strides = array<i32>} : memref<144x256xf32, #tpu.memory_space<vmem>>, vector<16x256xf32>,
    %c247_i32_143 = arith.constant 247 : i32
    %144 = tpu.dynamic_rotate %130 by %c247_i32_143 dim 1 : vector<16x256xf32>, i32 -> vector<16x256xf32>
    %c112_144 = arith.constant 112 : index
    %c0_145 = arith.constant 0 : index
    %145 = vector.load %arg29[%c112_144, %c0_145] : memref<144x256xf32, #tpu.memory_space<vmem>>, vector<16x256xf32>
    tpu.vector_store %arg29[%c112_144, %c0_145], %144 {strides = array<i32>} : memref<144x256xf32, #tpu.memory_space<vmem>>, vector<16x256xf32>,
    %c246_i32_146 = arith.constant 246 : i32
    %146 = tpu.dynamic_rotate %130 by %c246_i32_146 dim 1 : vector<16x256xf32>, i32 -> vector<16x256xf32>
    %c128_147 = arith.constant 128 : index
    %c0_148 = arith.constant 0 : index
    %147 = vector.load %arg29[%c128_147, %c0_148] : memref<144x256xf32, #tpu.memory_space<vmem>>, vector<16x256xf32>
    tpu.vector_store %arg29[%c128_147, %c0_148], %146 {strides = array<i32>} : memref<144x256xf32, #tpu.memory_space<vmem>>, vector<16x256xf32>,
    %c0_149 = arith.constant 0 : index
    %c0_150 = arith.constant 0 : index
    %148 = vector.load %arg29[%c0_149, %c0_150] : memref<144x256xf32, #tpu.memory_space<vmem>>, vector<144x256xf32>
    %cst_151 = arith.constant dense<0.000000e+00> : vector<8x256xf32>
    %149 = tpu.matmul %127, %148, %cst_151 {dimension_numbers = #tpu.dot_dimension_numbers<[1], [0], [0], [1], [0, 0, 1, 1], [], []>} : vector<8x144xf32>, vector<144x256xf32>, vector<8x256xf32> -> vector<8x256xf32>
    %cst_152 = arith.constant 0.000000e+00 : f32
    %150 = vector.broadcast %cst_152 : f32 to vector<8x256xf32>
    %151 = arith.maximumf %149, %150 : vector<8x256xf32>
    %cst_153 = arith.constant dense<0.000000e+00> : vector<16x256xf32>
    %152 = tpu.matmul %128, %151, %cst_153 {dimension_numbers = #tpu.dot_dimension_numbers<[1], [0], [0], [1], [0, 0, 1, 1], [], []>} : vector<16x8xf32>, vector<8x256xf32>, vector<16x256xf32> -> vector<16x256xf32>
    %153 = arith.addf %126, %152 : vector<16x256xf32>
    %154 = vector.broadcast %0 : vector<1x256xf32> to vector<16x256xf32>
    %155 = arith.mulf %153, %154 : vector<16x256xf32>
    %cst_154 = arith.constant 0.000000e+00 : f32
    %156 = vector.broadcast %cst_154 : f32 to vector<16x256xf32>
    %157 = arith.maximumf %155, %156 : vector<16x256xf32>
    %c0_155 = arith.constant 0 : index
    %c0_156 = arith.constant 0 : index
    %158 = vector.load %arg25[%c0_155, %c0_156] : memref<16x256xf32, #tpu.memory_space<vmem>>, vector<16x256xf32>
    tpu.vector_store %arg25[%c0_155, %c0_156], %157 {strides = array<i32>} : memref<16x256xf32, #tpu.memory_space<vmem>>, vector<16x256xf32>,
    %c0_157 = arith.constant 0 : index
    %c0_158 = arith.constant 0 : index
    %159 = vector.load %arg13[%c0_157, %c0_158] : memref<8x16xf32, #tpu.memory_space<vmem>>, vector<8x16xf32>
    %160 = arith.mulf %157, %157 : vector<16x256xf32>
    %cst_159 = arith.constant dense<0.000000e+00> : vector<256xf32>
    %161 = vector.multi_reduction <add>, %160, %cst_159 [0] : vector<16x256xf32> to vector<256xf32>
    %162 = vector.shape_cast %161 : vector<256xf32> to vector<1x256xf32>
    %163 = arith.mulf %159, %159 : vector<8x16xf32>
    %cst_160 = arith.constant dense<0.000000e+00> : vector<8xf32>
    %164 = vector.multi_reduction <add>, %163, %cst_160 [1] : vector<8x16xf32> to vector<8xf32>
    %165 = vector.shape_cast %164 : vector<8xf32> to vector<8x1xf32>
    %cst_161 = arith.constant dense<0.000000e+00> : vector<8x256xf32>
    %166 = tpu.matmul %159, %157, %cst_161 {dimension_numbers = #tpu.dot_dimension_numbers<[1], [0], [0], [1], [0, 0, 1, 1], [], []>, precision = #tpu.contract_precision<fp32>} : vector<8x16xf32>, vector<16x256xf32>, vector<8x256xf32> -> vector<8x256xf32>
    %cst_162 = arith.constant 2.000000e+00 : f32
    %167 = vector.broadcast %cst_162 : f32 to vector<8x256xf32>
    %168 = arith.mulf %167, %166 : vector<8x256xf32>
    %169 = vector.broadcast %162 : vector<1x256xf32> to vector<8x256xf32>
    %170 = arith.subf %169, %168 : vector<8x256xf32>
    %171 = vector.broadcast %165 : vector<8x1xf32> to vector<8x256xf32>
    %172 = arith.addf %170, %171 : vector<8x256xf32>
    %173 = tpu.iota {dimensions = array<i32: 0>} : vector<8x256xi32>
    %cst_163 = arith.constant dense<0x7F800000> : vector<256xf32>
    %174 = vector.multi_reduction <minimumf>, %172, %cst_163 [0] : vector<8x256xf32> to vector<256xf32>
    %175 = vector.shape_cast %174 : vector<256xf32> to vector<1x256xf32>
    %176 = vector.broadcast %175 : vector<1x256xf32> to vector<8x256xf32>
    %177 = arith.cmpf oeq, %172, %176 : vector<8x256xf32>
    %c8_i32_164 = arith.constant 8 : i32
    %178 = vector.broadcast %c8_i32_164 : i32 to vector<8x256xi32>
    %179 = arith.select %177, %173, %178 : vector<8x256xi1>, vector<8x256xi32>
    %cst_165 = arith.constant dense<2147483647> : vector<256xi32>
    %180 = vector.multi_reduction <minsi>, %179, %cst_165 [0] : vector<8x256xi32> to vector<256xi32>
    %181 = vector.shape_cast %180 : vector<256xi32> to vector<1x256xi32>
    %c0_166 = arith.constant 0 : index
    %c0_167 = arith.constant 0 : index
    %182 = vector.load %arg28[%c0_166, %c0_167] : memref<1x256xi32, #tpu.memory_space<vmem>>, vector<1x256xi32>
    tpu.vector_store %arg28[%c0_166, %c0_167], %181 {strides = array<i32>} : memref<1x256xi32, #tpu.memory_space<vmem>>, vector<1x256xi32>,
    %183 = vector.broadcast %181 : vector<1x256xi32> to vector<8x256xi32>
    %184 = arith.cmpi eq, %173, %183 : vector<8x256xi32>
    %185 = arith.extui %184 : vector<8x256xi1> to vector<8x256xi32>
    %186 = arith.sitofp %185 : vector<8x256xi32> to vector<8x256xf32>
    %c0_168 = arith.constant 0 : index
    %c0_169 = arith.constant 0 : index
    %187 = vector.load %arg14[%c0_168, %c0_169] : memref<16x8xf32, #tpu.memory_space<vmem>>, vector<16x8xf32>
    %cst_170 = arith.constant dense<0.000000e+00> : vector<16x256xf32>
    %188 = tpu.matmul %187, %186, %cst_170 {dimension_numbers = #tpu.dot_dimension_numbers<[1], [0], [0], [1], [0, 0, 1, 1], [], []>, precision = #tpu.contract_precision<fp32>} : vector<16x8xf32>, vector<8x256xf32>, vector<16x256xf32> -> vector<16x256xf32>
    %189 = vector.broadcast %0 : vector<1x256xf32> to vector<16x256xf32>
    %190 = arith.mulf %188, %189 : vector<16x256xf32>
    %c0_171 = arith.constant 0 : index
    %c0_172 = arith.constant 0 : index
    %191 = vector.load %arg26[%c0_171, %c0_172] : memref<16x256xf32, #tpu.memory_space<vmem>>, vector<16x256xf32>
    tpu.vector_store %arg26[%c0_171, %c0_172], %190 {strides = array<i32>} : memref<16x256xf32, #tpu.memory_space<vmem>>, vector<16x256xf32>,
    %192 = arith.subf %190, %157 : vector<16x256xf32>
    %193 = arith.addf %157, %192 : vector<16x256xf32>
    %c0_173 = arith.constant 0 : index
    %c0_174 = arith.constant 0 : index
    %194 = vector.load %arg15[%c0_173, %c0_174] : memref<16x144xf32, #tpu.memory_space<vmem>>, vector<16x144xf32>
    %c10_i32_175 = arith.constant 10 : i32
    %195 = tpu.dynamic_rotate %193 by %c10_i32_175 dim 1 : vector<16x256xf32>, i32 -> vector<16x256xf32>
    %c0_176 = arith.constant 0 : index
    %c0_177 = arith.constant 0 : index
    %196 = vector.load %arg29[%c0_176, %c0_177] : memref<144x256xf32, #tpu.memory_space<vmem>>, vector<16x256xf32>
    tpu.vector_store %arg29[%c0_176, %c0_177], %195 {strides = array<i32>} : memref<144x256xf32, #tpu.memory_space<vmem>>, vector<16x256xf32>,
    %c9_i32_178 = arith.constant 9 : i32
    %197 = tpu.dynamic_rotate %193 by %c9_i32_178 dim 1 : vector<16x256xf32>, i32 -> vector<16x256xf32>
    %c16_179 = arith.constant 16 : index
    %c0_180 = arith.constant 0 : index
    %198 = vector.load %arg29[%c16_179, %c0_180] : memref<144x256xf32, #tpu.memory_space<vmem>>, vector<16x256xf32>
    tpu.vector_store %arg29[%c16_179, %c0_180], %197 {strides = array<i32>} : memref<144x256xf32, #tpu.memory_space<vmem>>, vector<16x256xf32>,
    %c8_i32_181 = arith.constant 8 : i32
    %199 = tpu.dynamic_rotate %193 by %c8_i32_181 dim 1 : vector<16x256xf32>, i32 -> vector<16x256xf32>
    %c32_182 = arith.constant 32 : index
    %c0_183 = arith.constant 0 : index
    %200 = vector.load %arg29[%c32_182, %c0_183] : memref<144x256xf32, #tpu.memory_space<vmem>>, vector<16x256xf32>
    tpu.vector_store %arg29[%c32_182, %c0_183], %199 {strides = array<i32>} : memref<144x256xf32, #tpu.memory_space<vmem>>, vector<16x256xf32>,
    %c1_i32_184 = arith.constant 1 : i32
    %201 = tpu.dynamic_rotate %193 by %c1_i32_184 dim 1 : vector<16x256xf32>, i32 -> vector<16x256xf32>
    %c48_185 = arith.constant 48 : index
    %c0_186 = arith.constant 0 : index
    %202 = vector.load %arg29[%c48_185, %c0_186] : memref<144x256xf32, #tpu.memory_space<vmem>>, vector<16x256xf32>
    tpu.vector_store %arg29[%c48_185, %c0_186], %201 {strides = array<i32>} : memref<144x256xf32, #tpu.memory_space<vmem>>, vector<16x256xf32>,
    %c64_187 = arith.constant 64 : index
    %c0_188 = arith.constant 0 : index
    %203 = vector.load %arg29[%c64_187, %c0_188] : memref<144x256xf32, #tpu.memory_space<vmem>>, vector<16x256xf32>
    tpu.vector_store %arg29[%c64_187, %c0_188], %193 {strides = array<i32>} : memref<144x256xf32, #tpu.memory_space<vmem>>, vector<16x256xf32>,
    %c255_i32_189 = arith.constant 255 : i32
    %204 = tpu.dynamic_rotate %193 by %c255_i32_189 dim 1 : vector<16x256xf32>, i32 -> vector<16x256xf32>
    %c80_190 = arith.constant 80 : index
    %c0_191 = arith.constant 0 : index
    %205 = vector.load %arg29[%c80_190, %c0_191] : memref<144x256xf32, #tpu.memory_space<vmem>>, vector<16x256xf32>
    tpu.vector_store %arg29[%c80_190, %c0_191], %204 {strides = array<i32>} : memref<144x256xf32, #tpu.memory_space<vmem>>, vector<16x256xf32>,
    %c248_i32_192 = arith.constant 248 : i32
    %206 = tpu.dynamic_rotate %193 by %c248_i32_192 dim 1 : vector<16x256xf32>, i32 -> vector<16x256xf32>
    %c96_193 = arith.constant 96 : index
    %c0_194 = arith.constant 0 : index
    %207 = vector.load %arg29[%c96_193, %c0_194] : memref<144x256xf32, #tpu.memory_space<vmem>>, vector<16x256xf32>
    tpu.vector_store %arg29[%c96_193, %c0_194], %206 {strides = array<i32>} : memref<144x256xf32, #tpu.memory_space<vmem>>, vector<16x256xf32>,
    %c247_i32_195 = arith.constant 247 : i32
    %208 = tpu.dynamic_rotate %193 by %c247_i32_195 dim 1 : vector<16x256xf32>, i32 -> vector<16x256xf32>
    %c112_196 = arith.constant 112 : index
    %c0_197 = arith.constant 0 : index
    %209 = vector.load %arg29[%c112_196, %c0_197] : memref<144x256xf32, #tpu.memory_space<vmem>>, vector<16x256xf32>
    tpu.vector_store %arg29[%c112_196, %c0_197], %208 {strides = array<i32>} : memref<144x256xf32, #tpu.memory_space<vmem>>, vector<16x256xf32>,
    %c246_i32_198 = arith.constant 246 : i32
    %210 = tpu.dynamic_rotate %193 by %c246_i32_198 dim 1 : vector<16x256xf32>, i32 -> vector<16x256xf32>
    %c128_199 = arith.constant 128 : index
    %c0_200 = arith.constant 0 : index
    %211 = vector.load %arg29[%c128_199, %c0_200] : memref<144x256xf32, #tpu.memory_space<vmem>>, vector<16x256xf32>
    tpu.vector_store %arg29[%c128_199, %c0_200], %210 {strides = array<i32>} : memref<144x256xf32, #tpu.memory_space<vmem>>, vector<16x256xf32>,
    %c0_201 = arith.constant 0 : index
    %c0_202 = arith.constant 0 : index
    %212 = vector.load %arg29[%c0_201, %c0_202] : memref<144x256xf32, #tpu.memory_space<vmem>>, vector<144x256xf32>
    %c0_203 = arith.constant 0 : index
    %c0_204 = arith.constant 0 : index
    %213 = vector.load %arg16[%c0_203, %c0_204] : memref<16x1xf32, #tpu.memory_space<vmem>>, vector<16x1xf32>
    %cst_205 = arith.constant dense<0.000000e+00> : vector<16x256xf32>
    %214 = tpu.matmul %194, %212, %cst_205 {dimension_numbers = #tpu.dot_dimension_numbers<[1], [0], [0], [1], [0, 0, 1, 1], [], []>} : vector<16x144xf32>, vector<144x256xf32>, vector<16x256xf32> -> vector<16x256xf32>
    %215 = vector.broadcast %213 : vector<16x1xf32> to vector<16x256xf32>
    %216 = arith.addf %214, %215 : vector<16x256xf32>
    %217 = vector.broadcast %0 : vector<1x256xf32> to vector<16x256xf32>
    %218 = arith.mulf %216, %217 : vector<16x256xf32>
    %c0_206 = arith.constant 0 : index
    %c0_207 = arith.constant 0 : index
    %219 = vector.load %arg17[%c0_206, %c0_207] : memref<8x144xf32, #tpu.memory_space<vmem>>, vector<8x144xf32>
    %c0_208 = arith.constant 0 : index
    %c0_209 = arith.constant 0 : index
    %220 = vector.load %arg18[%c0_208, %c0_209] : memref<16x8xf32, #tpu.memory_space<vmem>>, vector<16x8xf32>
    %cst_210 = arith.constant 0.000000e+00 : f32
    %221 = vector.broadcast %cst_210 : f32 to vector<16x256xf32>
    %222 = arith.maximumf %218, %221 : vector<16x256xf32>
    %c10_i32_211 = arith.constant 10 : i32
    %223 = tpu.dynamic_rotate %222 by %c10_i32_211 dim 1 : vector<16x256xf32>, i32 -> vector<16x256xf32>
    %c0_212 = arith.constant 0 : index
    %c0_213 = arith.constant 0 : index
    %224 = vector.load %arg29[%c0_212, %c0_213] : memref<144x256xf32, #tpu.memory_space<vmem>>, vector<16x256xf32>
    tpu.vector_store %arg29[%c0_212, %c0_213], %223 {strides = array<i32>} : memref<144x256xf32, #tpu.memory_space<vmem>>, vector<16x256xf32>,
    %c9_i32_214 = arith.constant 9 : i32
    %225 = tpu.dynamic_rotate %222 by %c9_i32_214 dim 1 : vector<16x256xf32>, i32 -> vector<16x256xf32>
    %c16_215 = arith.constant 16 : index
    %c0_216 = arith.constant 0 : index
    %226 = vector.load %arg29[%c16_215, %c0_216] : memref<144x256xf32, #tpu.memory_space<vmem>>, vector<16x256xf32>
    tpu.vector_store %arg29[%c16_215, %c0_216], %225 {strides = array<i32>} : memref<144x256xf32, #tpu.memory_space<vmem>>, vector<16x256xf32>,
    %c8_i32_217 = arith.constant 8 : i32
    %227 = tpu.dynamic_rotate %222 by %c8_i32_217 dim 1 : vector<16x256xf32>, i32 -> vector<16x256xf32>
    %c32_218 = arith.constant 32 : index
    %c0_219 = arith.constant 0 : index
    %228 = vector.load %arg29[%c32_218, %c0_219] : memref<144x256xf32, #tpu.memory_space<vmem>>, vector<16x256xf32>
    tpu.vector_store %arg29[%c32_218, %c0_219], %227 {strides = array<i32>} : memref<144x256xf32, #tpu.memory_space<vmem>>, vector<16x256xf32>,
    %c1_i32_220 = arith.constant 1 : i32
    %229 = tpu.dynamic_rotate %222 by %c1_i32_220 dim 1 : vector<16x256xf32>, i32 -> vector<16x256xf32>
    %c48_221 = arith.constant 48 : index
    %c0_222 = arith.constant 0 : index
    %230 = vector.load %arg29[%c48_221, %c0_222] : memref<144x256xf32, #tpu.memory_space<vmem>>, vector<16x256xf32>
    tpu.vector_store %arg29[%c48_221, %c0_222], %229 {strides = array<i32>} : memref<144x256xf32, #tpu.memory_space<vmem>>, vector<16x256xf32>,
    %c64_223 = arith.constant 64 : index
    %c0_224 = arith.constant 0 : index
    %231 = vector.load %arg29[%c64_223, %c0_224] : memref<144x256xf32, #tpu.memory_space<vmem>>, vector<16x256xf32>
    tpu.vector_store %arg29[%c64_223, %c0_224], %222 {strides = array<i32>} : memref<144x256xf32, #tpu.memory_space<vmem>>, vector<16x256xf32>,
    %c255_i32_225 = arith.constant 255 : i32
    %232 = tpu.dynamic_rotate %222 by %c255_i32_225 dim 1 : vector<16x256xf32>, i32 -> vector<16x256xf32>
    %c80_226 = arith.constant 80 : index
    %c0_227 = arith.constant 0 : index
    %233 = vector.load %arg29[%c80_226, %c0_227] : memref<144x256xf32, #tpu.memory_space<vmem>>, vector<16x256xf32>
    tpu.vector_store %arg29[%c80_226, %c0_227], %232 {strides = array<i32>} : memref<144x256xf32, #tpu.memory_space<vmem>>, vector<16x256xf32>,
    %c248_i32_228 = arith.constant 248 : i32
    %234 = tpu.dynamic_rotate %222 by %c248_i32_228 dim 1 : vector<16x256xf32>, i32 -> vector<16x256xf32>
    %c96_229 = arith.constant 96 : index
    %c0_230 = arith.constant 0 : index
    %235 = vector.load %arg29[%c96_229, %c0_230] : memref<144x256xf32, #tpu.memory_space<vmem>>, vector<16x256xf32>
    tpu.vector_store %arg29[%c96_229, %c0_230], %234 {strides = array<i32>} : memref<144x256xf32, #tpu.memory_space<vmem>>, vector<16x256xf32>,
    %c247_i32_231 = arith.constant 247 : i32
    %236 = tpu.dynamic_rotate %222 by %c247_i32_231 dim 1 : vector<16x256xf32>, i32 -> vector<16x256xf32>
    %c112_232 = arith.constant 112 : index
    %c0_233 = arith.constant 0 : index
    %237 = vector.load %arg29[%c112_232, %c0_233] : memref<144x256xf32, #tpu.memory_space<vmem>>, vector<16x256xf32>
    tpu.vector_store %arg29[%c112_232, %c0_233], %236 {strides = array<i32>} : memref<144x256xf32, #tpu.memory_space<vmem>>, vector<16x256xf32>,
    %c246_i32_234 = arith.constant 246 : i32
    %238 = tpu.dynamic_rotate %222 by %c246_i32_234 dim 1 : vector<16x256xf32>, i32 -> vector<16x256xf32>
    %c128_235 = arith.constant 128 : index
    %c0_236 = arith.constant 0 : index
    %239 = vector.load %arg29[%c128_235, %c0_236] : memref<144x256xf32, #tpu.memory_space<vmem>>, vector<16x256xf32>
    tpu.vector_store %arg29[%c128_235, %c0_236], %238 {strides = array<i32>} : memref<144x256xf32, #tpu.memory_space<vmem>>, vector<16x256xf32>,
    %c0_237 = arith.constant 0 : index
    %c0_238 = arith.constant 0 : index
    %240 = vector.load %arg29[%c0_237, %c0_238] : memref<144x256xf32, #tpu.memory_space<vmem>>, vector<144x256xf32>
    %cst_239 = arith.constant dense<0.000000e+00> : vector<8x256xf32>
    %241 = tpu.matmul %219, %240, %cst_239 {dimension_numbers = #tpu.dot_dimension_numbers<[1], [0], [0], [1], [0, 0, 1, 1], [], []>} : vector<8x144xf32>, vector<144x256xf32>, vector<8x256xf32> -> vector<8x256xf32>
    %cst_240 = arith.constant 0.000000e+00 : f32
    %242 = vector.broadcast %cst_240 : f32 to vector<8x256xf32>
    %243 = arith.maximumf %241, %242 : vector<8x256xf32>
    %cst_241 = arith.constant dense<0.000000e+00> : vector<16x256xf32>
    %244 = tpu.matmul %220, %243, %cst_241 {dimension_numbers = #tpu.dot_dimension_numbers<[1], [0], [0], [1], [0, 0, 1, 1], [], []>} : vector<16x8xf32>, vector<8x256xf32>, vector<16x256xf32> -> vector<16x256xf32>
    %245 = arith.addf %218, %244 : vector<16x256xf32>
    %246 = vector.broadcast %0 : vector<1x256xf32> to vector<16x256xf32>
    %247 = arith.mulf %245, %246 : vector<16x256xf32>
    %c0_242 = arith.constant 0 : index
    %c0_243 = arith.constant 0 : index
    %248 = vector.load %arg19[%c0_242, %c0_243] : memref<8x144xf32, #tpu.memory_space<vmem>>, vector<8x144xf32>
    %c0_244 = arith.constant 0 : index
    %c0_245 = arith.constant 0 : index
    %249 = vector.load %arg20[%c0_244, %c0_245] : memref<16x8xf32, #tpu.memory_space<vmem>>, vector<16x8xf32>
    %cst_246 = arith.constant 0.000000e+00 : f32
    %250 = vector.broadcast %cst_246 : f32 to vector<16x256xf32>
    %251 = arith.maximumf %247, %250 : vector<16x256xf32>
    %c10_i32_247 = arith.constant 10 : i32
    %252 = tpu.dynamic_rotate %251 by %c10_i32_247 dim 1 : vector<16x256xf32>, i32 -> vector<16x256xf32>
    %c0_248 = arith.constant 0 : index
    %c0_249 = arith.constant 0 : index
    %253 = vector.load %arg29[%c0_248, %c0_249] : memref<144x256xf32, #tpu.memory_space<vmem>>, vector<16x256xf32>
    tpu.vector_store %arg29[%c0_248, %c0_249], %252 {strides = array<i32>} : memref<144x256xf32, #tpu.memory_space<vmem>>, vector<16x256xf32>,
    %c9_i32_250 = arith.constant 9 : i32
    %254 = tpu.dynamic_rotate %251 by %c9_i32_250 dim 1 : vector<16x256xf32>, i32 -> vector<16x256xf32>
    %c16_251 = arith.constant 16 : index
    %c0_252 = arith.constant 0 : index
    %255 = vector.load %arg29[%c16_251, %c0_252] : memref<144x256xf32, #tpu.memory_space<vmem>>, vector<16x256xf32>
    tpu.vector_store %arg29[%c16_251, %c0_252], %254 {strides = array<i32>} : memref<144x256xf32, #tpu.memory_space<vmem>>, vector<16x256xf32>,
    %c8_i32_253 = arith.constant 8 : i32
    %256 = tpu.dynamic_rotate %251 by %c8_i32_253 dim 1 : vector<16x256xf32>, i32 -> vector<16x256xf32>
    %c32_254 = arith.constant 32 : index
    %c0_255 = arith.constant 0 : index
    %257 = vector.load %arg29[%c32_254, %c0_255] : memref<144x256xf32, #tpu.memory_space<vmem>>, vector<16x256xf32>
    tpu.vector_store %arg29[%c32_254, %c0_255], %256 {strides = array<i32>} : memref<144x256xf32, #tpu.memory_space<vmem>>, vector<16x256xf32>,
    %c1_i32_256 = arith.constant 1 : i32
    %258 = tpu.dynamic_rotate %251 by %c1_i32_256 dim 1 : vector<16x256xf32>, i32 -> vector<16x256xf32>
    %c48_257 = arith.constant 48 : index
    %c0_258 = arith.constant 0 : index
    %259 = vector.load %arg29[%c48_257, %c0_258] : memref<144x256xf32, #tpu.memory_space<vmem>>, vector<16x256xf32>
    tpu.vector_store %arg29[%c48_257, %c0_258], %258 {strides = array<i32>} : memref<144x256xf32, #tpu.memory_space<vmem>>, vector<16x256xf32>,
    %c64_259 = arith.constant 64 : index
    %c0_260 = arith.constant 0 : index
    %260 = vector.load %arg29[%c64_259, %c0_260] : memref<144x256xf32, #tpu.memory_space<vmem>>, vector<16x256xf32>
    tpu.vector_store %arg29[%c64_259, %c0_260], %251 {strides = array<i32>} : memref<144x256xf32, #tpu.memory_space<vmem>>, vector<16x256xf32>,
    %c255_i32_261 = arith.constant 255 : i32
    %261 = tpu.dynamic_rotate %251 by %c255_i32_261 dim 1 : vector<16x256xf32>, i32 -> vector<16x256xf32>
    %c80_262 = arith.constant 80 : index
    %c0_263 = arith.constant 0 : index
    %262 = vector.load %arg29[%c80_262, %c0_263] : memref<144x256xf32, #tpu.memory_space<vmem>>, vector<16x256xf32>
    tpu.vector_store %arg29[%c80_262, %c0_263], %261 {strides = array<i32>} : memref<144x256xf32, #tpu.memory_space<vmem>>, vector<16x256xf32>,
    %c248_i32_264 = arith.constant 248 : i32
    %263 = tpu.dynamic_rotate %251 by %c248_i32_264 dim 1 : vector<16x256xf32>, i32 -> vector<16x256xf32>
    %c96_265 = arith.constant 96 : index
    %c0_266 = arith.constant 0 : index
    %264 = vector.load %arg29[%c96_265, %c0_266] : memref<144x256xf32, #tpu.memory_space<vmem>>, vector<16x256xf32>
    tpu.vector_store %arg29[%c96_265, %c0_266], %263 {strides = array<i32>} : memref<144x256xf32, #tpu.memory_space<vmem>>, vector<16x256xf32>,
    %c247_i32_267 = arith.constant 247 : i32
    %265 = tpu.dynamic_rotate %251 by %c247_i32_267 dim 1 : vector<16x256xf32>, i32 -> vector<16x256xf32>
    %c112_268 = arith.constant 112 : index
    %c0_269 = arith.constant 0 : index
    %266 = vector.load %arg29[%c112_268, %c0_269] : memref<144x256xf32, #tpu.memory_space<vmem>>, vector<16x256xf32>
    tpu.vector_store %arg29[%c112_268, %c0_269], %265 {strides = array<i32>} : memref<144x256xf32, #tpu.memory_space<vmem>>, vector<16x256xf32>,
    %c246_i32_270 = arith.constant 246 : i32
    %267 = tpu.dynamic_rotate %251 by %c246_i32_270 dim 1 : vector<16x256xf32>, i32 -> vector<16x256xf32>
    %c128_271 = arith.constant 128 : index
    %c0_272 = arith.constant 0 : index
    %268 = vector.load %arg29[%c128_271, %c0_272] : memref<144x256xf32, #tpu.memory_space<vmem>>, vector<16x256xf32>
    tpu.vector_store %arg29[%c128_271, %c0_272], %267 {strides = array<i32>} : memref<144x256xf32, #tpu.memory_space<vmem>>, vector<16x256xf32>,
    %c0_273 = arith.constant 0 : index
    %c0_274 = arith.constant 0 : index
    %269 = vector.load %arg29[%c0_273, %c0_274] : memref<144x256xf32, #tpu.memory_space<vmem>>, vector<144x256xf32>
    %cst_275 = arith.constant dense<0.000000e+00> : vector<8x256xf32>
    %270 = tpu.matmul %248, %269, %cst_275 {dimension_numbers = #tpu.dot_dimension_numbers<[1], [0], [0], [1], [0, 0, 1, 1], [], []>} : vector<8x144xf32>, vector<144x256xf32>, vector<8x256xf32> -> vector<8x256xf32>
    %cst_276 = arith.constant 0.000000e+00 : f32
    %271 = vector.broadcast %cst_276 : f32 to vector<8x256xf32>
    %272 = arith.maximumf %270, %271 : vector<8x256xf32>
    %cst_277 = arith.constant dense<0.000000e+00> : vector<16x256xf32>
    %273 = tpu.matmul %249, %272, %cst_277 {dimension_numbers = #tpu.dot_dimension_numbers<[1], [0], [0], [1], [0, 0, 1, 1], [], []>} : vector<16x8xf32>, vector<8x256xf32>, vector<16x256xf32> -> vector<16x256xf32>
    %274 = arith.addf %247, %273 : vector<16x256xf32>
    %275 = vector.broadcast %0 : vector<1x256xf32> to vector<16x256xf32>
    %276 = arith.mulf %274, %275 : vector<16x256xf32>
    %cst_278 = arith.constant 0.000000e+00 : f32
    %277 = vector.broadcast %cst_278 : f32 to vector<16x256xf32>
    %278 = arith.maximumf %276, %277 : vector<16x256xf32>
    %c0_279 = arith.constant 0 : index
    %c0_280 = arith.constant 0 : index
    %279 = vector.load %arg21[%c0_279, %c0_280] : memref<32x144xf32, #tpu.memory_space<vmem>>, vector<32x144xf32>
    %c10_i32_281 = arith.constant 10 : i32
    %280 = tpu.dynamic_rotate %278 by %c10_i32_281 dim 1 : vector<16x256xf32>, i32 -> vector<16x256xf32>
    %c0_282 = arith.constant 0 : index
    %c0_283 = arith.constant 0 : index
    %281 = vector.load %arg29[%c0_282, %c0_283] : memref<144x256xf32, #tpu.memory_space<vmem>>, vector<16x256xf32>
    tpu.vector_store %arg29[%c0_282, %c0_283], %280 {strides = array<i32>} : memref<144x256xf32, #tpu.memory_space<vmem>>, vector<16x256xf32>,
    %c9_i32_284 = arith.constant 9 : i32
    %282 = tpu.dynamic_rotate %278 by %c9_i32_284 dim 1 : vector<16x256xf32>, i32 -> vector<16x256xf32>
    %c16_285 = arith.constant 16 : index
    %c0_286 = arith.constant 0 : index
    %283 = vector.load %arg29[%c16_285, %c0_286] : memref<144x256xf32, #tpu.memory_space<vmem>>, vector<16x256xf32>
    tpu.vector_store %arg29[%c16_285, %c0_286], %282 {strides = array<i32>} : memref<144x256xf32, #tpu.memory_space<vmem>>, vector<16x256xf32>,
    %c8_i32_287 = arith.constant 8 : i32
    %284 = tpu.dynamic_rotate %278 by %c8_i32_287 dim 1 : vector<16x256xf32>, i32 -> vector<16x256xf32>
    %c32_288 = arith.constant 32 : index
    %c0_289 = arith.constant 0 : index
    %285 = vector.load %arg29[%c32_288, %c0_289] : memref<144x256xf32, #tpu.memory_space<vmem>>, vector<16x256xf32>
    tpu.vector_store %arg29[%c32_288, %c0_289], %284 {strides = array<i32>} : memref<144x256xf32, #tpu.memory_space<vmem>>, vector<16x256xf32>,
    %c1_i32_290 = arith.constant 1 : i32
    %286 = tpu.dynamic_rotate %278 by %c1_i32_290 dim 1 : vector<16x256xf32>, i32 -> vector<16x256xf32>
    %c48_291 = arith.constant 48 : index
    %c0_292 = arith.constant 0 : index
    %287 = vector.load %arg29[%c48_291, %c0_292] : memref<144x256xf32, #tpu.memory_space<vmem>>, vector<16x256xf32>
    tpu.vector_store %arg29[%c48_291, %c0_292], %286 {strides = array<i32>} : memref<144x256xf32, #tpu.memory_space<vmem>>, vector<16x256xf32>,
    %c64_293 = arith.constant 64 : index
    %c0_294 = arith.constant 0 : index
    %288 = vector.load %arg29[%c64_293, %c0_294] : memref<144x256xf32, #tpu.memory_space<vmem>>, vector<16x256xf32>
    tpu.vector_store %arg29[%c64_293, %c0_294], %278 {strides = array<i32>} : memref<144x256xf32, #tpu.memory_space<vmem>>, vector<16x256xf32>,
    %c255_i32_295 = arith.constant 255 : i32
    %289 = tpu.dynamic_rotate %278 by %c255_i32_295 dim 1 : vector<16x256xf32>, i32 -> vector<16x256xf32>
    %c80_296 = arith.constant 80 : index
    %c0_297 = arith.constant 0 : index
    %290 = vector.load %arg29[%c80_296, %c0_297] : memref<144x256xf32, #tpu.memory_space<vmem>>, vector<16x256xf32>
    tpu.vector_store %arg29[%c80_296, %c0_297], %289 {strides = array<i32>} : memref<144x256xf32, #tpu.memory_space<vmem>>, vector<16x256xf32>,
    %c248_i32_298 = arith.constant 248 : i32
    %291 = tpu.dynamic_rotate %278 by %c248_i32_298 dim 1 : vector<16x256xf32>, i32 -> vector<16x256xf32>
    %c96_299 = arith.constant 96 : index
    %c0_300 = arith.constant 0 : index
    %292 = vector.load %arg29[%c96_299, %c0_300] : memref<144x256xf32, #tpu.memory_space<vmem>>, vector<16x256xf32>
    tpu.vector_store %arg29[%c96_299, %c0_300], %291 {strides = array<i32>} : memref<144x256xf32, #tpu.memory_space<vmem>>, vector<16x256xf32>,
    %c247_i32_301 = arith.constant 247 : i32
    %293 = tpu.dynamic_rotate %278 by %c247_i32_301 dim 1 : vector<16x256xf32>, i32 -> vector<16x256xf32>
    %c112_302 = arith.constant 112 : index
    %c0_303 = arith.constant 0 : index
    %294 = vector.load %arg29[%c112_302, %c0_303] : memref<144x256xf32, #tpu.memory_space<vmem>>, vector<16x256xf32>
    tpu.vector_store %arg29[%c112_302, %c0_303], %293 {strides = array<i32>} : memref<144x256xf32, #tpu.memory_space<vmem>>, vector<16x256xf32>,
    %c246_i32_304 = arith.constant 246 : i32
    %295 = tpu.dynamic_rotate %278 by %c246_i32_304 dim 1 : vector<16x256xf32>, i32 -> vector<16x256xf32>
    %c128_305 = arith.constant 128 : index
    %c0_306 = arith.constant 0 : index
    %296 = vector.load %arg29[%c128_305, %c0_306] : memref<144x256xf32, #tpu.memory_space<vmem>>, vector<16x256xf32>
    tpu.vector_store %arg29[%c128_305, %c0_306], %295 {strides = array<i32>} : memref<144x256xf32, #tpu.memory_space<vmem>>, vector<16x256xf32>,
    %c0_307 = arith.constant 0 : index
    %c0_308 = arith.constant 0 : index
    %297 = vector.load %arg29[%c0_307, %c0_308] : memref<144x256xf32, #tpu.memory_space<vmem>>, vector<144x256xf32>
    %c0_309 = arith.constant 0 : index
    %c0_310 = arith.constant 0 : index
    %298 = vector.load %arg22[%c0_309, %c0_310] : memref<32x1xf32, #tpu.memory_space<vmem>>, vector<32x1xf32>
    %cst_311 = arith.constant dense<0.000000e+00> : vector<32x256xf32>
    %299 = tpu.matmul %279, %297, %cst_311 {dimension_numbers = #tpu.dot_dimension_numbers<[1], [0], [0], [1], [0, 0, 1, 1], [], []>} : vector<32x144xf32>, vector<144x256xf32>, vector<32x256xf32> -> vector<32x256xf32>
    %300 = vector.broadcast %298 : vector<32x1xf32> to vector<32x256xf32>
    %301 = arith.addf %299, %300 : vector<32x256xf32>
    %cst_312 = arith.constant 0.000000e+00 : f32
    %302 = vector.broadcast %cst_312 : f32 to vector<32x256xf32>
    %303 = arith.maximumf %301, %302 : vector<32x256xf32>
    %304 = vector.broadcast %0 : vector<1x256xf32> to vector<32x256xf32>
    %305 = arith.mulf %303, %304 : vector<32x256xf32>
    %306 = vector.extract_strided_slice %305 {offsets = [0, 0], sizes = [8, 256], strides = [1, 1]} : vector<32x256xf32> to vector<8x256xf32>
    %c0_313 = arith.constant 0 : index
    %c0_314 = arith.constant 0 : index
    %307 = vector.load %arg29[%c0_313, %c0_314] : memref<144x256xf32, #tpu.memory_space<vmem>>, vector<8x256xf32>
    tpu.vector_store %arg29[%c0_313, %c0_314], %306 {strides = array<i32>} : memref<144x256xf32, #tpu.memory_space<vmem>>, vector<8x256xf32>,
    %308 = vector.extract_strided_slice %305 {offsets = [8, 0], sizes = [8, 256], strides = [1, 1]} : vector<32x256xf32> to vector<8x256xf32>
    %c1_i32_315 = arith.constant 1 : i32
    %309 = tpu.dynamic_rotate %308 by %c1_i32_315 dim 1 : vector<8x256xf32>, i32 -> vector<8x256xf32>
    %c8_316 = arith.constant 8 : index
    %c0_317 = arith.constant 0 : index
    %310 = vector.load %arg29[%c8_316, %c0_317] : memref<144x256xf32, #tpu.memory_space<vmem>>, vector<8x256xf32>
    tpu.vector_store %arg29[%c8_316, %c0_317], %309 {strides = array<i32>} : memref<144x256xf32, #tpu.memory_space<vmem>>, vector<8x256xf32>,
    %311 = vector.extract_strided_slice %305 {offsets = [8, 0], sizes = [8, 256], strides = [1, 1]} : vector<32x256xf32> to vector<8x256xf32>
    %c16_318 = arith.constant 16 : index
    %c0_319 = arith.constant 0 : index
    %312 = vector.load %arg29[%c16_318, %c0_319] : memref<144x256xf32, #tpu.memory_space<vmem>>, vector<8x256xf32>
    tpu.vector_store %arg29[%c16_318, %c0_319], %311 {strides = array<i32>} : memref<144x256xf32, #tpu.memory_space<vmem>>, vector<8x256xf32>,
    %313 = vector.extract_strided_slice %305 {offsets = [0, 0], sizes = [8, 256], strides = [1, 1]} : vector<32x256xf32> to vector<8x256xf32>
    %c255_i32_320 = arith.constant 255 : i32
    %314 = tpu.dynamic_rotate %313 by %c255_i32_320 dim 1 : vector<8x256xf32>, i32 -> vector<8x256xf32>
    %c24_321 = arith.constant 24 : index
    %c0_322 = arith.constant 0 : index
    %315 = vector.load %arg29[%c24_321, %c0_322] : memref<144x256xf32, #tpu.memory_space<vmem>>, vector<8x256xf32>
    tpu.vector_store %arg29[%c24_321, %c0_322], %314 {strides = array<i32>} : memref<144x256xf32, #tpu.memory_space<vmem>>, vector<8x256xf32>,
    %316 = vector.extract_strided_slice %305 {offsets = [16, 0], sizes = [8, 256], strides = [1, 1]} : vector<32x256xf32> to vector<8x256xf32>
    %c9_i32_323 = arith.constant 9 : i32
    %317 = tpu.dynamic_rotate %316 by %c9_i32_323 dim 1 : vector<8x256xf32>, i32 -> vector<8x256xf32>
    %c32_324 = arith.constant 32 : index
    %c0_325 = arith.constant 0 : index
    %318 = vector.load %arg29[%c32_324, %c0_325] : memref<144x256xf32, #tpu.memory_space<vmem>>, vector<8x256xf32>
    tpu.vector_store %arg29[%c32_324, %c0_325], %317 {strides = array<i32>} : memref<144x256xf32, #tpu.memory_space<vmem>>, vector<8x256xf32>,
    %319 = vector.extract_strided_slice %305 {offsets = [24, 0], sizes = [8, 256], strides = [1, 1]} : vector<32x256xf32> to vector<8x256xf32>
    %c10_i32_326 = arith.constant 10 : i32
    %320 = tpu.dynamic_rotate %319 by %c10_i32_326 dim 1 : vector<8x256xf32>, i32 -> vector<8x256xf32>
    %c40_327 = arith.constant 40 : index
    %c0_328 = arith.constant 0 : index
    %321 = vector.load %arg29[%c40_327, %c0_328] : memref<144x256xf32, #tpu.memory_space<vmem>>, vector<8x256xf32>
    tpu.vector_store %arg29[%c40_327, %c0_328], %320 {strides = array<i32>} : memref<144x256xf32, #tpu.memory_space<vmem>>, vector<8x256xf32>,
    %322 = vector.extract_strided_slice %305 {offsets = [24, 0], sizes = [8, 256], strides = [1, 1]} : vector<32x256xf32> to vector<8x256xf32>
    %c9_i32_329 = arith.constant 9 : i32
    %323 = tpu.dynamic_rotate %322 by %c9_i32_329 dim 1 : vector<8x256xf32>, i32 -> vector<8x256xf32>
    %c48_330 = arith.constant 48 : index
    %c0_331 = arith.constant 0 : index
    %324 = vector.load %arg29[%c48_330, %c0_331] : memref<144x256xf32, #tpu.memory_space<vmem>>, vector<8x256xf32>
    tpu.vector_store %arg29[%c48_330, %c0_331], %323 {strides = array<i32>} : memref<144x256xf32, #tpu.memory_space<vmem>>, vector<8x256xf32>,
    %325 = vector.extract_strided_slice %305 {offsets = [16, 0], sizes = [8, 256], strides = [1, 1]} : vector<32x256xf32> to vector<8x256xf32>
    %c8_i32_332 = arith.constant 8 : i32
    %326 = tpu.dynamic_rotate %325 by %c8_i32_332 dim 1 : vector<8x256xf32>, i32 -> vector<8x256xf32>
    %c56_333 = arith.constant 56 : index
    %c0_334 = arith.constant 0 : index
    %327 = vector.load %arg29[%c56_333, %c0_334] : memref<144x256xf32, #tpu.memory_space<vmem>>, vector<8x256xf32>
    tpu.vector_store %arg29[%c56_333, %c0_334], %326 {strides = array<i32>} : memref<144x256xf32, #tpu.memory_space<vmem>>, vector<8x256xf32>,
    %328 = vector.extract_strided_slice %305 {offsets = [16, 0], sizes = [8, 256], strides = [1, 1]} : vector<32x256xf32> to vector<8x256xf32>
    %c64_335 = arith.constant 64 : index
    %c0_336 = arith.constant 0 : index
    %329 = vector.load %arg29[%c64_335, %c0_336] : memref<144x256xf32, #tpu.memory_space<vmem>>, vector<8x256xf32>
    tpu.vector_store %arg29[%c64_335, %c0_336], %328 {strides = array<i32>} : memref<144x256xf32, #tpu.memory_space<vmem>>, vector<8x256xf32>,
    %330 = vector.extract_strided_slice %305 {offsets = [24, 0], sizes = [8, 256], strides = [1, 1]} : vector<32x256xf32> to vector<8x256xf32>
    %c1_i32_337 = arith.constant 1 : i32
    %331 = tpu.dynamic_rotate %330 by %c1_i32_337 dim 1 : vector<8x256xf32>, i32 -> vector<8x256xf32>
    %c72_338 = arith.constant 72 : index
    %c0_339 = arith.constant 0 : index
    %332 = vector.load %arg29[%c72_338, %c0_339] : memref<144x256xf32, #tpu.memory_space<vmem>>, vector<8x256xf32>
    tpu.vector_store %arg29[%c72_338, %c0_339], %331 {strides = array<i32>} : memref<144x256xf32, #tpu.memory_space<vmem>>, vector<8x256xf32>,
    %333 = vector.extract_strided_slice %305 {offsets = [24, 0], sizes = [8, 256], strides = [1, 1]} : vector<32x256xf32> to vector<8x256xf32>
    %c80_340 = arith.constant 80 : index
    %c0_341 = arith.constant 0 : index
    %334 = vector.load %arg29[%c80_340, %c0_341] : memref<144x256xf32, #tpu.memory_space<vmem>>, vector<8x256xf32>
    tpu.vector_store %arg29[%c80_340, %c0_341], %333 {strides = array<i32>} : memref<144x256xf32, #tpu.memory_space<vmem>>, vector<8x256xf32>,
    %335 = vector.extract_strided_slice %305 {offsets = [16, 0], sizes = [8, 256], strides = [1, 1]} : vector<32x256xf32> to vector<8x256xf32>
    %c255_i32_342 = arith.constant 255 : i32
    %336 = tpu.dynamic_rotate %335 by %c255_i32_342 dim 1 : vector<8x256xf32>, i32 -> vector<8x256xf32>
    %c88_343 = arith.constant 88 : index
    %c0_344 = arith.constant 0 : index
    %337 = vector.load %arg29[%c88_343, %c0_344] : memref<144x256xf32, #tpu.memory_space<vmem>>, vector<8x256xf32>
    tpu.vector_store %arg29[%c88_343, %c0_344], %336 {strides = array<i32>} : memref<144x256xf32, #tpu.memory_space<vmem>>, vector<8x256xf32>,
    %338 = vector.extract_strided_slice %305 {offsets = [0, 0], sizes = [8, 256], strides = [1, 1]} : vector<32x256xf32> to vector<8x256xf32>
    %c247_i32_345 = arith.constant 247 : i32
    %339 = tpu.dynamic_rotate %338 by %c247_i32_345 dim 1 : vector<8x256xf32>, i32 -> vector<8x256xf32>
    %c96_346 = arith.constant 96 : index
    %c0_347 = arith.constant 0 : index
    %340 = vector.load %arg29[%c96_346, %c0_347] : memref<144x256xf32, #tpu.memory_space<vmem>>, vector<8x256xf32>
    tpu.vector_store %arg29[%c96_346, %c0_347], %339 {strides = array<i32>} : memref<144x256xf32, #tpu.memory_space<vmem>>, vector<8x256xf32>,
    %341 = vector.extract_strided_slice %305 {offsets = [8, 0], sizes = [8, 256], strides = [1, 1]} : vector<32x256xf32> to vector<8x256xf32>
    %c248_i32_348 = arith.constant 248 : i32
    %342 = tpu.dynamic_rotate %341 by %c248_i32_348 dim 1 : vector<8x256xf32>, i32 -> vector<8x256xf32>
    %c104_349 = arith.constant 104 : index
    %c0_350 = arith.constant 0 : index
    %343 = vector.load %arg29[%c104_349, %c0_350] : memref<144x256xf32, #tpu.memory_space<vmem>>, vector<8x256xf32>
    tpu.vector_store %arg29[%c104_349, %c0_350], %342 {strides = array<i32>} : memref<144x256xf32, #tpu.memory_space<vmem>>, vector<8x256xf32>,
    %344 = vector.extract_strided_slice %305 {offsets = [8, 0], sizes = [8, 256], strides = [1, 1]} : vector<32x256xf32> to vector<8x256xf32>
    %c247_i32_351 = arith.constant 247 : i32
    %345 = tpu.dynamic_rotate %344 by %c247_i32_351 dim 1 : vector<8x256xf32>, i32 -> vector<8x256xf32>
    %c112_352 = arith.constant 112 : index
    %c0_353 = arith.constant 0 : index
    %346 = vector.load %arg29[%c112_352, %c0_353] : memref<144x256xf32, #tpu.memory_space<vmem>>, vector<8x256xf32>
    tpu.vector_store %arg29[%c112_352, %c0_353], %345 {strides = array<i32>} : memref<144x256xf32, #tpu.memory_space<vmem>>, vector<8x256xf32>,
    %347 = vector.extract_strided_slice %305 {offsets = [0, 0], sizes = [8, 256], strides = [1, 1]} : vector<32x256xf32> to vector<8x256xf32>
    %c246_i32_354 = arith.constant 246 : i32
    %348 = tpu.dynamic_rotate %347 by %c246_i32_354 dim 1 : vector<8x256xf32>, i32 -> vector<8x256xf32>
    %c120_355 = arith.constant 120 : index
    %c0_356 = arith.constant 0 : index
    %349 = vector.load %arg29[%c120_355, %c0_356] : memref<144x256xf32, #tpu.memory_space<vmem>>, vector<8x256xf32>
    tpu.vector_store %arg29[%c120_355, %c0_356], %348 {strides = array<i32>} : memref<144x256xf32, #tpu.memory_space<vmem>>, vector<8x256xf32>,
    %c0_357 = arith.constant 0 : index
    %c0_358 = arith.constant 0 : index
    %350 = vector.load %arg23[%c0_357, %c0_358] : memref<16x128xf32, #tpu.memory_space<vmem>>, vector<16x128xf32>
    %c0_359 = arith.constant 0 : index
    %c0_360 = arith.constant 0 : index
    %351 = vector.load %arg29[%c0_359, %c0_360] : memref<144x256xf32, #tpu.memory_space<vmem>>, vector<128x256xf32>
    %cst_361 = arith.constant dense<0.000000e+00> : vector<16x256xf32>
    %352 = tpu.matmul %350, %351, %cst_361 {dimension_numbers = #tpu.dot_dimension_numbers<[1], [0], [0], [1], [0, 0, 1, 1], [], []>} : vector<16x128xf32>, vector<128x256xf32>, vector<16x256xf32> -> vector<16x256xf32>
    %c0_362 = arith.constant 0 : index
    %c0_363 = arith.constant 0 : index
    %353 = vector.load %arg24[%c0_362, %c0_363] : memref<16x1xf32, #tpu.memory_space<vmem>>, vector<16x1xf32>
    %354 = vector.broadcast %353 : vector<16x1xf32> to vector<16x256xf32>
    %355 = arith.addf %352, %354 : vector<16x256xf32>
    %c0_364 = arith.constant 0 : index
    %c0_365 = arith.constant 0 : index
    %356 = vector.load %arg27[%c0_364, %c0_365] : memref<16x256xf32, #tpu.memory_space<vmem>>, vector<16x256xf32>
    tpu.vector_store %arg27[%c0_364, %c0_365], %355 {strides = array<i32>} : memref<16x256xf32, #tpu.memory_space<vmem>>, vector<16x256xf32>,
    return
  }
  func.func @transform_0(%arg0: i32) -> (i32, i32) {
    %c0_i32 = arith.constant 0 : i32
    %c0_i32_0 = arith.constant 0 : i32
    %c0_i32_1 = arith.constant 0 : i32
    return %c0_i32, %c0_i32_0 : i32, i32
  }
  func.func @transform_1(%arg0: i32) -> (i32, i32) {
    %c0_i32 = arith.constant 0 : i32
    %c0_i32_0 = arith.constant 0 : i32
    return %c0_i32, %arg0 : i32, i32
  }
  func.func @transform_2(%arg0: i32) -> (i32, i32) {
    %c0_i32 = arith.constant 0 : i32
    %c0_i32_0 = arith.constant 0 : i32
    %c0_i32_1 = arith.constant 0 : i32
    return %c0_i32, %c0_i32_0 : i32, i32
  }
  func.func @transform_3(%arg0: i32) -> (i32, i32) {
    %c0_i32 = arith.constant 0 : i32
    %c0_i32_0 = arith.constant 0 : i32
    %c0_i32_1 = arith.constant 0 : i32
    return %c0_i32, %c0_i32_0 : i32, i32
  }
  func.func @transform_4(%arg0: i32) -> (i32, i32) {
    %c0_i32 = arith.constant 0 : i32
    %c0_i32_0 = arith.constant 0 : i32
    %c0_i32_1 = arith.constant 0 : i32
    return %c0_i32, %c0_i32_0 : i32, i32
  }
  func.func @transform_5(%arg0: i32) -> (i32, i32) {
    %c0_i32 = arith.constant 0 : i32
    %c0_i32_0 = arith.constant 0 : i32
    %c0_i32_1 = arith.constant 0 : i32
    return %c0_i32, %c0_i32_0 : i32, i32
  }
  func.func @transform_6(%arg0: i32) -> (i32, i32) {
    %c0_i32 = arith.constant 0 : i32
    %c0_i32_0 = arith.constant 0 : i32
    %c0_i32_1 = arith.constant 0 : i32
    return %c0_i32, %c0_i32_0 : i32, i32
  }
  func.func @transform_7(%arg0: i32) -> (i32, i32) {
    %c0_i32 = arith.constant 0 : i32
    %c0_i32_0 = arith.constant 0 : i32
    %c0_i32_1 = arith.constant 0 : i32
    return %c0_i32, %c0_i32_0 : i32, i32
  }
  func.func @transform_8(%arg0: i32) -> (i32, i32) {
    %c0_i32 = arith.constant 0 : i32
    %c0_i32_0 = arith.constant 0 : i32
    %c0_i32_1 = arith.constant 0 : i32
    return %c0_i32, %c0_i32_0 : i32, i32
  }
  func.func @transform_9(%arg0: i32) -> (i32, i32) {
    %c0_i32 = arith.constant 0 : i32
    %c0_i32_0 = arith.constant 0 : i32
    %c0_i32_1 = arith.constant 0 : i32
    return %c0_i32, %c0_i32_0 : i32, i32
  }
  func.func @transform_10(%arg0: i32) -> (i32, i32) {
    %c0_i32 = arith.constant 0 : i32
    %c0_i32_0 = arith.constant 0 : i32
    %c0_i32_1 = arith.constant 0 : i32
    return %c0_i32, %c0_i32_0 : i32, i32
  }
  func.func @transform_11(%arg0: i32) -> (i32, i32) {
    %c0_i32 = arith.constant 0 : i32
    %c0_i32_0 = arith.constant 0 : i32
    %c0_i32_1 = arith.constant 0 : i32
    return %c0_i32, %c0_i32_0 : i32, i32
  }
  func.func @transform_12(%arg0: i32) -> (i32, i32) {
    %c0_i32 = arith.constant 0 : i32
    %c0_i32_0 = arith.constant 0 : i32
    %c0_i32_1 = arith.constant 0 : i32
    return %c0_i32, %c0_i32_0 : i32, i32
  }
  func.func @transform_13(%arg0: i32) -> (i32, i32) {
    %c0_i32 = arith.constant 0 : i32
    %c0_i32_0 = arith.constant 0 : i32
    %c0_i32_1 = arith.constant 0 : i32
    return %c0_i32, %c0_i32_0 : i32, i32
  }
  func.func @transform_14(%arg0: i32) -> (i32, i32) {
    %c0_i32 = arith.constant 0 : i32
    %c0_i32_0 = arith.constant 0 : i32
    %c0_i32_1 = arith.constant 0 : i32
    return %c0_i32, %c0_i32_0 : i32, i32
  }
  func.func @transform_15(%arg0: i32) -> (i32, i32) {
    %c0_i32 = arith.constant 0 : i32
    %c0_i32_0 = arith.constant 0 : i32
    %c0_i32_1 = arith.constant 0 : i32
    return %c0_i32, %c0_i32_0 : i32, i32
  }
  func.func @transform_16(%arg0: i32) -> (i32, i32) {
    %c0_i32 = arith.constant 0 : i32
    %c0_i32_0 = arith.constant 0 : i32
    %c0_i32_1 = arith.constant 0 : i32
    return %c0_i32, %c0_i32_0 : i32, i32
  }
  func.func @transform_17(%arg0: i32) -> (i32, i32) {
    %c0_i32 = arith.constant 0 : i32
    %c0_i32_0 = arith.constant 0 : i32
    %c0_i32_1 = arith.constant 0 : i32
    return %c0_i32, %c0_i32_0 : i32, i32
  }
  func.func @transform_18(%arg0: i32) -> (i32, i32) {
    %c0_i32 = arith.constant 0 : i32
    %c0_i32_0 = arith.constant 0 : i32
    %c0_i32_1 = arith.constant 0 : i32
    return %c0_i32, %c0_i32_0 : i32, i32
  }
  func.func @transform_19(%arg0: i32) -> (i32, i32) {
    %c0_i32 = arith.constant 0 : i32
    %c0_i32_0 = arith.constant 0 : i32
    %c0_i32_1 = arith.constant 0 : i32
    return %c0_i32, %c0_i32_0 : i32, i32
  }
  func.func @transform_20(%arg0: i32) -> (i32, i32) {
    %c0_i32 = arith.constant 0 : i32
    %c0_i32_0 = arith.constant 0 : i32
    %c0_i32_1 = arith.constant 0 : i32
    return %c0_i32, %c0_i32_0 : i32, i32
  }
  func.func @transform_21(%arg0: i32) -> (i32, i32) {
    %c0_i32 = arith.constant 0 : i32
    %c0_i32_0 = arith.constant 0 : i32
    %c0_i32_1 = arith.constant 0 : i32
    return %c0_i32, %c0_i32_0 : i32, i32
  }
  func.func @transform_22(%arg0: i32) -> (i32, i32) {
    %c0_i32 = arith.constant 0 : i32
    %c0_i32_0 = arith.constant 0 : i32
    %c0_i32_1 = arith.constant 0 : i32
    return %c0_i32, %c0_i32_0 : i32, i32
  }
  func.func @transform_23(%arg0: i32) -> (i32, i32) {
    %c0_i32 = arith.constant 0 : i32
    %c0_i32_0 = arith.constant 0 : i32
    %c0_i32_1 = arith.constant 0 : i32
    return %c0_i32, %c0_i32_0 : i32, i32
  }
  func.func @transform_24(%arg0: i32) -> (i32, i32) {
    %c0_i32 = arith.constant 0 : i32
    %c0_i32_0 = arith.constant 0 : i32
    return %c0_i32, %arg0 : i32, i32
  }
  func.func @transform_25(%arg0: i32) -> (i32, i32) {
    %c0_i32 = arith.constant 0 : i32
    %c0_i32_0 = arith.constant 0 : i32
    return %c0_i32, %arg0 : i32, i32
  }
  func.func @transform_26(%arg0: i32) -> (i32, i32) {
    %c0_i32 = arith.constant 0 : i32
    %c0_i32_0 = arith.constant 0 : i32
    return %c0_i32, %arg0 : i32, i32
  }
  func.func @transform_27(%arg0: i32) -> (i32, i32) {
    %c0_i32 = arith.constant 0 : i32
    %c0_i32_0 = arith.constant 0 : i32
    return %c0_i32, %arg0 : i32, i32
  }
}

</mosaic_0001>

<llo_original>
// kernel: tile.8
$region0: #{tile.8}
  #allocation0 [shape = 's32[1]{0}', space=sflag, size = 0x4, scoped, tag = 'scoped memory for tile.8']
  %s0 = inlined_call_operand.vmem [shape: f32[128], index: 0, kind: input, shape index: {}]
  %s1 = inlined_call_operand.vmem [shape: f32[2,128], index: 1, kind: output, shape index: {}]
  // Predicated region
  $region2: #{tile.8} parent=0 // pred_check
    _
  $region3: #{tile.8} parent=0 // pred_check_branch
    %3 = sbr.rel (0) target = $region5
  $region4: #{tile.8} parent=0 // pred_region
    _
  $region5: #{tile.8} parent=0 // pred_fallthru
    _
  %v4 = vld [vmem:[%s0] ss:$0 sm:$0xff]
  %5 = vst [vmem:[%s1] sm:$0x3] %v4

// kernel: vqvae_forward.1
$region0: #{vqvae_forward.1}
  #allocation0 [shape = 'u32[]', space=smem, size = 0x4, offset = 0x4, fixed_abs, tag = 'smem constant byte address 0x4 - core index']
  #allocation1 [shape = 'u32[72,128]{1,0:T(1,128)}', space=vmem, size = 0x9000, scoped, tag = 'internal scratch']
  #allocation2 [shape = 'f32[144,256]{1,0:T(8,128)}', space=vmem, size = 0x24000, scoped, tag = 'scratch operand']
  %s0 = inlined_call_operand.vmem [shape: f32[1,256], index: 0, kind: input, shape index: {}]
  %s1 = inlined_call_operand.vmem [shape: f32[16,256], index: 1, kind: input, shape index: {}]
  %s2 = inlined_call_operand.vmem [shape: f32[32,64], index: 2, kind: input, shape index: {}]
  %s3 = inlined_call_operand.vmem [shape: f32[32,1], index: 3, kind: input, shape index: {}]
  %s4 = inlined_call_operand.vmem [shape: f32[16,128], index: 4, kind: input, shape index: {}]
  %s5 = inlined_call_operand.vmem [shape: f32[16,1], index: 5, kind: input, shape index: {}]
  %s6 = inlined_call_operand.vmem [shape: f32[16,144], index: 6, kind: input, shape index: {}]
  %s7 = inlined_call_operand.vmem [shape: f32[16,1], index: 7, kind: input, shape index: {}]
  %s8 = inlined_call_operand.vmem [shape: f32[8,144], index: 8, kind: input, shape index: {}]
  %s9 = inlined_call_operand.vmem [shape: f32[16,8], index: 9, kind: input, shape index: {}]
  %s10 = inlined_call_operand.vmem [shape: f32[8,144], index: 10, kind: input, shape index: {}]
  %s11 = inlined_call_operand.vmem [shape: f32[16,8], index: 11, kind: input, shape index: {}]
  %s12 = inlined_call_operand.vmem [shape: f32[8,16], index: 12, kind: input, shape index: {}]
  %s13 = inlined_call_operand.vmem [shape: f32[16,8], index: 13, kind: input, shape index: {}]
  %s14 = inlined_call_operand.vmem [shape: f32[16,144], index: 14, kind: input, shape index: {}]
  %s15 = inlined_call_operand.vmem [shape: f32[16,1], index: 15, kind: input, shape index: {}]
  %s16 = inlined_call_operand.vmem [shape: f32[8,144], index: 16, kind: input, shape index: {}]
  %s17 = inlined_call_operand.vmem [shape: f32[16,8], index: 17, kind: input, shape index: {}]
  %s18 = inlined_call_operand.vmem [shape: f32[8,144], index: 18, kind: input, shape index: {}]
  %s19 = inlined_call_operand.vmem [shape: f32[16,8], index: 19, kind: input, shape index: {}]
  %s20 = inlined_call_operand.vmem [shape: f32[32,144], index: 20, kind: input, shape index: {}]
  %s21 = inlined_call_operand.vmem [shape: f32[32,1], index: 21, kind: input, shape index: {}]
  %s22 = inlined_call_operand.vmem [shape: f32[16,128], index: 22, kind: input, shape index: {}]
  %s23 = inlined_call_operand.vmem [shape: f32[16,1], index: 23, kind: input, shape index: {}]
  %s24 = inlined_call_operand.vmem [shape: f32[16,256], index: 24, kind: output, shape index: {0}]
  %s25 = inlined_call_operand.vmem [shape: f32[16,256], index: 25, kind: output, shape index: {1}]
  %s26 = inlined_call_operand.vmem [shape: f32[16,256], index: 26, kind: output, shape index: {2}]
  %s27 = inlined_call_operand.vmem [shape: s32[1,256], index: 27, kind: output, shape index: {3}]
  %28 = xla_tuple %s24, %s25, %s26, %s27
  %s29 = sld [smem:[#allocation0]]
  $region130: #{vqvae_forward.1} parent=0
    _
  %s31 = ssub.s32 1, %s29
  %s32 = scalar_select 0, %s31, %s29
  // Predicated region
  $region2: #{vqvae_forward.1} parent=0 // pred_check
    _
  $region3: #{vqvae_forward.1} parent=0 // pred_check_branch
    %34 = sbr.rel (0) target = $region5
  $region4: #{vqvae_forward.1} parent=0 // pred_region
    _
  $region5: #{vqvae_forward.1} parent=0 // pred_fallthru
    _
  // Predicated region
  $region6: #{vqvae_forward.1} parent=0 // pred_check
    _
  $region7: #{vqvae_forward.1} parent=0 // pred_check_branch
    %36 = sbr.rel (0) target = $region9
  $region8: #{vqvae_forward.1} parent=0 // pred_region
    _
  $region9: #{vqvae_forward.1} parent=0 // pred_fallthru
    _
  // Predicated region
  $region10: #{vqvae_forward.1} parent=0 // pred_check
    _
  $region11: #{vqvae_forward.1} parent=0 // pred_check_branch
    %38 = sbr.rel (0) target = $region13
  $region12: #{vqvae_forward.1} parent=0 // pred_region
    _
  $region13: #{vqvae_forward.1} parent=0 // pred_fallthru
    _
  // Predicated region
  $region14: #{vqvae_forward.1} parent=0 // pred_check
    _
  $region15: #{vqvae_forward.1} parent=0 // pred_check_branch
    %40 = sbr.rel (0) target = $region17
  $region16: #{vqvae_forward.1} parent=0 // pred_region
    _
  $region17: #{vqvae_forward.1} parent=0 // pred_fallthru
    _
  // Predicated region
  $region18: #{vqvae_forward.1} parent=0 // pred_check
    _
  $region19: #{vqvae_forward.1} parent=0 // pred_check_branch
    %42 = sbr.rel (0) target = $region21
  $region20: #{vqvae_forward.1} parent=0 // pred_region
    _
  $region21: #{vqvae_forward.1} parent=0 // pred_fallthru
    _
  // Predicated region
  $region22: #{vqvae_forward.1} parent=0 // pred_check
    _
  $region23: #{vqvae_forward.1} parent=0 // pred_check_branch
    %44 = sbr.rel (0) target = $region25
  $region24: #{vqvae_forward.1} parent=0 // pred_region
    _
  $region25: #{vqvae_forward.1} parent=0 // pred_fallthru
    _
  // Predicated region
  $region26: #{vqvae_forward.1} parent=0 // pred_check
    _
  $region27: #{vqvae_forward.1} parent=0 // pred_check_branch
    %46 = sbr.rel (0) target = $region29
  $region28: #{vqvae_forward.1} parent=0 // pred_region
    _
  $region29: #{vqvae_forward.1} parent=0 // pred_fallthru
    _
  // Predicated region
  $region30: #{vqvae_forward.1} parent=0 // pred_check
    _
  $region31: #{vqvae_forward.1} parent=0 // pred_check_branch
    %48 = sbr.rel (0) target = $region33
  $region32: #{vqvae_forward.1} parent=0 // pred_region
    _
  $region33: #{vqvae_forward.1} parent=0 // pred_fallthru
    _
  // Predicated region
  $region34: #{vqvae_forward.1} parent=0 // pred_check
    _
  $region35: #{vqvae_forward.1} parent=0 // pred_check_branch
    %50 = sbr.rel (0) target = $region37
  $region36: #{vqvae_forward.1} parent=0 // pred_region
    _
  $region37: #{vqvae_forward.1} parent=0 // pred_fallthru
    _
  // Predicated region
  $region38: #{vqvae_forward.1} parent=0 // pred_check
    _
  $region39: #{vqvae_forward.1} parent=0 // pred_check_branch
    %52 = sbr.rel (0) target = $region41
  $region40: #{vqvae_forward.1} parent=0 // pred_region
    _
  $region41: #{vqvae_forward.1} parent=0 // pred_fallthru
    _
  // Predicated region
  $region42: #{vqvae_forward.1} parent=0 // pred_check
    _
  $region43: #{vqvae_forward.1} parent=0 // pred_check_branch
    %54 = sbr.rel (0) target = $region45
  $region44: #{vqvae_forward.1} parent=0 // pred_region
    _
  $region45: #{vqvae_forward.1} parent=0 // pred_fallthru
    _
  // Predicated region
  $region46: #{vqvae_forward.1} parent=0 // pred_check
    _
  $region47: #{vqvae_forward.1} parent=0 // pred_check_branch
    %56 = sbr.rel (0) target = $region49
  $region48: #{vqvae_forward.1} parent=0 // pred_region
    _
  $region49: #{vqvae_forward.1} parent=0 // pred_fallthru
    _
  // Predicated region
  $region50: #{vqvae_forward.1} parent=0 // pred_check
    _
  $region51: #{vqvae_forward.1} parent=0 // pred_check_branch
    %58 = sbr.rel (0) target = $region53
  $region52: #{vqvae_forward.1} parent=0 // pred_region
    _
  $region53: #{vqvae_forward.1} parent=0 // pred_fallthru
    _
  // Predicated region
  $region54: #{vqvae_forward.1} parent=0 // pred_check
    _
  $region55: #{vqvae_forward.1} parent=0 // pred_check_branch
    %60 = sbr.rel (0) target = $region57
  $region56: #{vqvae_forward.1} parent=0 // pred_region
    _
  $region57: #{vqvae_forward.1} parent=0 // pred_fallthru
    _
  // Predicated region
  $region58: #{vqvae_forward.1} parent=0 // pred_check
    _
  $region59: #{vqvae_forward.1} parent=0 // pred_check_branch
    %62 = sbr.rel (0) target = $region61
  $region60: #{vqvae_forward.1} parent=0 // pred_region
    _
  $region61: #{vqvae_forward.1} parent=0 // pred_fallthru
    _
  // Predicated region
  $region62: #{vqvae_forward.1} parent=0 // pred_check
    _
  $region63: #{vqvae_forward.1} parent=0 // pred_check_branch
    %64 = sbr.rel (0) target = $region65
  $region64: #{vqvae_forward.1} parent=0 // pred_region
    _
  $region65: #{vqvae_forward.1} parent=0 // pred_fallthru
    _
  // Predicated region
  $region66: #{vqvae_forward.1} parent=0 // pred_check
    _
  $region67: #{vqvae_forward.1} parent=0 // pred_check_branch
    %66 = sbr.rel (0) target = $region69
  $region68: #{vqvae_forward.1} parent=0 // pred_region
    _
  $region69: #{vqvae_forward.1} parent=0 // pred_fallthru
    _
  // Predicated region
  $region70: #{vqvae_forward.1} parent=0 // pred_check
    _
  $region71: #{vqvae_forward.1} parent=0 // pred_check_branch
    %68 = sbr.rel (0) target = $region73
  $region72: #{vqvae_forward.1} parent=0 // pred_region
    _
  $region73: #{vqvae_forward.1} parent=0 // pred_fallthru
    _
  // Predicated region
  $region74: #{vqvae_forward.1} parent=0 // pred_check
    _
  $region75: #{vqvae_forward.1} parent=0 // pred_check_branch
    %70 = sbr.rel (0) target = $region77
  $region76: #{vqvae_forward.1} parent=0 // pred_region
    _
  $region77: #{vqvae_forward.1} parent=0 // pred_fallthru
    _
  // Predicated region
  $region78: #{vqvae_forward.1} parent=0 // pred_check
    _
  $region79: #{vqvae_forward.1} parent=0 // pred_check_branch
    %72 = sbr.rel (0) target = $region81
  $region80: #{vqvae_forward.1} parent=0 // pred_region
    _
  $region81: #{vqvae_forward.1} parent=0 // pred_fallthru
    _
  // Predicated region
  $region82: #{vqvae_forward.1} parent=0 // pred_check
    _
  $region83: #{vqvae_forward.1} parent=0 // pred_check_branch
    %74 = sbr.rel (0) target = $region85
  $region84: #{vqvae_forward.1} parent=0 // pred_region
    _
  $region85: #{vqvae_forward.1} parent=0 // pred_fallthru
    _
  // Predicated region
  $region86: #{vqvae_forward.1} parent=0 // pred_check
    _
  $region87: #{vqvae_forward.1} parent=0 // pred_check_branch
    %76 = sbr.rel (0) target = $region89
  $region88: #{vqvae_forward.1} parent=0 // pred_region
    _
  $region89: #{vqvae_forward.1} parent=0 // pred_fallthru
    _
  // Predicated region
  $region90: #{vqvae_forward.1} parent=0 // pred_check
    _
  $region91: #{vqvae_forward.1} parent=0 // pred_check_branch
    %78 = sbr.rel (0) target = $region93
  $region92: #{vqvae_forward.1} parent=0 // pred_region
    _
  $region93: #{vqvae_forward.1} parent=0 // pred_fallthru
    _
  // Predicated region
  $region94: #{vqvae_forward.1} parent=0 // pred_check
    _
  $region95: #{vqvae_forward.1} parent=0 // pred_check_branch
    %80 = sbr.rel (0) target = $region97
  $region96: #{vqvae_forward.1} parent=0 // pred_region
    _
  $region97: #{vqvae_forward.1} parent=0 // pred_fallthru
    _
  %v81 = vld [vmem:[%s0] sm:$0x3]
  %v82 = vld [vmem:[%s1] sm:$0xff]
  %v83 = vld [vmem:[%s1 + $0x8] sm:$0xff]
  %v84 = vld [vmem:[%s1 + $0x10] sm:$0xff]
  %v85 = vld [vmem:[%s1 + $0x18] sm:$0xff]
  %86 = vst [vmem:[#allocation2] sm:$0xff] %v82
  %87 = vst [vmem:[#allocation2 + $0x8] sm:$0xff] %v83
  %88 = vst [vmem:[#allocation2 + $0x10] sm:$0xff] %v84
  %89 = vst [vmem:[#allocation2 + $0x18] sm:$0xff] %v85
  %90 = vrot.lane.b32.xlu0 %v82, 127
  %v91 = vpop.permute.xlu0 %90
  %92 = vrot.lane.b32.xlu0 %v84, 127
  %v93 = vpop.permute.xlu0 %92
  %94 = vrot.lane.b32.xlu0 %v83, 127
  %v95 = vpop.permute.xlu0 %94
  %96 = vrot.lane.b32.xlu0 %v85, 127
  %v97 = vpop.permute.xlu0 %96
  %v98 = vlaneseq
  %v99 = vand.u32 %v98, 127
  %vm100 = vcmp.lt.s32.totalorder %v99, 127
  %v101 = vsel %vm100, %v91, %v95
  %v102 = vsel %vm100, %v93, %v97
  %v103 = vsel %vm100, %v95, %v91
  %v104 = vsel %vm100, %v97, %v93
  %105 = vst [vmem:[#allocation2 + $0x20] sm:$0xff] %v101
  %106 = vst [vmem:[#allocation2 + $0x28] sm:$0xff] %v103
  %107 = vst [vmem:[#allocation2 + $0x30] sm:$0xff] %v102
  %108 = vst [vmem:[#allocation2 + $0x38] sm:$0xff] %v104
  %109 = vrot.lane.b32.xlu0 %v82, 119
  %v110 = vpop.permute.xlu0 %109
  %111 = vrot.lane.b32.xlu0 %v84, 119
  %v112 = vpop.permute.xlu0 %111
  %113 = vrot.lane.b32.xlu0 %v83, 119
  %v114 = vpop.permute.xlu0 %113
  %115 = vrot.lane.b32.xlu0 %v85, 119
  %v116 = vpop.permute.xlu0 %115
  %vm117 = vcmp.lt.s32.totalorder %v99, 119
  %v118 = vsel %vm117, %v110, %v114
  %v119 = vsel %vm117, %v112, %v116
  %v120 = vsel %vm117, %v114, %v110
  %v121 = vsel %vm117, %v116, %v112
  %122 = vst [vmem:[#allocation2 + $0x40] sm:$0xff] %v118
  %123 = vst [vmem:[#allocation2 + $0x48] sm:$0xff] %v120
  %124 = vst [vmem:[#allocation2 + $0x50] sm:$0xff] %v119
  %125 = vst [vmem:[#allocation2 + $0x58] sm:$0xff] %v121
  %126 = vrot.lane.b32.xlu0 %v82, 118
  %v127 = vpop.permute.xlu0 %126
  %128 = vrot.lane.b32.xlu0 %v84, 118
  %v129 = vpop.permute.xlu0 %128
  %130 = vrot.lane.b32.xlu0 %v83, 118
  %v131 = vpop.permute.xlu0 %130
  %132 = vrot.lane.b32.xlu0 %v85, 118
  %v133 = vpop.permute.xlu0 %132
  %vm134 = vcmp.lt.s32.totalorder %v99, 118
  %v135 = vsel %vm134, %v127, %v131
  %v136 = vsel %vm134, %v129, %v133
  %v137 = vsel %vm134, %v131, %v127
  %v138 = vsel %vm134, %v133, %v129
  %139 = vst [vmem:[#allocation2 + $0x60] sm:$0xff] %v135
  %140 = vst [vmem:[#allocation2 + $0x68] sm:$0xff] %v137
  %141 = vst [vmem:[#allocation2 + $0x70] sm:$0xff] %v136
  %142 = vst [vmem:[#allocation2 + $0x78] sm:$0xff] %v138
  %v143 = vld [vmem:[%s2] sm:$0xff]
  %v144 = vld [vmem:[%s2 + $0x8] sm:$0xff]
  %v145 = vld [vmem:[%s2 + $0x10] sm:$0xff]
  %v146 = vld [vmem:[%s2 + $0x18] sm:$0xff]
  %v147 = vld [vmem:[#allocation2] sm:$0xff]
  %v148 = vld [vmem:[#allocation2 + $0x8] sm:$0xff]
  %v149 = vld [vmem:[#allocation2 + $0x10] sm:$0xff]
  %v150 = vld [vmem:[#allocation2 + $0x18] sm:$0xff]
  %v151 = vld [vmem:[#allocation2 + $0x20] sm:$0xff]
  %v152 = vld [vmem:[#allocation2 + $0x28] sm:$0xff]
  %v153 = vld [vmem:[#allocation2 + $0x30] sm:$0xff]
  %v154 = vld [vmem:[#allocation2 + $0x38] sm:$0xff]
  %v155 = vld [vmem:[#allocation2 + $0x40] sm:$0xff]
  %v156 = vld [vmem:[#allocation2 + $0x48] sm:$0xff]
  %v157 = vld [vmem:[#allocation2 + $0x50] sm:$0xff]
  %v158 = vld [vmem:[#allocation2 + $0x58] sm:$0xff]
  %v159 = vld [vmem:[#allocation2 + $0x60] sm:$0xff]
  %v160 = vld [vmem:[#allocation2 + $0x68] sm:$0xff]
  %v161 = vld [vmem:[#allocation2 + $0x70] sm:$0xff]
  %v162 = vld [vmem:[#allocation2 + $0x78] sm:$0xff]
  %v163 = vld [vmem:[%s3] sm:$0xff]
  %v164 = vld [vmem:[%s3 + $0x8] sm:$0xff]
  %v165 = vld [vmem:[%s3 + $0x10] sm:$0xff]
  %v166 = vld [vmem:[%s3 + $0x18] sm:$0xff]
  %168 = vset.pattern.permute.xlu0 0
  %169 = vperm.xlu0 %168, %v163
  %v170 = vpop.permute.xlu0 %169
  %173 = vset.pattern.permute.xlu0 0
  %174 = vperm.xlu0 %173, %v164
  %v175 = vpop.permute.xlu0 %174
  %178 = vset.pattern.permute.xlu0 0
  %179 = vperm.xlu0 %178, %v165
  %v180 = vpop.permute.xlu0 %179
  %183 = vset.pattern.permute.xlu0 0
  %184 = vperm.xlu0 %183, %v166
  %v185 = vpop.permute.xlu0 %184
  %vm187 = vcmask 523264
  %v189 = vsel %vm187, %v143, 0
  %v192 = vsel %vm187, %v144, 0
  %v195 = vsel %vm187, %v145, 0
  %v198 = vsel %vm187, %v146, 0
  %200 = vmatpush.msra.mxu0 0.0
  %201 = vmatpush.msra.mxu0 0.0
  %202 = vmatpush.msra.mxu0 0.0
  %203 = vmatpush.msra.mxu0 0.0
  %204 = vmatpush.msra.mxu0 0.0
  %205 = vmatpush.msra.mxu0 0.0
  %206 = vmatpush.msra.mxu0 0.0
  %207 = vmatpush.msra.mxu0 0.0
  %208 = vmatpush.msra.mxu0 %v161
  %209 = vmatpush.msra.mxu0 %v159
  %210 = vmatpush.msra.mxu0 %v157
  %211 = vmatpush.msra.mxu0 %v155
  %212 = vmatpush.msra.mxu0 %v153
  %213 = vmatpush.msra.mxu0 %v151
  %214 = vmatpush.msra.mxu0 %v149
  %215 = vmatpush.msra.mxu0 %v147
  %216 = vmatmul.f32.gmra.mxu0 %v189
  %v217 = vpop.f32.mrf.mxu0
  %v218 = vadd.f32 %v170, %v217
  %219 = vmatmul.f32.gmra.mxu0 %v192
  %v220 = vpop.f32.mrf.mxu0
  %v221 = vadd.f32 %v175, %v220
  %222 = vmatmul.f32.gmra.mxu0 %v195
  %v223 = vpop.f32.mrf.mxu0
  %v224 = vadd.f32 %v180, %v223
  %225 = vmatmul.f32.gmra.mxu0 %v198
  %v226 = vpop.f32.mrf.mxu0
  %v227 = vadd.f32 %v185, %v226
  %228 = vdwg.mxu0
  %229 = vmatpush.msra.mxu0 0.0
  %230 = vmatpush.msra.mxu0 0.0
  %231 = vmatpush.msra.mxu0 0.0
  %232 = vmatpush.msra.mxu0 0.0
  %233 = vmatpush.msra.mxu0 0.0
  %234 = vmatpush.msra.mxu0 0.0
  %235 = vmatpush.msra.mxu0 0.0
  %236 = vmatpush.msra.mxu0 0.0
  %237 = vmatpush.msra.mxu0 %v162
  %238 = vmatpush.msra.mxu0 %v160
  %239 = vmatpush.msra.mxu0 %v158
  %240 = vmatpush.msra.mxu0 %v156
  %241 = vmatpush.msra.mxu0 %v154
  %242 = vmatpush.msra.mxu0 %v152
  %243 = vmatpush.msra.mxu0 %v150
  %244 = vmatpush.msra.mxu0 %v148
  %245 = vmatmul.f32.gmra.mxu0 %v189
  %v246 = vpop.f32.mrf.mxu0
  %v247 = vadd.f32 %v170, %v246
  %248 = vmatmul.f32.gmra.mxu0 %v192
  %v249 = vpop.f32.mrf.mxu0
  %v250 = vadd.f32 %v175, %v249
  %251 = vmatmul.f32.gmra.mxu0 %v195
  %v252 = vpop.f32.mrf.mxu0
  %v253 = vadd.f32 %v180, %v252
  %254 = vmatmul.f32.gmra.mxu0 %v198
  %v255 = vpop.f32.mrf.mxu0
  %v256 = vadd.f32 %v185, %v255
  %257 = vdwg.mxu0
  %v258 = vmax.f32 %v218, 0.0
  %v259 = vmax.f32 %v247, 0.0
  %v260 = vmax.f32 %v221, 0.0
  %v261 = vmax.f32 %v250, 0.0
  %v262 = vmax.f32 %v224, 0.0
  %v263 = vmax.f32 %v253, 0.0
  %v264 = vmax.f32 %v227, 0.0
  %v265 = vmax.f32 %v256, 0.0
  %v267 = vperm.slane %v81, 0
  %v268 = vperm.slane %v81, 1
  %v271 = vmul.f32 %v258, %v267
  %v272 = vmul.f32 %v259, %v268
  %v273 = vmul.f32 %v260, %v267
  %v274 = vmul.f32 %v261, %v268
  %v275 = vmul.f32 %v262, %v267
  %v276 = vmul.f32 %v263, %v268
  %v277 = vmul.f32 %v264, %v267
  %v278 = vmul.f32 %v265, %v268
  %279 = vrot.lane.b32.xlu0 %v277, 10
  %v280 = vpop.permute.xlu0 %279
  %281 = vrot.lane.b32.xlu0 %v278, 10
  %v282 = vpop.permute.xlu0 %281
  %vm283 = vcmp.lt.s32.totalorder %v99, 10
  %v284 = vsel %vm283, %v280, %v282
  %v285 = vsel %vm283, %v282, %v280
  %286 = vst [vmem:[#allocation2] sm:$0xff] %v285
  %287 = vst [vmem:[#allocation2 + $0x8] sm:$0xff] %v284
  %288 = vrot.lane.b32.xlu0 %v275, 9
  %v289 = vpop.permute.xlu0 %288
  %290 = vrot.lane.b32.xlu0 %v276, 9
  %v291 = vpop.permute.xlu0 %290
  %vm292 = vcmp.lt.s32.totalorder %v99, 9
  %v293 = vsel %vm292, %v289, %v291
  %v294 = vsel %vm292, %v291, %v289
  %295 = vst [vmem:[#allocation2 + $0x10] sm:$0xff] %v294
  %296 = vst [vmem:[#allocation2 + $0x18] sm:$0xff] %v293
  %297 = vrot.lane.b32.xlu0 %v277, 9
  %v298 = vpop.permute.xlu0 %297
  %299 = vrot.lane.b32.xlu0 %v278, 9
  %v300 = vpop.permute.xlu0 %299
  %v301 = vsel %vm292, %v298, %v300
  %v302 = vsel %vm292, %v300, %v298
  %303 = vst [vmem:[#allocation2 + $0x20] sm:$0xff] %v302
  %304 = vst [vmem:[#allocation2 + $0x28] sm:$0xff] %v301
  %305 = vrot.lane.b32.xlu0 %v275, 8
  %v306 = vpop.permute.xlu0 %305
  %307 = vrot.lane.b32.xlu0 %v276, 8
  %v308 = vpop.permute.xlu0 %307
  %vm309 = vcmp.lt.s32.totalorder %v99, 8
  %v310 = vsel %vm309, %v306, %v308
  %v311 = vsel %vm309, %v308, %v306
  %312 = vst [vmem:[#allocation2 + $0x30] sm:$0xff] %v311
  %313 = vst [vmem:[#allocation2 + $0x38] sm:$0xff] %v310
  %314 = vrot.lane.b32.xlu0 %v273, 1
  %v315 = vpop.permute.xlu0 %314
  %316 = vrot.lane.b32.xlu0 %v274, 1
  %v317 = vpop.permute.xlu0 %316
  %vm318 = vcmp.lt.s32.totalorder %v99, 1
  %v319 = vsel %vm318, %v315, %v317
  %v320 = vsel %vm318, %v317, %v315
  %321 = vst [vmem:[#allocation2 + $0x40] sm:$0xff] %v320
  %322 = vst [vmem:[#allocation2 + $0x48] sm:$0xff] %v319
  %323 = vst [vmem:[#allocation2 + $0x50] sm:$0xff] %v271
  %324 = vst [vmem:[#allocation2 + $0x58] sm:$0xff] %v272
  %325 = vst [vmem:[#allocation2 + $0x60] sm:$0xff] %v273
  %326 = vst [vmem:[#allocation2 + $0x68] sm:$0xff] %v274
  %327 = vrot.lane.b32.xlu0 %v271, 127
  %v328 = vpop.permute.xlu0 %327
  %329 = vrot.lane.b32.xlu0 %v272, 127
  %v330 = vpop.permute.xlu0 %329
  %v331 = vsel %vm100, %v328, %v330
  %v332 = vsel %vm100, %v330, %v328
  %333 = vst [vmem:[#allocation2 + $0x70] sm:$0xff] %v331
  %334 = vst [vmem:[#allocation2 + $0x78] sm:$0xff] %v332
  %335 = vrot.lane.b32.xlu0 %v277, 1
  %v336 = vpop.permute.xlu0 %335
  %337 = vrot.lane.b32.xlu0 %v278, 1
  %v338 = vpop.permute.xlu0 %337
  %v339 = vsel %vm318, %v336, %v338
  %v340 = vsel %vm318, %v338, %v336
  %341 = vst [vmem:[#allocation2 + $0x80] sm:$0xff] %v340
  %342 = vst [vmem:[#allocation2 + $0x88] sm:$0xff] %v339
  %343 = vst [vmem:[#allocation2 + $0x90] sm:$0xff] %v275
  %344 = vst [vmem:[#allocation2 + $0x98] sm:$0xff] %v276
  %345 = vst [vmem:[#allocation2 + $0xa0] sm:$0xff] %v277
  %346 = vst [vmem:[#allocation2 + $0xa8] sm:$0xff] %v278
  %347 = vrot.lane.b32.xlu0 %v275, 127
  %v348 = vpop.permute.xlu0 %347
  %349 = vrot.lane.b32.xlu0 %v276, 127
  %v350 = vpop.permute.xlu0 %349
  %v351 = vsel %vm100, %v348, %v350
  %v352 = vsel %vm100, %v350, %v348
  %353 = vst [vmem:[#allocation2 + $0xb0] sm:$0xff] %v351
  %354 = vst [vmem:[#allocation2 + $0xb8] sm:$0xff] %v352
  %355 = vrot.lane.b32.xlu0 %v273, 120
  %v356 = vpop.permute.xlu0 %355
  %357 = vrot.lane.b32.xlu0 %v274, 120
  %v358 = vpop.permute.xlu0 %357
  %vm359 = vcmp.lt.s32.totalorder %v99, 120
  %v360 = vsel %vm359, %v356, %v358
  %v361 = vsel %vm359, %v358, %v356
  %362 = vst [vmem:[#allocation2 + $0xc0] sm:$0xff] %v360
  %363 = vst [vmem:[#allocation2 + $0xc8] sm:$0xff] %v361
  %364 = vrot.lane.b32.xlu0 %v271, 119
  %v365 = vpop.permute.xlu0 %364
  %366 = vrot.lane.b32.xlu0 %v272, 119
  %v367 = vpop.permute.xlu0 %366
  %v368 = vsel %vm117, %v365, %v367
  %v369 = vsel %vm117, %v367, %v365
  %370 = vst [vmem:[#allocation2 + $0xd0] sm:$0xff] %v368
  %371 = vst [vmem:[#allocation2 + $0xd8] sm:$0xff] %v369
  %372 = vrot.lane.b32.xlu0 %v273, 119
  %v373 = vpop.permute.xlu0 %372
  %374 = vrot.lane.b32.xlu0 %v274, 119
  %v375 = vpop.permute.xlu0 %374
  %v376 = vsel %vm117, %v373, %v375
  %v377 = vsel %vm117, %v375, %v373
  %378 = vst [vmem:[#allocation2 + $0xe0] sm:$0xff] %v376
  %379 = vst [vmem:[#allocation2 + $0xe8] sm:$0xff] %v377
  %380 = vrot.lane.b32.xlu0 %v271, 118
  %v381 = vpop.permute.xlu0 %380
  %382 = vrot.lane.b32.xlu0 %v272, 118
  %v383 = vpop.permute.xlu0 %382
  %v384 = vsel %vm134, %v381, %v383
  %v385 = vsel %vm134, %v383, %v381
  %386 = vst [vmem:[#allocation2 + $0xf0] sm:$0xff] %v384
  %387 = vst [vmem:[#allocation2 + $0xf8] sm:$0xff] %v385
  %v388 = vld [vmem:[%s4] sm:$0xff]
  %v389 = vld [vmem:[%s4 + $0x8] sm:$0xff]
  %v390 = vld [vmem:[#allocation2] sm:$0xff]
  %v391 = vld [vmem:[#allocation2 + $0x8] sm:$0xff]
  %v392 = vld [vmem:[#allocation2 + $0x10] sm:$0xff]
  %v393 = vld [vmem:[#allocation2 + $0x18] sm:$0xff]
  %v394 = vld [vmem:[#allocation2 + $0x20] sm:$0xff]
  %v395 = vld [vmem:[#allocation2 + $0x28] sm:$0xff]
  %v396 = vld [vmem:[#allocation2 + $0x30] sm:$0xff]
  %v397 = vld [vmem:[#allocation2 + $0x38] sm:$0xff]
  %v398 = vld [vmem:[#allocation2 + $0x40] sm:$0xff]
  %v399 = vld [vmem:[#allocation2 + $0x48] sm:$0xff]
  %v400 = vld [vmem:[#allocation2 + $0x50] sm:$0xff]
  %v401 = vld [vmem:[#allocation2 + $0x58] sm:$0xff]
  %v402 = vld [vmem:[#allocation2 + $0x60] sm:$0xff]
  %v403 = vld [vmem:[#allocation2 + $0x68] sm:$0xff]
  %v404 = vld [vmem:[#allocation2 + $0x70] sm:$0xff]
  %v405 = vld [vmem:[#allocation2 + $0x78] sm:$0xff]
  %v406 = vld [vmem:[#allocation2 + $0x80] sm:$0xff]
  %v407 = vld [vmem:[#allocation2 + $0x88] sm:$0xff]
  %v408 = vld [vmem:[#allocation2 + $0x90] sm:$0xff]
  %v409 = vld [vmem:[#allocation2 + $0x98] sm:$0xff]
  %v410 = vld [vmem:[#allocation2 + $0xa0] sm:$0xff]
  %v411 = vld [vmem:[#allocation2 + $0xa8] sm:$0xff]
  %v412 = vld [vmem:[#allocation2 + $0xb0] sm:$0xff]
  %v413 = vld [vmem:[#allocation2 + $0xb8] sm:$0xff]
  %v414 = vld [vmem:[#allocation2 + $0xc0] sm:$0xff]
  %v415 = vld [vmem:[#allocation2 + $0xc8] sm:$0xff]
  %v416 = vld [vmem:[#allocation2 + $0xd0] sm:$0xff]
  %v417 = vld [vmem:[#allocation2 + $0xd8] sm:$0xff]
  %v418 = vld [vmem:[#allocation2 + $0xe0] sm:$0xff]
  %v419 = vld [vmem:[#allocation2 + $0xe8] sm:$0xff]
  %v420 = vld [vmem:[#allocation2 + $0xf0] sm:$0xff]
  %v421 = vld [vmem:[#allocation2 + $0xf8] sm:$0xff]
  %v422 = vld [vmem:[%s5] sm:$0xff]
  %v423 = vld [vmem:[%s5 + $0x8] sm:$0xff]
  %425 = vset.pattern.permute.xlu0 0
  %426 = vperm.xlu0 %425, %v422
  %v427 = vpop.permute.xlu0 %426
  %430 = vset.pattern.permute.xlu0 0
  %431 = vperm.xlu0 %430, %v423
  %v432 = vpop.permute.xlu0 %431
  %434 = vmatpush.msra.mxu0 %v420
  %435 = vmatpush.msra.mxu0 %v418
  %436 = vmatpush.msra.mxu0 %v416
  %437 = vmatpush.msra.mxu0 %v414
  %438 = vmatpush.msra.mxu0 %v412
  %439 = vmatpush.msra.mxu0 %v410
  %440 = vmatpush.msra.mxu0 %v408
  %441 = vmatpush.msra.mxu0 %v406
  %442 = vmatpush.msra.mxu0 %v404
  %443 = vmatpush.msra.mxu0 %v402
  %444 = vmatpush.msra.mxu0 %v400
  %445 = vmatpush.msra.mxu0 %v398
  %446 = vmatpush.msra.mxu0 %v396
  %447 = vmatpush.msra.mxu0 %v394
  %448 = vmatpush.msra.mxu0 %v392
  %449 = vmatpush.msra.mxu0 %v390
  %450 = vmatmul.f32.gmra.mxu0 %v388
  %v451 = vpop.f32.mrf.mxu0
  %v452 = vadd.f32 %v427, %v451
  %453 = vmatmul.f32.gmra.mxu0 %v389
  %v454 = vpop.f32.mrf.mxu0
  %v455 = vadd.f32 %v432, %v454
  %456 = vdwg.mxu0
  %457 = vmatpush.msra.mxu0 %v421
  %458 = vmatpush.msra.mxu0 %v419
  %459 = vmatpush.msra.mxu0 %v417
  %460 = vmatpush.msra.mxu0 %v415
  %461 = vmatpush.msra.mxu0 %v413
  %462 = vmatpush.msra.mxu0 %v411
  %463 = vmatpush.msra.mxu0 %v409
  %464 = vmatpush.msra.mxu0 %v407
  %465 = vmatpush.msra.mxu0 %v405
  %466 = vmatpush.msra.mxu0 %v403
  %467 = vmatpush.msra.mxu0 %v401
  %468 = vmatpush.msra.mxu0 %v399
  %469 = vmatpush.msra.mxu0 %v397
  %470 = vmatpush.msra.mxu0 %v395
  %471 = vmatpush.msra.mxu0 %v393
  %472 = vmatpush.msra.mxu0 %v391
  %473 = vmatmul.f32.gmra.mxu0 %v388
  %v474 = vpop.f32.mrf.mxu0
  %v475 = vadd.f32 %v427, %v474
  %476 = vmatmul.f32.gmra.mxu0 %v389
  %v477 = vpop.f32.mrf.mxu0
  %v478 = vadd.f32 %v432, %v477
  %479 = vdwg.mxu0
  %v480 = vmax.f32 %v452, 0.0
  %v481 = vmax.f32 %v475, 0.0
  %v482 = vmax.f32 %v455, 0.0
  %v483 = vmax.f32 %v478, 0.0
  %v484 = vmul.f32 %v480, %v267
  %v485 = vmul.f32 %v481, %v268
  %v486 = vmul.f32 %v482, %v267
  %v487 = vmul.f32 %v483, %v268
  %v488 = vld [vmem:[%s6] sm:$0xff]
  %v489 = vld [vmem:[%s6 + $0x8] sm:$0xff]
  %v490 = vld [vmem:[%s6 + $0x10] sm:$0xff]
  %v491 = vld [vmem:[%s6 + $0x18] sm:$0xff]
  %492 = vrot.lane.b32.xlu0 %v484, 10
  %v493 = vpop.permute.xlu0 %492
  %494 = vrot.lane.b32.xlu0 %v486, 10
  %v495 = vpop.permute.xlu0 %494
  %496 = vrot.lane.b32.xlu0 %v485, 10
  %v497 = vpop.permute.xlu0 %496
  %498 = vrot.lane.b32.xlu0 %v487, 10
  %v499 = vpop.permute.xlu0 %498
  %v500 = vsel %vm283, %v493, %v497
  %v501 = vsel %vm283, %v495, %v499
  %v502 = vsel %vm283, %v497, %v493
  %v503 = vsel %vm283, %v499, %v495
  %504 = vst [vmem:[#allocation2] sm:$0xff] %v502
  %505 = vst [vmem:[#allocation2 + $0x8] sm:$0xff] %v500
  %506 = vst [vmem:[#allocation2 + $0x10] sm:$0xff] %v503
  %507 = vst [vmem:[#allocation2 + $0x18] sm:$0xff] %v501
  %508 = vrot.lane.b32.xlu0 %v484, 9
  %v509 = vpop.permute.xlu0 %508
  %510 = vrot.lane.b32.xlu0 %v486, 9
  %v511 = vpop.permute.xlu0 %510
  %512 = vrot.lane.b32.xlu0 %v485, 9
  %v513 = vpop.permute.xlu0 %512
  %514 = vrot.lane.b32.xlu0 %v487, 9
  %v515 = vpop.permute.xlu0 %514
  %v516 = vsel %vm292, %v509, %v513
  %v517 = vsel %vm292, %v511, %v515
  %v518 = vsel %vm292, %v513, %v509
  %v519 = vsel %vm292, %v515, %v511
  %520 = vst [vmem:[#allocation2 + $0x20] sm:$0xff] %v518
  %521 = vst [vmem:[#allocation2 + $0x28] sm:$0xff] %v516
  %522 = vst [vmem:[#allocation2 + $0x30] sm:$0xff] %v519
  %523 = vst [vmem:[#allocation2 + $0x38] sm:$0xff] %v517
  %524 = vrot.lane.b32.xlu0 %v484, 8
  %v525 = vpop.permute.xlu0 %524
  %526 = vrot.lane.b32.xlu0 %v486, 8
  %v527 = vpop.permute.xlu0 %526
  %528 = vrot.lane.b32.xlu0 %v485, 8
  %v529 = vpop.permute.xlu0 %528
  %530 = vrot.lane.b32.xlu0 %v487, 8
  %v531 = vpop.permute.xlu0 %530
  %v532 = vsel %vm309, %v525, %v529
  %v533 = vsel %vm309, %v527, %v531
  %v534 = vsel %vm309, %v529, %v525
  %v535 = vsel %vm309, %v531, %v527
  %536 = vst [vmem:[#allocation2 + $0x40] sm:$0xff] %v534
  %537 = vst [vmem:[#allocation2 + $0x48] sm:$0xff] %v532
  %538 = vst [vmem:[#allocation2 + $0x50] sm:$0xff] %v535
  %539 = vst [vmem:[#allocation2 + $0x58] sm:$0xff] %v533
  %540 = vrot.lane.b32.xlu0 %v484, 1
  %v541 = vpop.permute.xlu0 %540
  %542 = vrot.lane.b32.xlu0 %v486, 1
  %v543 = vpop.permute.xlu0 %542
  %544 = vrot.lane.b32.xlu0 %v485, 1
  %v545 = vpop.permute.xlu0 %544
  %546 = vrot.lane.b32.xlu0 %v487, 1
  %v547 = vpop.permute.xlu0 %546
  %v548 = vsel %vm318, %v541, %v545
  %v549 = vsel %vm318, %v543, %v547
  %v550 = vsel %vm318, %v545, %v541
  %v551 = vsel %vm318, %v547, %v543
  %552 = vst [vmem:[#allocation2 + $0x60] sm:$0xff] %v550
  %553 = vst [vmem:[#allocation2 + $0x68] sm:$0xff] %v548
  %554 = vst [vmem:[#allocation2 + $0x70] sm:$0xff] %v551
  %555 = vst [vmem:[#allocation2 + $0x78] sm:$0xff] %v549
  %556 = vst [vmem:[#allocation2 + $0x80] sm:$0xff] %v484
  %557 = vst [vmem:[#allocation2 + $0x88] sm:$0xff] %v485
  %558 = vst [vmem:[#allocation2 + $0x90] sm:$0xff] %v486
  %559 = vst [vmem:[#allocation2 + $0x98] sm:$0xff] %v487
  %560 = vrot.lane.b32.xlu0 %v484, 127
  %v561 = vpop.permute.xlu0 %560
  %562 = vrot.lane.b32.xlu0 %v486, 127
  %v563 = vpop.permute.xlu0 %562
  %564 = vrot.lane.b32.xlu0 %v485, 127
  %v565 = vpop.permute.xlu0 %564
  %566 = vrot.lane.b32.xlu0 %v487, 127
  %v567 = vpop.permute.xlu0 %566
  %v568 = vsel %vm100, %v561, %v565
  %v569 = vsel %vm100, %v563, %v567
  %v570 = vsel %vm100, %v565, %v561
  %v571 = vsel %vm100, %v567, %v563
  %572 = vst [vmem:[#allocation2 + $0xa0] sm:$0xff] %v568
  %573 = vst [vmem:[#allocation2 + $0xa8] sm:$0xff] %v570
  %574 = vst [vmem:[#allocation2 + $0xb0] sm:$0xff] %v569
  %575 = vst [vmem:[#allocation2 + $0xb8] sm:$0xff] %v571
  %576 = vrot.lane.b32.xlu0 %v484, 120
  %v577 = vpop.permute.xlu0 %576
  %578 = vrot.lane.b32.xlu0 %v486, 120
  %v579 = vpop.permute.xlu0 %578
  %580 = vrot.lane.b32.xlu0 %v485, 120
  %v581 = vpop.permute.xlu0 %580
  %582 = vrot.lane.b32.xlu0 %v487, 120
  %v583 = vpop.permute.xlu0 %582
  %v584 = vsel %vm359, %v577, %v581
  %v585 = vsel %vm359, %v579, %v583
  %v586 = vsel %vm359, %v581, %v577
  %v587 = vsel %vm359, %v583, %v579
  %588 = vst [vmem:[#allocation2 + $0xc0] sm:$0xff] %v584
  %589 = vst [vmem:[#allocation2 + $0xc8] sm:$0xff] %v586
  %590 = vst [vmem:[#allocation2 + $0xd0] sm:$0xff] %v585
  %591 = vst [vmem:[#allocation2 + $0xd8] sm:$0xff] %v587
  %592 = vrot.lane.b32.xlu0 %v484, 119
  %v593 = vpop.permute.xlu0 %592
  %594 = vrot.lane.b32.xlu0 %v486, 119
  %v595 = vpop.permute.xlu0 %594
  %596 = vrot.lane.b32.xlu0 %v485, 119
  %v597 = vpop.permute.xlu0 %596
  %598 = vrot.lane.b32.xlu0 %v487, 119
  %v599 = vpop.permute.xlu0 %598
  %v600 = vsel %vm117, %v593, %v597
  %v601 = vsel %vm117, %v595, %v599
  %v602 = vsel %vm117, %v597, %v593
  %v603 = vsel %vm117, %v599, %v595
  %604 = vst [vmem:[#allocation2 + $0xe0] sm:$0xff] %v600
  %605 = vst [vmem:[#allocation2 + $0xe8] sm:$0xff] %v602
  %606 = vst [vmem:[#allocation2 + $0xf0] sm:$0xff] %v601
  %607 = vst [vmem:[#allocation2 + $0xf8] sm:$0xff] %v603
  %608 = vrot.lane.b32.xlu0 %v484, 118
  %v609 = vpop.permute.xlu0 %608
  %610 = vrot.lane.b32.xlu0 %v486, 118
  %v611 = vpop.permute.xlu0 %610
  %612 = vrot.lane.b32.xlu0 %v485, 118
  %v613 = vpop.permute.xlu0 %612
  %614 = vrot.lane.b32.xlu0 %v487, 118
  %v615 = vpop.permute.xlu0 %614
  %v616 = vsel %vm134, %v609, %v613
  %v617 = vsel %vm134, %v611, %v615
  %v618 = vsel %vm134, %v613, %v609
  %v619 = vsel %vm134, %v615, %v611
  %620 = vst [vmem:[#allocation2 + $0x100] sm:$0xff] %v616
  %621 = vst [vmem:[#allocation2 + $0x108] sm:$0xff] %v618
  %622 = vst [vmem:[#allocation2 + $0x110] sm:$0xff] %v617
  %623 = vst [vmem:[#allocation2 + $0x118] sm:$0xff] %v619
  %v624 = vld [vmem:[#allocation2] sm:$0xff]
  %v625 = vld [vmem:[#allocation2 + $0x8] sm:$0xff]
  %v626 = vld [vmem:[#allocation2 + $0x10] sm:$0xff]
  %v627 = vld [vmem:[#allocation2 + $0x18] sm:$0xff]
  %v628 = vld [vmem:[#allocation2 + $0x20] sm:$0xff]
  %v629 = vld [vmem:[#allocation2 + $0x28] sm:$0xff]
  %v630 = vld [vmem:[#allocation2 + $0x30] sm:$0xff]
  %v631 = vld [vmem:[#allocation2 + $0x38] sm:$0xff]
  %v632 = vld [vmem:[#allocation2 + $0x40] sm:$0xff]
  %v633 = vld [vmem:[#allocation2 + $0x48] sm:$0xff]
  %v634 = vld [vmem:[#allocation2 + $0x50] sm:$0xff]
  %v635 = vld [vmem:[#allocation2 + $0x58] sm:$0xff]
  %v636 = vld [vmem:[#allocation2 + $0x60] sm:$0xff]
  %v637 = vld [vmem:[#allocation2 + $0x68] sm:$0xff]
  %v638 = vld [vmem:[#allocation2 + $0x70] sm:$0xff]
  %v639 = vld [vmem:[#allocation2 + $0x78] sm:$0xff]
  %v640 = vld [vmem:[#allocation2 + $0x80] sm:$0xff]
  %v641 = vld [vmem:[#allocation2 + $0x88] sm:$0xff]
  %v642 = vld [vmem:[#allocation2 + $0x90] sm:$0xff]
  %v643 = vld [vmem:[#allocation2 + $0x98] sm:$0xff]
  %v644 = vld [vmem:[#allocation2 + $0xa0] sm:$0xff]
  %v645 = vld [vmem:[#allocation2 + $0xa8] sm:$0xff]
  %v646 = vld [vmem:[#allocation2 + $0xb0] sm:$0xff]
  %v647 = vld [vmem:[#allocation2 + $0xb8] sm:$0xff]
  %v648 = vld [vmem:[#allocation2 + $0xc0] sm:$0xff]
  %v649 = vld [vmem:[#allocation2 + $0xc8] sm:$0xff]
  %v650 = vld [vmem:[#allocation2 + $0xd0] sm:$0xff]
  %v651 = vld [vmem:[#allocation2 + $0xd8] sm:$0xff]
  %v652 = vld [vmem:[#allocation2 + $0xe0] sm:$0xff]
  %v653 = vld [vmem:[#allocation2 + $0xe8] sm:$0xff]
  %v654 = vld [vmem:[#allocation2 + $0xf0] sm:$0xff]
  %v655 = vld [vmem:[#allocation2 + $0xf8] sm:$0xff]
  %v656 = vld [vmem:[#allocation2 + $0x100] sm:$0xff]
  %v657 = vld [vmem:[#allocation2 + $0x108] sm:$0xff]
  %v658 = vld [vmem:[#allocation2 + $0x110] sm:$0xff]
  %v659 = vld [vmem:[#allocation2 + $0x118] sm:$0xff]
  %v660 = vld [vmem:[%s7] sm:$0xff]
  %v661 = vld [vmem:[%s7 + $0x8] sm:$0xff]
  %663 = vset.pattern.permute.xlu0 0
  %664 = vperm.xlu0 %663, %v660
  %v665 = vpop.permute.xlu0 %664
  %668 = vset.pattern.permute.xlu0 0
  %669 = vperm.xlu0 %668, %v661
  %v670 = vpop.permute.xlu0 %669
  %vm672 = vcmask 130048
  %v674 = vsel %vm672, %v489, 0
  %v677 = vsel %vm672, %v491, 0
  %679 = vmatpush.msra.mxu0 %v654
  %680 = vmatpush.msra.mxu0 %v652
  %681 = vmatpush.msra.mxu0 %v650
  %682 = vmatpush.msra.mxu0 %v648
  %683 = vmatpush.msra.mxu0 %v646
  %684 = vmatpush.msra.mxu0 %v644
  %685 = vmatpush.msra.mxu0 %v642
  %686 = vmatpush.msra.mxu0 %v640
  %687 = vmatpush.msra.mxu0 %v638
  %688 = vmatpush.msra.mxu0 %v636
  %689 = vmatpush.msra.mxu0 %v634
  %690 = vmatpush.msra.mxu0 %v632
  %691 = vmatpush.msra.mxu0 %v630
  %692 = vmatpush.msra.mxu0 %v628
  %693 = vmatpush.msra.mxu0 %v626
  %694 = vmatpush.msra.mxu0 %v624
  %695 = vmatmul.f32.gmra.mxu0 %v488
  %v696 = vpop.f32.mrf.mxu0
  %v697 = vadd.f32 %v665, %v696
  %698 = vmatmul.f32.gmra.mxu0 %v490
  %v699 = vpop.f32.mrf.mxu0
  %v700 = vadd.f32 %v670, %v699
  %701 = vdwg.mxu0
  %702 = vmatpush.msra.mxu0 0.0
  %703 = vmatpush.msra.mxu0 0.0
  %704 = vmatpush.msra.mxu0 0.0
  %705 = vmatpush.msra.mxu0 0.0
  %706 = vmatpush.msra.mxu0 0.0
  %707 = vmatpush.msra.mxu0 0.0
  %708 = vmatpush.msra.mxu0 0.0
  %709 = vmatpush.msra.mxu0 0.0
  %710 = vmatpush.msra.mxu0 0.0
  %711 = vmatpush.msra.mxu0 0.0
  %712 = vmatpush.msra.mxu0 0.0
  %713 = vmatpush.msra.mxu0 0.0
  %714 = vmatpush.msra.mxu0 0.0
  %715 = vmatpush.msra.mxu0 0.0
  %716 = vmatpush.msra.mxu0 %v658
  %717 = vmatpush.msra.mxu0 %v656
  %718 = vmatmul.f32.gmra.mxu0 %v674
  %v719 = vpop.f32.mrf.mxu0
  %v720 = vadd.f32 %v697, %v719
  %721 = vmatmul.f32.gmra.mxu0 %v677
  %v722 = vpop.f32.mrf.mxu0
  %v723 = vadd.f32 %v700, %v722
  %724 = vdwg.mxu0
  %725 = vmatpush.msra.mxu0 %v655
  %726 = vmatpush.msra.mxu0 %v653
  %727 = vmatpush.msra.mxu0 %v651
  %728 = vmatpush.msra.mxu0 %v649
  %729 = vmatpush.msra.mxu0 %v647
  %730 = vmatpush.msra.mxu0 %v645
  %731 = vmatpush.msra.mxu0 %v643
  %732 = vmatpush.msra.mxu0 %v641
  %733 = vmatpush.msra.mxu0 %v639
  %734 = vmatpush.msra.mxu0 %v637
  %735 = vmatpush.msra.mxu0 %v635
  %736 = vmatpush.msra.mxu0 %v633
  %737 = vmatpush.msra.mxu0 %v631
  %738 = vmatpush.msra.mxu0 %v629
  %739 = vmatpush.msra.mxu0 %v627
  %740 = vmatpush.msra.mxu0 %v625
  %741 = vmatmul.f32.gmra.mxu0 %v488
  %v742 = vpop.f32.mrf.mxu0
  %v743 = vadd.f32 %v665, %v742
  %744 = vmatmul.f32.gmra.mxu0 %v490
  %v745 = vpop.f32.mrf.mxu0
  %v746 = vadd.f32 %v670, %v745
  %747 = vdwg.mxu0
  %748 = vmatpush.msra.mxu0 0.0
  %749 = vmatpush.msra.mxu0 0.0
  %750 = vmatpush.msra.mxu0 0.0
  %751 = vmatpush.msra.mxu0 0.0
  %752 = vmatpush.msra.mxu0 0.0
  %753 = vmatpush.msra.mxu0 0.0
  %754 = vmatpush.msra.mxu0 0.0
  %755 = vmatpush.msra.mxu0 0.0
  %756 = vmatpush.msra.mxu0 0.0
  %757 = vmatpush.msra.mxu0 0.0
  %758 = vmatpush.msra.mxu0 0.0
  %759 = vmatpush.msra.mxu0 0.0
  %760 = vmatpush.msra.mxu0 0.0
  %761 = vmatpush.msra.mxu0 0.0
  %762 = vmatpush.msra.mxu0 %v659
  %763 = vmatpush.msra.mxu0 %v657
  %764 = vmatmul.f32.gmra.mxu0 %v674
  %v765 = vpop.f32.mrf.mxu0
  %v766 = vadd.f32 %v743, %v765
  %767 = vmatmul.f32.gmra.mxu0 %v677
  %v768 = vpop.f32.mrf.mxu0
  %v769 = vadd.f32 %v746, %v768
  %770 = vdwg.mxu0
  %v771 = vmul.f32 %v720, %v267
  %v772 = vmul.f32 %v766, %v268
  %v773 = vmul.f32 %v723, %v267
  %v774 = vmul.f32 %v769, %v268
  %v775 = vld [vmem:[%s8] sm:$0xff]
  %v776 = vld [vmem:[%s8 + $0x8] sm:$0xff]
  %v777 = vld [vmem:[%s9] sm:$0xff]
  %v778 = vld [vmem:[%s9 + $0x8] sm:$0xff]
  %v779 = vmax.f32 %v771, 0.0
  %v780 = vmax.f32 %v772, 0.0
  %v781 = vmax.f32 %v773, 0.0
  %v782 = vmax.f32 %v774, 0.0
  %783 = vrot.lane.b32.xlu0 %v779, 10
  %v784 = vpop.permute.xlu0 %783
  %785 = vrot.lane.b32.xlu0 %v781, 10
  %v786 = vpop.permute.xlu0 %785
  %787 = vrot.lane.b32.xlu0 %v780, 10
  %v788 = vpop.permute.xlu0 %787
  %789 = vrot.lane.b32.xlu0 %v782, 10
  %v790 = vpop.permute.xlu0 %789
  %v791 = vsel %vm283, %v784, %v788
  %v792 = vsel %vm283, %v786, %v790
  %v793 = vsel %vm283, %v788, %v784
  %v794 = vsel %vm283, %v790, %v786
  %795 = vst [vmem:[#allocation2] sm:$0xff] %v793
  %796 = vst [vmem:[#allocation2 + $0x8] sm:$0xff] %v791
  %797 = vst [vmem:[#allocation2 + $0x10] sm:$0xff] %v794
  %798 = vst [vmem:[#allocation2 + $0x18] sm:$0xff] %v792
  %799 = vrot.lane.b32.xlu0 %v779, 9
  %v800 = vpop.permute.xlu0 %799
  %801 = vrot.lane.b32.xlu0 %v781, 9
  %v802 = vpop.permute.xlu0 %801
  %803 = vrot.lane.b32.xlu0 %v780, 9
  %v804 = vpop.permute.xlu0 %803
  %805 = vrot.lane.b32.xlu0 %v782, 9
  %v806 = vpop.permute.xlu0 %805
  %v807 = vsel %vm292, %v800, %v804
  %v808 = vsel %vm292, %v802, %v806
  %v809 = vsel %vm292, %v804, %v800
  %v810 = vsel %vm292, %v806, %v802
  %811 = vst [vmem:[#allocation2 + $0x20] sm:$0xff] %v809
  %812 = vst [vmem:[#allocation2 + $0x28] sm:$0xff] %v807
  %813 = vst [vmem:[#allocation2 + $0x30] sm:$0xff] %v810
  %814 = vst [vmem:[#allocation2 + $0x38] sm:$0xff] %v808
  %815 = vrot.lane.b32.xlu0 %v779, 8
  %v816 = vpop.permute.xlu0 %815
  %817 = vrot.lane.b32.xlu0 %v781, 8
  %v818 = vpop.permute.xlu0 %817
  %819 = vrot.lane.b32.xlu0 %v780, 8
  %v820 = vpop.permute.xlu0 %819
  %821 = vrot.lane.b32.xlu0 %v782, 8
  %v822 = vpop.permute.xlu0 %821
  %v823 = vsel %vm309, %v816, %v820
  %v824 = vsel %vm309, %v818, %v822
  %v825 = vsel %vm309, %v820, %v816
  %v826 = vsel %vm309, %v822, %v818
  %827 = vst [vmem:[#allocation2 + $0x40] sm:$0xff] %v825
  %828 = vst [vmem:[#allocation2 + $0x48] sm:$0xff] %v823
  %829 = vst [vmem:[#allocation2 + $0x50] sm:$0xff] %v826
  %830 = vst [vmem:[#allocation2 + $0x58] sm:$0xff] %v824
  %831 = vrot.lane.b32.xlu0 %v779, 1
  %v832 = vpop.permute.xlu0 %831
  %833 = vrot.lane.b32.xlu0 %v781, 1
  %v834 = vpop.permute.xlu0 %833
  %835 = vrot.lane.b32.xlu0 %v780, 1
  %v836 = vpop.permute.xlu0 %835
  %837 = vrot.lane.b32.xlu0 %v782, 1
  %v838 = vpop.permute.xlu0 %837
  %v839 = vsel %vm318, %v832, %v836
  %v840 = vsel %vm318, %v834, %v838
  %v841 = vsel %vm318, %v836, %v832
  %v842 = vsel %vm318, %v838, %v834
  %843 = vst [vmem:[#allocation2 + $0x60] sm:$0xff] %v841
  %844 = vst [vmem:[#allocation2 + $0x68] sm:$0xff] %v839
  %845 = vst [vmem:[#allocation2 + $0x70] sm:$0xff] %v842
  %846 = vst [vmem:[#allocation2 + $0x78] sm:$0xff] %v840
  %847 = vst [vmem:[#allocation2 + $0x80] sm:$0xff] %v779
  %848 = vst [vmem:[#allocation2 + $0x88] sm:$0xff] %v780
  %849 = vst [vmem:[#allocation2 + $0x90] sm:$0xff] %v781
  %850 = vst [vmem:[#allocation2 + $0x98] sm:$0xff] %v782
  %851 = vrot.lane.b32.xlu0 %v779, 127
  %v852 = vpop.permute.xlu0 %851
  %853 = vrot.lane.b32.xlu0 %v781, 127
  %v854 = vpop.permute.xlu0 %853
  %855 = vrot.lane.b32.xlu0 %v780, 127
  %v856 = vpop.permute.xlu0 %855
  %857 = vrot.lane.b32.xlu0 %v782, 127
  %v858 = vpop.permute.xlu0 %857
  %v859 = vsel %vm100, %v852, %v856
  %v860 = vsel %vm100, %v854, %v858
  %v861 = vsel %vm100, %v856, %v852
  %v862 = vsel %vm100, %v858, %v854
  %863 = vst [vmem:[#allocation2 + $0xa0] sm:$0xff] %v859
  %864 = vst [vmem:[#allocation2 + $0xa8] sm:$0xff] %v861
  %865 = vst [vmem:[#allocation2 + $0xb0] sm:$0xff] %v860
  %866 = vst [vmem:[#allocation2 + $0xb8] sm:$0xff] %v862
  %867 = vrot.lane.b32.xlu0 %v779, 120
  %v868 = vpop.permute.xlu0 %867
  %869 = vrot.lane.b32.xlu0 %v781, 120
  %v870 = vpop.permute.xlu0 %869
  %871 = vrot.lane.b32.xlu0 %v780, 120
  %v872 = vpop.permute.xlu0 %871
  %873 = vrot.lane.b32.xlu0 %v782, 120
  %v874 = vpop.permute.xlu0 %873
  %v875 = vsel %vm359, %v868, %v872
  %v876 = vsel %vm359, %v870, %v874
  %v877 = vsel %vm359, %v872, %v868
  %v878 = vsel %vm359, %v874, %v870
  %879 = vst [vmem:[#allocation2 + $0xc0] sm:$0xff] %v875
  %880 = vst [vmem:[#allocation2 + $0xc8] sm:$0xff] %v877
  %881 = vst [vmem:[#allocation2 + $0xd0] sm:$0xff] %v876
  %882 = vst [vmem:[#allocation2 + $0xd8] sm:$0xff] %v878
  %883 = vrot.lane.b32.xlu0 %v779, 119
  %v884 = vpop.permute.xlu0 %883
  %885 = vrot.lane.b32.xlu0 %v781, 119
  %v886 = vpop.permute.xlu0 %885
  %887 = vrot.lane.b32.xlu0 %v780, 119
  %v888 = vpop.permute.xlu0 %887
  %889 = vrot.lane.b32.xlu0 %v782, 119
  %v890 = vpop.permute.xlu0 %889
  %v891 = vsel %vm117, %v884, %v888
  %v892 = vsel %vm117, %v886, %v890
  %v893 = vsel %vm117, %v888, %v884
  %v894 = vsel %vm117, %v890, %v886
  %895 = vst [vmem:[#allocation2 + $0xe0] sm:$0xff] %v891
  %896 = vst [vmem:[#allocation2 + $0xe8] sm:$0xff] %v893
  %897 = vst [vmem:[#allocation2 + $0xf0] sm:$0xff] %v892
  %898 = vst [vmem:[#allocation2 + $0xf8] sm:$0xff] %v894
  %899 = vrot.lane.b32.xlu0 %v779, 118
  %v900 = vpop.permute.xlu0 %899
  %901 = vrot.lane.b32.xlu0 %v781, 118
  %v902 = vpop.permute.xlu0 %901
  %903 = vrot.lane.b32.xlu0 %v780, 118
  %v904 = vpop.permute.xlu0 %903
  %905 = vrot.lane.b32.xlu0 %v782, 118
  %v906 = vpop.permute.xlu0 %905
  %v907 = vsel %vm134, %v900, %v904
  %v908 = vsel %vm134, %v902, %v906
  %v909 = vsel %vm134, %v904, %v900
  %v910 = vsel %vm134, %v906, %v902
  %911 = vst [vmem:[#allocation2 + $0x100] sm:$0xff] %v907
  %912 = vst [vmem:[#allocation2 + $0x108] sm:$0xff] %v909
  %913 = vst [vmem:[#allocation2 + $0x110] sm:$0xff] %v908
  %914 = vst [vmem:[#allocation2 + $0x118] sm:$0xff] %v910
  %v915 = vld [vmem:[#allocation2] sm:$0xff]
  %v916 = vld [vmem:[#allocation2 + $0x8] sm:$0xff]
  %v917 = vld [vmem:[#allocation2 + $0x10] sm:$0xff]
  %v918 = vld [vmem:[#allocation2 + $0x18] sm:$0xff]
  %v919 = vld [vmem:[#allocation2 + $0x20] sm:$0xff]
  %v920 = vld [vmem:[#allocation2 + $0x28] sm:$0xff]
  %v921 = vld [vmem:[#allocation2 + $0x30] sm:$0xff]
  %v922 = vld [vmem:[#allocation2 + $0x38] sm:$0xff]
  %v923 = vld [vmem:[#allocation2 + $0x40] sm:$0xff]
  %v924 = vld [vmem:[#allocation2 + $0x48] sm:$0xff]
  %v925 = vld [vmem:[#allocation2 + $0x50] sm:$0xff]
  %v926 = vld [vmem:[#allocation2 + $0x58] sm:$0xff]
  %v927 = vld [vmem:[#allocation2 + $0x60] sm:$0xff]
  %v928 = vld [vmem:[#allocation2 + $0x68] sm:$0xff]
  %v929 = vld [vmem:[#allocation2 + $0x70] sm:$0xff]
  %v930 = vld [vmem:[#allocation2 + $0x78] sm:$0xff]
  %v931 = vld [vmem:[#allocation2 + $0x80] sm:$0xff]
  %v932 = vld [vmem:[#allocation2 + $0x88] sm:$0xff]
  %v933 = vld [vmem:[#allocation2 + $0x90] sm:$0xff]
  %v934 = vld [vmem:[#allocation2 + $0x98] sm:$0xff]
  %v935 = vld [vmem:[#allocation2 + $0xa0] sm:$0xff]
  %v936 = vld [vmem:[#allocation2 + $0xa8] sm:$0xff]
  %v937 = vld [vmem:[#allocation2 + $0xb0] sm:$0xff]
  %v938 = vld [vmem:[#allocation2 + $0xb8] sm:$0xff]
  %v939 = vld [vmem:[#allocation2 + $0xc0] sm:$0xff]
  %v940 = vld [vmem:[#allocation2 + $0xc8] sm:$0xff]
  %v941 = vld [vmem:[#allocation2 + $0xd0] sm:$0xff]
  %v942 = vld [vmem:[#allocation2 + $0xd8] sm:$0xff]
  %v943 = vld [vmem:[#allocation2 + $0xe0] sm:$0xff]
  %v944 = vld [vmem:[#allocation2 + $0xe8] sm:$0xff]
  %v945 = vld [vmem:[#allocation2 + $0xf0] sm:$0xff]
  %v946 = vld [vmem:[#allocation2 + $0xf8] sm:$0xff]
  %v947 = vld [vmem:[#allocation2 + $0x100] sm:$0xff]
  %v948 = vld [vmem:[#allocation2 + $0x108] sm:$0xff]
  %v949 = vld [vmem:[#allocation2 + $0x110] sm:$0xff]
  %v950 = vld [vmem:[#allocation2 + $0x118] sm:$0xff]
  %v952 = vsel %vm672, %v776, 0
  %954 = vmatpush.msra.mxu0 %v945
  %955 = vmatpush.msra.mxu0 %v943
  %956 = vmatpush.msra.mxu0 %v941
  %957 = vmatpush.msra.mxu0 %v939
  %958 = vmatpush.msra.mxu0 %v937
  %959 = vmatpush.msra.mxu0 %v935
  %960 = vmatpush.msra.mxu0 %v933
  %961 = vmatpush.msra.mxu0 %v931
  %962 = vmatpush.msra.mxu0 %v929
  %963 = vmatpush.msra.mxu0 %v927
  %964 = vmatpush.msra.mxu0 %v925
  %965 = vmatpush.msra.mxu0 %v923
  %966 = vmatpush.msra.mxu0 %v921
  %967 = vmatpush.msra.mxu0 %v919
  %968 = vmatpush.msra.mxu0 %v917
  %969 = vmatpush.msra.mxu0 %v915
  %970 = vmatmul.f32.gmra.mxu0 %v775
  %v971 = vpop.f32.mrf.mxu0
  %v972 = vadd.f32 0.0, %v971
  %973 = vdwg.mxu0
  %974 = vmatpush.msra.mxu0 0.0
  %975 = vmatpush.msra.mxu0 0.0
  %976 = vmatpush.msra.mxu0 0.0
  %977 = vmatpush.msra.mxu0 0.0
  %978 = vmatpush.msra.mxu0 0.0
  %979 = vmatpush.msra.mxu0 0.0
  %980 = vmatpush.msra.mxu0 0.0
  %981 = vmatpush.msra.mxu0 0.0
  %982 = vmatpush.msra.mxu0 0.0
  %983 = vmatpush.msra.mxu0 0.0
  %984 = vmatpush.msra.mxu0 0.0
  %985 = vmatpush.msra.mxu0 0.0
  %986 = vmatpush.msra.mxu0 0.0
  %987 = vmatpush.msra.mxu0 0.0
  %988 = vmatpush.msra.mxu0 %v949
  %989 = vmatpush.msra.mxu0 %v947
  %990 = vmatmul.f32.gmra.mxu0 %v952
  %v991 = vpop.f32.mrf.mxu0
  %v992 = vadd.f32 %v972, %v991
  %993 = vdwg.mxu0
  %994 = vmatpush.msra.mxu0 %v946
  %995 = vmatpush.msra.mxu0 %v944
  %996 = vmatpush.msra.mxu0 %v942
  %997 = vmatpush.msra.mxu0 %v940
  %998 = vmatpush.msra.mxu0 %v938
  %999 = vmatpush.msra.mxu0 %v936
  %1000 = vmatpush.msra.mxu0 %v934
  %1001 = vmatpush.msra.mxu0 %v932
  %1002 = vmatpush.msra.mxu0 %v930
  %1003 = vmatpush.msra.mxu0 %v928
  %1004 = vmatpush.msra.mxu0 %v926
  %1005 = vmatpush.msra.mxu0 %v924
  %1006 = vmatpush.msra.mxu0 %v922
  %1007 = vmatpush.msra.mxu0 %v920
  %1008 = vmatpush.msra.mxu0 %v918
  %1009 = vmatpush.msra.mxu0 %v916
  %1010 = vmatmul.f32.gmra.mxu0 %v775
  %v1011 = vpop.f32.mrf.mxu0
  %v1012 = vadd.f32 0.0, %v1011
  %1013 = vdwg.mxu0
  %1014 = vmatpush.msra.mxu0 0.0
  %1015 = vmatpush.msra.mxu0 0.0
  %1016 = vmatpush.msra.mxu0 0.0
  %1017 = vmatpush.msra.mxu0 0.0
  %1018 = vmatpush.msra.mxu0 0.0
  %1019 = vmatpush.msra.mxu0 0.0
  %1020 = vmatpush.msra.mxu0 0.0
  %1021 = vmatpush.msra.mxu0 0.0
  %1022 = vmatpush.msra.mxu0 0.0
  %1023 = vmatpush.msra.mxu0 0.0
  %1024 = vmatpush.msra.mxu0 0.0
  %1025 = vmatpush.msra.mxu0 0.0
  %1026 = vmatpush.msra.mxu0 0.0
  %1027 = vmatpush.msra.mxu0 0.0
  %1028 = vmatpush.msra.mxu0 %v950
  %1029 = vmatpush.msra.mxu0 %v948
  %1030 = vmatmul.f32.gmra.mxu0 %v952
  %v1031 = vpop.f32.mrf.mxu0
  %v1032 = vadd.f32 %v1012, %v1031
  %1033 = vdwg.mxu0
  %v1034 = vmax.f32 %v992, 0.0
  %v1035 = vmax.f32 %v1032, 0.0
  %vm1036 = vcmask 64512
  %v1038 = vsel %vm1036, %v777, 0
  %v1041 = vsel %vm1036, %v778, 0
  %1043 = vmatpush.msra.mxu0 0.0
  %1044 = vmatpush.msra.mxu0 0.0
  %1045 = vmatpush.msra.mxu0 0.0
  %1046 = vmatpush.msra.mxu0 0.0
  %1047 = vmatpush.msra.mxu0 0.0
  %1048 = vmatpush.msra.mxu0 0.0
  %1049 = vmatpush.msra.mxu0 0.0
  %1050 = vmatpush.msra.mxu0 0.0
  %1051 = vmatpush.msra.mxu0 0.0
  %1052 = vmatpush.msra.mxu0 0.0
  %1053 = vmatpush.msra.mxu0 0.0
  %1054 = vmatpush.msra.mxu0 0.0
  %1055 = vmatpush.msra.mxu0 0.0
  %1056 = vmatpush.msra.mxu0 0.0
  %1057 = vmatpush.msra.mxu0 0.0
  %1058 = vmatpush.msra.mxu0 %v1034
  %1059 = vmatmul.f32.gmra.mxu0 %v1038
  %v1060 = vpop.f32.mrf.mxu0
  %v1061 = vadd.f32 0.0, %v1060
  %1062 = vmatmul.f32.gmra.mxu0 %v1041
  %v1063 = vpop.f32.mrf.mxu0
  %v1064 = vadd.f32 0.0, %v1063
  %1065 = vdwg.mxu0
  %1066 = vmatpush.msra.mxu0 0.0
  %1067 = vmatpush.msra.mxu0 0.0
  %1068 = vmatpush.msra.mxu0 0.0
  %1069 = vmatpush.msra.mxu0 0.0
  %1070 = vmatpush.msra.mxu0 0.0
  %1071 = vmatpush.msra.mxu0 0.0
  %1072 = vmatpush.msra.mxu0 0.0
  %1073 = vmatpush.msra.mxu0 0.0
  %1074 = vmatpush.msra.mxu0 0.0
  %1075 = vmatpush.msra.mxu0 0.0
  %1076 = vmatpush.msra.mxu0 0.0
  %1077 = vmatpush.msra.mxu0 0.0
  %1078 = vmatpush.msra.mxu0 0.0
  %1079 = vmatpush.msra.mxu0 0.0
  %1080 = vmatpush.msra.mxu0 0.0
  %1081 = vmatpush.msra.mxu0 %v1035
  %1082 = vmatmul.f32.gmra.mxu0 %v1038
  %v1083 = vpop.f32.mrf.mxu0
  %v1084 = vadd.f32 0.0, %v1083
  %1085 = vmatmul.f32.gmra.mxu0 %v1041
  %v1086 = vpop.f32.mrf.mxu0
  %v1087 = vadd.f32 0.0, %v1086
  %1088 = vdwg.mxu0
  %v1089 = vadd.f32 %v771, %v1061
  %v1090 = vadd.f32 %v772, %v1084
  %v1091 = vadd.f32 %v773, %v1064
  %v1092 = vadd.f32 %v774, %v1087
  %v1093 = vmul.f32 %v1089, %v267
  %v1094 = vmul.f32 %v1090, %v268
  %v1095 = vmul.f32 %v1091, %v267
  %v1096 = vmul.f32 %v1092, %v268
  %v1097 = vld [vmem:[%s10] sm:$0xff]
  %v1098 = vld [vmem:[%s10 + $0x8] sm:$0xff]
  %v1099 = vld [vmem:[%s11] sm:$0xff]
  %v1100 = vld [vmem:[%s11 + $0x8] sm:$0xff]
  %v1101 = vmax.f32 %v1093, 0.0
  %v1102 = vmax.f32 %v1094, 0.0
  %v1103 = vmax.f32 %v1095, 0.0
  %v1104 = vmax.f32 %v1096, 0.0
  %1105 = vrot.lane.b32.xlu0 %v1101, 10
  %v1106 = vpop.permute.xlu0 %1105
  %1107 = vrot.lane.b32.xlu0 %v1103, 10
  %v1108 = vpop.permute.xlu0 %1107
  %1109 = vrot.lane.b32.xlu0 %v1102, 10
  %v1110 = vpop.permute.xlu0 %1109
  %1111 = vrot.lane.b32.xlu0 %v1104, 10
  %v1112 = vpop.permute.xlu0 %1111
  %v1113 = vsel %vm283, %v1106, %v1110
  %v1114 = vsel %vm283, %v1108, %v1112
  %v1115 = vsel %vm283, %v1110, %v1106
  %v1116 = vsel %vm283, %v1112, %v1108
  %1117 = vst [vmem:[#allocation2] sm:$0xff] %v1115
  %1118 = vst [vmem:[#allocation2 + $0x8] sm:$0xff] %v1113
  %1119 = vst [vmem:[#allocation2 + $0x10] sm:$0xff] %v1116
  %1120 = vst [vmem:[#allocation2 + $0x18] sm:$0xff] %v1114
  %1121 = vrot.lane.b32.xlu0 %v1101, 9
  %v1122 = vpop.permute.xlu0 %1121
  %1123 = vrot.lane.b32.xlu0 %v1103, 9
  %v1124 = vpop.permute.xlu0 %1123
  %1125 = vrot.lane.b32.xlu0 %v1102, 9
  %v1126 = vpop.permute.xlu0 %1125
  %1127 = vrot.lane.b32.xlu0 %v1104, 9
  %v1128 = vpop.permute.xlu0 %1127
  %v1129 = vsel %vm292, %v1122, %v1126
  %v1130 = vsel %vm292, %v1124, %v1128
  %v1131 = vsel %vm292, %v1126, %v1122
  %v1132 = vsel %vm292, %v1128, %v1124
  %1133 = vst [vmem:[#allocation2 + $0x20] sm:$0xff] %v1131
  %1134 = vst [vmem:[#allocation2 + $0x28] sm:$0xff] %v1129
  %1135 = vst [vmem:[#allocation2 + $0x30] sm:$0xff] %v1132
  %1136 = vst [vmem:[#allocation2 + $0x38] sm:$0xff] %v1130
  %1137 = vrot.lane.b32.xlu0 %v1101, 8
  %v1138 = vpop.permute.xlu0 %1137
  %1139 = vrot.lane.b32.xlu0 %v1103, 8
  %v1140 = vpop.permute.xlu0 %1139
  %1141 = vrot.lane.b32.xlu0 %v1102, 8
  %v1142 = vpop.permute.xlu0 %1141
  %1143 = vrot.lane.b32.xlu0 %v1104, 8
  %v1144 = vpop.permute.xlu0 %1143
  %v1145 = vsel %vm309, %v1138, %v1142
  %v1146 = vsel %vm309, %v1140, %v1144
  %v1147 = vsel %vm309, %v1142, %v1138
  %v1148 = vsel %vm309, %v1144, %v1140
  %1149 = vst [vmem:[#allocation2 + $0x40] sm:$0xff] %v1147
  %1150 = vst [vmem:[#allocation2 + $0x48] sm:$0xff] %v1145
  %1151 = vst [vmem:[#allocation2 + $0x50] sm:$0xff] %v1148
  %1152 = vst [vmem:[#allocation2 + $0x58] sm:$0xff] %v1146
  %1153 = vrot.lane.b32.xlu0 %v1101, 1
  %v1154 = vpop.permute.xlu0 %1153
  %1155 = vrot.lane.b32.xlu0 %v1103, 1
  %v1156 = vpop.permute.xlu0 %1155
  %1157 = vrot.lane.b32.xlu0 %v1102, 1
  %v1158 = vpop.permute.xlu0 %1157
  %1159 = vrot.lane.b32.xlu0 %v1104, 1
  %v1160 = vpop.permute.xlu0 %1159
  %v1161 = vsel %vm318, %v1154, %v1158
  %v1162 = vsel %vm318, %v1156, %v1160
  %v1163 = vsel %vm318, %v1158, %v1154
  %v1164 = vsel %vm318, %v1160, %v1156
  %1165 = vst [vmem:[#allocation2 + $0x60] sm:$0xff] %v1163
  %1166 = vst [vmem:[#allocation2 + $0x68] sm:$0xff] %v1161
  %1167 = vst [vmem:[#allocation2 + $0x70] sm:$0xff] %v1164
  %1168 = vst [vmem:[#allocation2 + $0x78] sm:$0xff] %v1162
  %1169 = vst [vmem:[#allocation2 + $0x80] sm:$0xff] %v1101
  %1170 = vst [vmem:[#allocation2 + $0x88] sm:$0xff] %v1102
  %1171 = vst [vmem:[#allocation2 + $0x90] sm:$0xff] %v1103
  %1172 = vst [vmem:[#allocation2 + $0x98] sm:$0xff] %v1104
  %1173 = vrot.lane.b32.xlu0 %v1101, 127
  %v1174 = vpop.permute.xlu0 %1173
  %1175 = vrot.lane.b32.xlu0 %v1103, 127
  %v1176 = vpop.permute.xlu0 %1175
  %1177 = vrot.lane.b32.xlu0 %v1102, 127
  %v1178 = vpop.permute.xlu0 %1177
  %1179 = vrot.lane.b32.xlu0 %v1104, 127
  %v1180 = vpop.permute.xlu0 %1179
  %v1181 = vsel %vm100, %v1174, %v1178
  %v1182 = vsel %vm100, %v1176, %v1180
  %v1183 = vsel %vm100, %v1178, %v1174
  %v1184 = vsel %vm100, %v1180, %v1176
  %1185 = vst [vmem:[#allocation2 + $0xa0] sm:$0xff] %v1181
  %1186 = vst [vmem:[#allocation2 + $0xa8] sm:$0xff] %v1183
  %1187 = vst [vmem:[#allocation2 + $0xb0] sm:$0xff] %v1182
  %1188 = vst [vmem:[#allocation2 + $0xb8] sm:$0xff] %v1184
  %1189 = vrot.lane.b32.xlu0 %v1101, 120
  %v1190 = vpop.permute.xlu0 %1189
  %1191 = vrot.lane.b32.xlu0 %v1103, 120
  %v1192 = vpop.permute.xlu0 %1191
  %1193 = vrot.lane.b32.xlu0 %v1102, 120
  %v1194 = vpop.permute.xlu0 %1193
  %1195 = vrot.lane.b32.xlu0 %v1104, 120
  %v1196 = vpop.permute.xlu0 %1195
  %v1197 = vsel %vm359, %v1190, %v1194
  %v1198 = vsel %vm359, %v1192, %v1196
  %v1199 = vsel %vm359, %v1194, %v1190
  %v1200 = vsel %vm359, %v1196, %v1192
  %1201 = vst [vmem:[#allocation2 + $0xc0] sm:$0xff] %v1197
  %1202 = vst [vmem:[#allocation2 + $0xc8] sm:$0xff] %v1199
  %1203 = vst [vmem:[#allocation2 + $0xd0] sm:$0xff] %v1198
  %1204 = vst [vmem:[#allocation2 + $0xd8] sm:$0xff] %v1200
  %1205 = vrot.lane.b32.xlu0 %v1101, 119
  %v1206 = vpop.permute.xlu0 %1205
  %1207 = vrot.lane.b32.xlu0 %v1103, 119
  %v1208 = vpop.permute.xlu0 %1207
  %1209 = vrot.lane.b32.xlu0 %v1102, 119
  %v1210 = vpop.permute.xlu0 %1209
  %1211 = vrot.lane.b32.xlu0 %v1104, 119
  %v1212 = vpop.permute.xlu0 %1211
  %v1213 = vsel %vm117, %v1206, %v1210
  %v1214 = vsel %vm117, %v1208, %v1212
  %v1215 = vsel %vm117, %v1210, %v1206
  %v1216 = vsel %vm117, %v1212, %v1208
  %1217 = vst [vmem:[#allocation2 + $0xe0] sm:$0xff] %v1213
  %1218 = vst [vmem:[#allocation2 + $0xe8] sm:$0xff] %v1215
  %1219 = vst [vmem:[#allocation2 + $0xf0] sm:$0xff] %v1214
  %1220 = vst [vmem:[#allocation2 + $0xf8] sm:$0xff] %v1216
  %1221 = vrot.lane.b32.xlu0 %v1101, 118
  %v1222 = vpop.permute.xlu0 %1221
  %1223 = vrot.lane.b32.xlu0 %v1103, 118
  %v1224 = vpop.permute.xlu0 %1223
  %1225 = vrot.lane.b32.xlu0 %v1102, 118
  %v1226 = vpop.permute.xlu0 %1225
  %1227 = vrot.lane.b32.xlu0 %v1104, 118
  %v1228 = vpop.permute.xlu0 %1227
  %v1229 = vsel %vm134, %v1222, %v1226
  %v1230 = vsel %vm134, %v1224, %v1228
  %v1231 = vsel %vm134, %v1226, %v1222
  %v1232 = vsel %vm134, %v1228, %v1224
  %1233 = vst [vmem:[#allocation2 + $0x100] sm:$0xff] %v1229
  %1234 = vst [vmem:[#allocation2 + $0x108] sm:$0xff] %v1231
  %1235 = vst [vmem:[#allocation2 + $0x110] sm:$0xff] %v1230
  %1236 = vst [vmem:[#allocation2 + $0x118] sm:$0xff] %v1232
  %v1237 = vld [vmem:[#allocation2] sm:$0xff]
  %v1238 = vld [vmem:[#allocation2 + $0x8] sm:$0xff]
  %v1239 = vld [vmem:[#allocation2 + $0x10] sm:$0xff]
  %v1240 = vld [vmem:[#allocation2 + $0x18] sm:$0xff]
  %v1241 = vld [vmem:[#allocation2 + $0x20] sm:$0xff]
  %v1242 = vld [vmem:[#allocation2 + $0x28] sm:$0xff]
  %v1243 = vld [vmem:[#allocation2 + $0x30] sm:$0xff]
  %v1244 = vld [vmem:[#allocation2 + $0x38] sm:$0xff]
  %v1245 = vld [vmem:[#allocation2 + $0x40] sm:$0xff]
  %v1246 = vld [vmem:[#allocation2 + $0x48] sm:$0xff]
  %v1247 = vld [vmem:[#allocation2 + $0x50] sm:$0xff]
  %v1248 = vld [vmem:[#allocation2 + $0x58] sm:$0xff]
  %v1249 = vld [vmem:[#allocation2 + $0x60] sm:$0xff]
  %v1250 = vld [vmem:[#allocation2 + $0x68] sm:$0xff]
  %v1251 = vld [vmem:[#allocation2 + $0x70] sm:$0xff]
  %v1252 = vld [vmem:[#allocation2 + $0x78] sm:$0xff]
  %v1253 = vld [vmem:[#allocation2 + $0x80] sm:$0xff]
  %v1254 = vld [vmem:[#allocation2 + $0x88] sm:$0xff]
  %v1255 = vld [vmem:[#allocation2 + $0x90] sm:$0xff]
  %v1256 = vld [vmem:[#allocation2 + $0x98] sm:$0xff]
  %v1257 = vld [vmem:[#allocation2 + $0xa0] sm:$0xff]
  %v1258 = vld [vmem:[#allocation2 + $0xa8] sm:$0xff]
  %v1259 = vld [vmem:[#allocation2 + $0xb0] sm:$0xff]
  %v1260 = vld [vmem:[#allocation2 + $0xb8] sm:$0xff]
  %v1261 = vld [vmem:[#allocation2 + $0xc0] sm:$0xff]
  %v1262 = vld [vmem:[#allocation2 + $0xc8] sm:$0xff]
  %v1263 = vld [vmem:[#allocation2 + $0xd0] sm:$0xff]
  %v1264 = vld [vmem:[#allocation2 + $0xd8] sm:$0xff]
  %v1265 = vld [vmem:[#allocation2 + $0xe0] sm:$0xff]
  %v1266 = vld [vmem:[#allocation2 + $0xe8] sm:$0xff]
  %v1267 = vld [vmem:[#allocation2 + $0xf0] sm:$0xff]
  %v1268 = vld [vmem:[#allocation2 + $0xf8] sm:$0xff]
  %v1269 = vld [vmem:[#allocation2 + $0x100] sm:$0xff]
  %v1270 = vld [vmem:[#allocation2 + $0x108] sm:$0xff]
  %v1271 = vld [vmem:[#allocation2 + $0x110] sm:$0xff]
  %v1272 = vld [vmem:[#allocation2 + $0x118] sm:$0xff]
  %v1274 = vsel %vm672, %v1098, 0
  %1276 = vmatpush.msra.mxu0 %v1267
  %1277 = vmatpush.msra.mxu0 %v1265
  %1278 = vmatpush.msra.mxu0 %v1263
  %1279 = vmatpush.msra.mxu0 %v1261
  %1280 = vmatpush.msra.mxu0 %v1259
  %1281 = vmatpush.msra.mxu0 %v1257
  %1282 = vmatpush.msra.mxu0 %v1255
  %1283 = vmatpush.msra.mxu0 %v1253
  %1284 = vmatpush.msra.mxu0 %v1251
  %1285 = vmatpush.msra.mxu0 %v1249
  %1286 = vmatpush.msra.mxu0 %v1247
  %1287 = vmatpush.msra.mxu0 %v1245
  %1288 = vmatpush.msra.mxu0 %v1243
  %1289 = vmatpush.msra.mxu0 %v1241
  %1290 = vmatpush.msra.mxu0 %v1239
  %1291 = vmatpush.msra.mxu0 %v1237
  %1292 = vmatmul.f32.gmra.mxu0 %v1097
  %v1293 = vpop.f32.mrf.mxu0
  %v1294 = vadd.f32 0.0, %v1293
  %1295 = vdwg.mxu0
  %1296 = vmatpush.msra.mxu0 0.0
  %1297 = vmatpush.msra.mxu0 0.0
  %1298 = vmatpush.msra.mxu0 0.0
  %1299 = vmatpush.msra.mxu0 0.0
  %1300 = vmatpush.msra.mxu0 0.0
  %1301 = vmatpush.msra.mxu0 0.0
  %1302 = vmatpush.msra.mxu0 0.0
  %1303 = vmatpush.msra.mxu0 0.0
  %1304 = vmatpush.msra.mxu0 0.0
  %1305 = vmatpush.msra.mxu0 0.0
  %1306 = vmatpush.msra.mxu0 0.0
  %1307 = vmatpush.msra.mxu0 0.0
  %1308 = vmatpush.msra.mxu0 0.0
  %1309 = vmatpush.msra.mxu0 0.0
  %1310 = vmatpush.msra.mxu0 %v1271
  %1311 = vmatpush.msra.mxu0 %v1269
  %1312 = vmatmul.f32.gmra.mxu0 %v1274
  %v1313 = vpop.f32.mrf.mxu0
  %v1314 = vadd.f32 %v1294, %v1313
  %1315 = vdwg.mxu0
  %1316 = vmatpush.msra.mxu0 %v1268
  %1317 = vmatpush.msra.mxu0 %v1266
  %1318 = vmatpush.msra.mxu0 %v1264
  %1319 = vmatpush.msra.mxu0 %v1262
  %1320 = vmatpush.msra.mxu0 %v1260
  %1321 = vmatpush.msra.mxu0 %v1258
  %1322 = vmatpush.msra.mxu0 %v1256
  %1323 = vmatpush.msra.mxu0 %v1254
  %1324 = vmatpush.msra.mxu0 %v1252
  %1325 = vmatpush.msra.mxu0 %v1250
  %1326 = vmatpush.msra.mxu0 %v1248
  %1327 = vmatpush.msra.mxu0 %v1246
  %1328 = vmatpush.msra.mxu0 %v1244
  %1329 = vmatpush.msra.mxu0 %v1242
  %1330 = vmatpush.msra.mxu0 %v1240
  %1331 = vmatpush.msra.mxu0 %v1238
  %1332 = vmatmul.f32.gmra.mxu0 %v1097
  %v1333 = vpop.f32.mrf.mxu0
  %v1334 = vadd.f32 0.0, %v1333
  %1335 = vdwg.mxu0
  %1336 = vmatpush.msra.mxu0 0.0
  %1337 = vmatpush.msra.mxu0 0.0
  %1338 = vmatpush.msra.mxu0 0.0
  %1339 = vmatpush.msra.mxu0 0.0
  %1340 = vmatpush.msra.mxu0 0.0
  %1341 = vmatpush.msra.mxu0 0.0
  %1342 = vmatpush.msra.mxu0 0.0
  %1343 = vmatpush.msra.mxu0 0.0
  %1344 = vmatpush.msra.mxu0 0.0
  %1345 = vmatpush.msra.mxu0 0.0
  %1346 = vmatpush.msra.mxu0 0.0
  %1347 = vmatpush.msra.mxu0 0.0
  %1348 = vmatpush.msra.mxu0 0.0
  %1349 = vmatpush.msra.mxu0 0.0
  %1350 = vmatpush.msra.mxu0 %v1272
  %1351 = vmatpush.msra.mxu0 %v1270
  %1352 = vmatmul.f32.gmra.mxu0 %v1274
  %v1353 = vpop.f32.mrf.mxu0
  %v1354 = vadd.f32 %v1334, %v1353
  %1355 = vdwg.mxu0
  %v1356 = vmax.f32 %v1314, 0.0
  %v1357 = vmax.f32 %v1354, 0.0
  %v1359 = vsel %vm1036, %v1099, 0
  %v1362 = vsel %vm1036, %v1100, 0
  %1364 = vmatpush.msra.mxu0 0.0
  %1365 = vmatpush.msra.mxu0 0.0
  %1366 = vmatpush.msra.mxu0 0.0
  %1367 = vmatpush.msra.mxu0 0.0
  %1368 = vmatpush.msra.mxu0 0.0
  %1369 = vmatpush.msra.mxu0 0.0
  %1370 = vmatpush.msra.mxu0 0.0
  %1371 = vmatpush.msra.mxu0 0.0
  %1372 = vmatpush.msra.mxu0 0.0
  %1373 = vmatpush.msra.mxu0 0.0
  %1374 = vmatpush.msra.mxu0 0.0
  %1375 = vmatpush.msra.mxu0 0.0
  %1376 = vmatpush.msra.mxu0 0.0
  %1377 = vmatpush.msra.mxu0 0.0
  %1378 = vmatpush.msra.mxu0 0.0
  %1379 = vmatpush.msra.mxu0 %v1356
  %1380 = vmatmul.f32.gmra.mxu0 %v1359
  %v1381 = vpop.f32.mrf.mxu0
  %v1382 = vadd.f32 0.0, %v1381
  %1383 = vmatmul.f32.gmra.mxu0 %v1362
  %v1384 = vpop.f32.mrf.mxu0
  %v1385 = vadd.f32 0.0, %v1384
  %1386 = vdwg.mxu0
  %1387 = vmatpush.msra.mxu0 0.0
  %1388 = vmatpush.msra.mxu0 0.0
  %1389 = vmatpush.msra.mxu0 0.0
  %1390 = vmatpush.msra.mxu0 0.0
  %1391 = vmatpush.msra.mxu0 0.0
  %1392 = vmatpush.msra.mxu0 0.0
  %1393 = vmatpush.msra.mxu0 0.0
  %1394 = vmatpush.msra.mxu0 0.0
  %1395 = vmatpush.msra.mxu0 0.0
  %1396 = vmatpush.msra.mxu0 0.0
  %1397 = vmatpush.msra.mxu0 0.0
  %1398 = vmatpush.msra.mxu0 0.0
  %1399 = vmatpush.msra.mxu0 0.0
  %1400 = vmatpush.msra.mxu0 0.0
  %1401 = vmatpush.msra.mxu0 0.0
  %1402 = vmatpush.msra.mxu0 %v1357
  %1403 = vmatmul.f32.gmra.mxu0 %v1359
  %v1404 = vpop.f32.mrf.mxu0
  %v1405 = vadd.f32 0.0, %v1404
  %1406 = vmatmul.f32.gmra.mxu0 %v1362
  %v1407 = vpop.f32.mrf.mxu0
  %v1408 = vadd.f32 0.0, %v1407
  %1409 = vdwg.mxu0
  %v1410 = vadd.f32 %v1093, %v1382
  %v1411 = vadd.f32 %v1094, %v1405
  %v1412 = vadd.f32 %v1095, %v1385
  %v1413 = vadd.f32 %v1096, %v1408
  %v1414 = vmul.f32 %v1410, %v267
  %v1415 = vmul.f32 %v1411, %v268
  %v1416 = vmul.f32 %v1412, %v267
  %v1417 = vmul.f32 %v1413, %v268
  %v1418 = vmax.f32 %v1414, 0.0
  %v1419 = vmax.f32 %v1415, 0.0
  %v1420 = vmax.f32 %v1416, 0.0
  %v1421 = vmax.f32 %v1417, 0.0
  %1422 = vst [vmem:[%s24] sm:$0xff] %v1418
  %1423 = vst [vmem:[%s24 + $0x8] sm:$0xff] %v1419
  %1424 = vst [vmem:[%s24 + $0x10] sm:$0xff] %v1420
  %1425 = vst [vmem:[%s24 + $0x18] sm:$0xff] %v1421
  %v1426 = vld [vmem:[%s12] sm:$0xff]
  %v1427 = vmul.f32 %v1418, %v1418
  %v1428 = vmul.f32 %v1419, %v1419
  %v1429 = vmul.f32 %v1420, %v1420
  %v1430 = vmul.f32 %v1421, %v1421
  %v1431 = vadd.f32 %v1427, %v1429
  %v1432 = vrot.slane %v1431, 4
  %v1433 = vadd.f32 %v1431, %v1432
  %v1434 = vrot.slane %v1433, 2
  %v1435 = vadd.f32 %v1433, %v1434
  %v1436 = vrot.slane %v1435, 1
  %v1437 = vadd.f32 %v1435, %v1436
  %v1438 = vadd.f32 %v1428, %v1430
  %v1439 = vrot.slane %v1438, 4
  %v1440 = vadd.f32 %v1438, %v1439
  %v1441 = vrot.slane %v1440, 2
  %v1442 = vadd.f32 %v1440, %v1441
  %v1443 = vrot.slane %v1442, 1
  %v1444 = vadd.f32 %v1442, %v1443
  %v1445 = vmul.f32 %v1426, %v1426
  %v1446 = vsel %vm672, %v1445, 0.0
  %1447 = vadd.xlane.f32.xlu0 %v1446
  %v1448 = vpop.xlane.xlu0 %1447
  %v1450 = vsel %vm672, %v1426, 0
  %1452 = vmatpush.msra.mxu0 0.0
  %1453 = vmatpush.msra.mxu0 0.0
  %1454 = vmatpush.msra.mxu0 0.0
  %1455 = vmatpush.msra.mxu0 0.0
  %1456 = vmatpush.msra.mxu0 0.0
  %1457 = vmatpush.msra.mxu0 0.0
  %1458 = vmatpush.msra.mxu0 0.0
  %1459 = vmatpush.msra.mxu0 0.0
  %1460 = vmatpush.msra.mxu0 0.0
  %1461 = vmatpush.msra.mxu0 0.0
  %1462 = vmatpush.msra.mxu0 0.0
  %1463 = vmatpush.msra.mxu0 0.0
  %1464 = vmatpush.msra.mxu0 0.0
  %1465 = vmatpush.msra.mxu0 0.0
  %v1466 = vand.u32 %v1420, 4294901760
  %1467 = vmatpush.msra.mxu0 %v1466
  %v1468 = vand.u32 %v1418, 4294901760
  %1469 = vmatpush.msra.mxu0 %v1468
  %v1470 = vand.u32 %v1450, 4294901760
  %v1471 = vsub.f32 %v1450, %v1470
  %v1472 = vand.u32 %v1471, 4294901760
  %v1473 = vsub.f32 %v1471, %v1472
  %v1474 = vand.u32 %v1473, 4294901760
  %1475 = vmatmul.f32.gmra.mxu0 %v1474
  %v1476 = vpop.f32.mrf.mxu0
  %v1477 = vadd.f32 0.0, %v1476
  %1478 = vdwg.mxu0
  %1479 = vmatpush.msra.mxu0 0.0
  %1480 = vmatpush.msra.mxu0 0.0
  %1481 = vmatpush.msra.mxu0 0.0
  %1482 = vmatpush.msra.mxu0 0.0
  %1483 = vmatpush.msra.mxu0 0.0
  %1484 = vmatpush.msra.mxu0 0.0
  %1485 = vmatpush.msra.mxu0 0.0
  %1486 = vmatpush.msra.mxu0 0.0
  %1487 = vmatpush.msra.mxu0 0.0
  %1488 = vmatpush.msra.mxu0 0.0
  %1489 = vmatpush.msra.mxu0 0.0
  %1490 = vmatpush.msra.mxu0 0.0
  %1491 = vmatpush.msra.mxu0 0.0
  %1492 = vmatpush.msra.mxu0 0.0
  %v1493 = vand.u32 %v1420, 4294901760
  %v1494 = vsub.f32 %v1420, %v1493
  %v1495 = vand.u32 %v1494, 4294901760
  %v1496 = vsub.f32 %v1494, %v1495
  %v1497 = vand.u32 %v1496, 4294901760
  %1498 = vmatpush.msra.mxu0 %v1497
  %v1499 = vand.u32 %v1418, 4294901760
  %v1500 = vsub.f32 %v1418, %v1499
  %v1501 = vand.u32 %v1500, 4294901760
  %v1502 = vsub.f32 %v1500, %v1501
  %v1503 = vand.u32 %v1502, 4294901760
  %1504 = vmatpush.msra.mxu0 %v1503
  %v1505 = vand.u32 %v1450, 4294901760
  %1506 = vmatmul.f32.gmra.mxu0 %v1505
  %v1507 = vpop.f32.mrf.mxu0
  %v1508 = vadd.f32 %v1477, %v1507
  %1509 = vdwg.mxu0
  %1510 = vmatpush.msra.mxu0 0.0
  %1511 = vmatpush.msra.mxu0 0.0
  %1512 = vmatpush.msra.mxu0 0.0
  %1513 = vmatpush.msra.mxu0 0.0
  %1514 = vmatpush.msra.mxu0 0.0
  %1515 = vmatpush.msra.mxu0 0.0
  %1516 = vmatpush.msra.mxu0 0.0
  %1517 = vmatpush.msra.mxu0 0.0
  %1518 = vmatpush.msra.mxu0 0.0
  %1519 = vmatpush.msra.mxu0 0.0
  %1520 = vmatpush.msra.mxu0 0.0
  %1521 = vmatpush.msra.mxu0 0.0
  %1522 = vmatpush.msra.mxu0 0.0
  %1523 = vmatpush.msra.mxu0 0.0
  %v1524 = vand.u32 %v1420, 4294901760
  %v1525 = vsub.f32 %v1420, %v1524
  %1526 = vmatpush.msra.mxu0 %v1525
  %v1527 = vand.u32 %v1418, 4294901760
  %v1528 = vsub.f32 %v1418, %v1527
  %1529 = vmatpush.msra.mxu0 %v1528
  %v1530 = vand.u32 %v1450, 4294901760
  %v1531 = vsub.f32 %v1450, %v1530
  %1532 = vmatmul.f32.gmra.mxu0 %v1531
  %v1533 = vpop.f32.mrf.mxu0
  %v1534 = vadd.f32 %v1508, %v1533
  %1535 = vdwg.mxu0
  %1536 = vmatpush.msra.mxu0 0.0
  %1537 = vmatpush.msra.mxu0 0.0
  %1538 = vmatpush.msra.mxu0 0.0
  %1539 = vmatpush.msra.mxu0 0.0
  %1540 = vmatpush.msra.mxu0 0.0
  %1541 = vmatpush.msra.mxu0 0.0
  %1542 = vmatpush.msra.mxu0 0.0
  %1543 = vmatpush.msra.mxu0 0.0
  %1544 = vmatpush.msra.mxu0 0.0
  %1545 = vmatpush.msra.mxu0 0.0
  %1546 = vmatpush.msra.mxu0 0.0
  %1547 = vmatpush.msra.mxu0 0.0
  %1548 = vmatpush.msra.mxu0 0.0
  %1549 = vmatpush.msra.mxu0 0.0
  %v1550 = vand.u32 %v1420, 4294901760
  %1551 = vmatpush.msra.mxu0 %v1550
  %v1552 = vand.u32 %v1418, 4294901760
  %1553 = vmatpush.msra.mxu0 %v1552
  %v1554 = vand.u32 %v1450, 4294901760
  %v1555 = vsub.f32 %v1450, %v1554
  %v1556 = vand.u32 %v1555, 4294901760
  %1557 = vmatmul.f32.gmra.mxu0 %v1556
  %v1558 = vpop.f32.mrf.mxu0
  %v1559 = vadd.f32 %v1534, %v1558
  %1560 = vdwg.mxu0
  %1561 = vmatpush.msra.mxu0 0.0
  %1562 = vmatpush.msra.mxu0 0.0
  %1563 = vmatpush.msra.mxu0 0.0
  %1564 = vmatpush.msra.mxu0 0.0
  %1565 = vmatpush.msra.mxu0 0.0
  %1566 = vmatpush.msra.mxu0 0.0
  %1567 = vmatpush.msra.mxu0 0.0
  %1568 = vmatpush.msra.mxu0 0.0
  %1569 = vmatpush.msra.mxu0 0.0
  %1570 = vmatpush.msra.mxu0 0.0
  %1571 = vmatpush.msra.mxu0 0.0
  %1572 = vmatpush.msra.mxu0 0.0
  %1573 = vmatpush.msra.mxu0 0.0
  %1574 = vmatpush.msra.mxu0 0.0
  %v1575 = vand.u32 %v1420, 4294901760
  %v1576 = vsub.f32 %v1420, %v1575
  %v1577 = vand.u32 %v1576, 4294901760
  %1578 = vmatpush.msra.mxu0 %v1577
  %v1579 = vand.u32 %v1418, 4294901760
  %v1580 = vsub.f32 %v1418, %v1579
  %v1581 = vand.u32 %v1580, 4294901760
  %1582 = vmatpush.msra.mxu0 %v1581
  %v1583 = vand.u32 %v1450, 4294901760
  %1584 = vmatmul.f32.gmra.mxu0 %v1583
  %v1585 = vpop.f32.mrf.mxu0
  %v1586 = vadd.f32 %v1559, %v1585
  %1587 = vdwg.mxu0
  %1588 = vmatpush.msra.mxu0 0.0
  %1589 = vmatpush.msra.mxu0 0.0
  %1590 = vmatpush.msra.mxu0 0.0
  %1591 = vmatpush.msra.mxu0 0.0
  %1592 = vmatpush.msra.mxu0 0.0
  %1593 = vmatpush.msra.mxu0 0.0
  %1594 = vmatpush.msra.mxu0 0.0
  %1595 = vmatpush.msra.mxu0 0.0
  %1596 = vmatpush.msra.mxu0 0.0
  %1597 = vmatpush.msra.mxu0 0.0
  %1598 = vmatpush.msra.mxu0 0.0
  %1599 = vmatpush.msra.mxu0 0.0
  %1600 = vmatpush.msra.mxu0 0.0
  %1601 = vmatpush.msra.mxu0 0.0
  %v1602 = vand.u32 %v1420, 4294901760
  %1603 = vmatpush.msra.mxu0 %v1602
  %v1604 = vand.u32 %v1418, 4294901760
  %1605 = vmatpush.msra.mxu0 %v1604
  %v1606 = vand.u32 %v1450, 4294901760
  %1607 = vmatmul.f32.gmra.mxu0 %v1606
  %v1608 = vpop.f32.mrf.mxu0
  %v1609 = vadd.f32 %v1586, %v1608
  %1610 = vdwg.mxu0
  %1611 = vmatpush.msra.mxu0 0.0
  %1612 = vmatpush.msra.mxu0 0.0
  %1613 = vmatpush.msra.mxu0 0.0
  %1614 = vmatpush.msra.mxu0 0.0
  %1615 = vmatpush.msra.mxu0 0.0
  %1616 = vmatpush.msra.mxu0 0.0
  %1617 = vmatpush.msra.mxu0 0.0
  %1618 = vmatpush.msra.mxu0 0.0
  %1619 = vmatpush.msra.mxu0 0.0
  %1620 = vmatpush.msra.mxu0 0.0
  %1621 = vmatpush.msra.mxu0 0.0
  %1622 = vmatpush.msra.mxu0 0.0
  %1623 = vmatpush.msra.mxu0 0.0
  %1624 = vmatpush.msra.mxu0 0.0
  %v1625 = vand.u32 %v1421, 4294901760
  %1626 = vmatpush.msra.mxu0 %v1625
  %v1627 = vand.u32 %v1419, 4294901760
  %1628 = vmatpush.msra.mxu0 %v1627
  %v1629 = vand.u32 %v1450, 4294901760
  %v1630 = vsub.f32 %v1450, %v1629
  %v1631 = vand.u32 %v1630, 4294901760
  %v1632 = vsub.f32 %v1630, %v1631
  %v1633 = vand.u32 %v1632, 4294901760
  %1634 = vmatmul.f32.gmra.mxu0 %v1633
  %v1635 = vpop.f32.mrf.mxu0
  %v1636 = vadd.f32 0.0, %v1635
  %1637 = vdwg.mxu0
  %1638 = vmatpush.msra.mxu0 0.0
  %1639 = vmatpush.msra.mxu0 0.0
  %1640 = vmatpush.msra.mxu0 0.0
  %1641 = vmatpush.msra.mxu0 0.0
  %1642 = vmatpush.msra.mxu0 0.0
  %1643 = vmatpush.msra.mxu0 0.0
  %1644 = vmatpush.msra.mxu0 0.0
  %1645 = vmatpush.msra.mxu0 0.0
  %1646 = vmatpush.msra.mxu0 0.0
  %1647 = vmatpush.msra.mxu0 0.0
  %1648 = vmatpush.msra.mxu0 0.0
  %1649 = vmatpush.msra.mxu0 0.0
  %1650 = vmatpush.msra.mxu0 0.0
  %1651 = vmatpush.msra.mxu0 0.0
  %v1652 = vand.u32 %v1421, 4294901760
  %v1653 = vsub.f32 %v1421, %v1652
  %v1654 = vand.u32 %v1653, 4294901760
  %v1655 = vsub.f32 %v1653, %v1654
  %v1656 = vand.u32 %v1655, 4294901760
  %1657 = vmatpush.msra.mxu0 %v1656
  %v1658 = vand.u32 %v1419, 4294901760
  %v1659 = vsub.f32 %v1419, %v1658
  %v1660 = vand.u32 %v1659, 4294901760
  %v1661 = vsub.f32 %v1659, %v1660
  %v1662 = vand.u32 %v1661, 4294901760
  %1663 = vmatpush.msra.mxu0 %v1662
  %v1664 = vand.u32 %v1450, 4294901760
  %1665 = vmatmul.f32.gmra.mxu0 %v1664
  %v1666 = vpop.f32.mrf.mxu0
  %v1667 = vadd.f32 %v1636, %v1666
  %1668 = vdwg.mxu0
  %1669 = vmatpush.msra.mxu0 0.0
  %1670 = vmatpush.msra.mxu0 0.0
  %1671 = vmatpush.msra.mxu0 0.0
  %1672 = vmatpush.msra.mxu0 0.0
  %1673 = vmatpush.msra.mxu0 0.0
  %1674 = vmatpush.msra.mxu0 0.0
  %1675 = vmatpush.msra.mxu0 0.0
  %1676 = vmatpush.msra.mxu0 0.0
  %1677 = vmatpush.msra.mxu0 0.0
  %1678 = vmatpush.msra.mxu0 0.0
  %1679 = vmatpush.msra.mxu0 0.0
  %1680 = vmatpush.msra.mxu0 0.0
  %1681 = vmatpush.msra.mxu0 0.0
  %1682 = vmatpush.msra.mxu0 0.0
  %v1683 = vand.u32 %v1421, 4294901760
  %v1684 = vsub.f32 %v1421, %v1683
  %1685 = vmatpush.msra.mxu0 %v1684
  %v1686 = vand.u32 %v1419, 4294901760
  %v1687 = vsub.f32 %v1419, %v1686
  %1688 = vmatpush.msra.mxu0 %v1687
  %v1689 = vand.u32 %v1450, 4294901760
  %v1690 = vsub.f32 %v1450, %v1689
  %1691 = vmatmul.f32.gmra.mxu0 %v1690
  %v1692 = vpop.f32.mrf.mxu0
  %v1693 = vadd.f32 %v1667, %v1692
  %1694 = vdwg.mxu0
  %1695 = vmatpush.msra.mxu0 0.0
  %1696 = vmatpush.msra.mxu0 0.0
  %1697 = vmatpush.msra.mxu0 0.0
  %1698 = vmatpush.msra.mxu0 0.0
  %1699 = vmatpush.msra.mxu0 0.0
  %1700 = vmatpush.msra.mxu0 0.0
  %1701 = vmatpush.msra.mxu0 0.0
  %1702 = vmatpush.msra.mxu0 0.0
  %1703 = vmatpush.msra.mxu0 0.0
  %1704 = vmatpush.msra.mxu0 0.0
  %1705 = vmatpush.msra.mxu0 0.0
  %1706 = vmatpush.msra.mxu0 0.0
  %1707 = vmatpush.msra.mxu0 0.0
  %1708 = vmatpush.msra.mxu0 0.0
  %v1709 = vand.u32 %v1421, 4294901760
  %1710 = vmatpush.msra.mxu0 %v1709
  %v1711 = vand.u32 %v1419, 4294901760
  %1712 = vmatpush.msra.mxu0 %v1711
  %v1713 = vand.u32 %v1450, 4294901760
  %v1714 = vsub.f32 %v1450, %v1713
  %v1715 = vand.u32 %v1714, 4294901760
  %1716 = vmatmul.f32.gmra.mxu0 %v1715
  %v1717 = vpop.f32.mrf.mxu0
  %v1718 = vadd.f32 %v1693, %v1717
  %1719 = vdwg.mxu0
  %1720 = vmatpush.msra.mxu0 0.0
  %1721 = vmatpush.msra.mxu0 0.0
  %1722 = vmatpush.msra.mxu0 0.0
  %1723 = vmatpush.msra.mxu0 0.0
  %1724 = vmatpush.msra.mxu0 0.0
  %1725 = vmatpush.msra.mxu0 0.0
  %1726 = vmatpush.msra.mxu0 0.0
  %1727 = vmatpush.msra.mxu0 0.0
  %1728 = vmatpush.msra.mxu0 0.0
  %1729 = vmatpush.msra.mxu0 0.0
  %1730 = vmatpush.msra.mxu0 0.0
  %1731 = vmatpush.msra.mxu0 0.0
  %1732 = vmatpush.msra.mxu0 0.0
  %1733 = vmatpush.msra.mxu0 0.0
  %v1734 = vand.u32 %v1421, 4294901760
  %v1735 = vsub.f32 %v1421, %v1734
  %v1736 = vand.u32 %v1735, 4294901760
  %1737 = vmatpush.msra.mxu0 %v1736
  %v1738 = vand.u32 %v1419, 4294901760
  %v1739 = vsub.f32 %v1419, %v1738
  %v1740 = vand.u32 %v1739, 4294901760
  %1741 = vmatpush.msra.mxu0 %v1740
  %v1742 = vand.u32 %v1450, 4294901760
  %1743 = vmatmul.f32.gmra.mxu0 %v1742
  %v1744 = vpop.f32.mrf.mxu0
  %v1745 = vadd.f32 %v1718, %v1744
  %1746 = vdwg.mxu0
  %1747 = vmatpush.msra.mxu0 0.0
  %1748 = vmatpush.msra.mxu0 0.0
  %1749 = vmatpush.msra.mxu0 0.0
  %1750 = vmatpush.msra.mxu0 0.0
  %1751 = vmatpush.msra.mxu0 0.0
  %1752 = vmatpush.msra.mxu0 0.0
  %1753 = vmatpush.msra.mxu0 0.0
  %1754 = vmatpush.msra.mxu0 0.0
  %1755 = vmatpush.msra.mxu0 0.0
  %1756 = vmatpush.msra.mxu0 0.0
  %1757 = vmatpush.msra.mxu0 0.0
  %1758 = vmatpush.msra.mxu0 0.0
  %1759 = vmatpush.msra.mxu0 0.0
  %1760 = vmatpush.msra.mxu0 0.0
  %v1761 = vand.u32 %v1421, 4294901760
  %1762 = vmatpush.msra.mxu0 %v1761
  %v1763 = vand.u32 %v1419, 4294901760
  %1764 = vmatpush.msra.mxu0 %v1763
  %v1765 = vand.u32 %v1450, 4294901760
  %1766 = vmatmul.f32.gmra.mxu0 %v1765
  %v1767 = vpop.f32.mrf.mxu0
  %v1768 = vadd.f32 %v1745, %v1767
  %1769 = vdwg.mxu0
  %v1770 = vmul.f32 %v1609, 2.0
  %v1771 = vmul.f32 %v1768, 2.0
  %v1772 = vsub.f32 %v1437, %v1770
  %v1773 = vsub.f32 %v1444, %v1771
  %v1774 = vadd.f32 %v1772, %v1448
  %v1775 = vadd.f32 %v1773, %v1448
  %v1776 = vlaneseq
  %v1777 = vshrl.u32 %v1776, 7
  %v1778 = vrot.slane %v1774, 4
  %v1779 = vmin.f32 %v1774, %v1778
  %v1780 = vrot.slane %v1779, 2
  %v1781 = vmin.f32 %v1779, %v1780
  %v1782 = vrot.slane %v1781, 1
  %v1783 = vmin.f32 %v1781, %v1782
  %v1784 = vrot.slane %v1775, 4
  %v1785 = vmin.f32 %v1775, %v1784
  %v1786 = vrot.slane %v1785, 2
  %v1787 = vmin.f32 %v1785, %v1786
  %v1788 = vrot.slane %v1787, 1
  %v1789 = vmin.f32 %v1787, %v1788
  %vm1790 = vcmp.eq.f32.partialorder %v1774, %v1783
  %vm1791 = vcmp.eq.f32.partialorder %v1775, %v1789
  %v1792 = vsel %vm1790, %v1777, 8
  %v1793 = vsel %vm1791, %v1777, 8
  %v1794 = vrot.slane %v1792, 4
  %vm1795 = vcmp.lt.s32.totalorder %v1792, %v1794
  %v1796 = vsel %vm1795, %v1792, %v1794
  %v1797 = vrot.slane %v1796, 2
  %vm1798 = vcmp.lt.s32.totalorder %v1796, %v1797
  %v1799 = vsel %vm1798, %v1796, %v1797
  %v1800 = vrot.slane %v1799, 1
  %vm1801 = vcmp.lt.s32.totalorder %v1799, %v1800
  %v1802 = vsel %vm1801, %v1799, %v1800
  %v1803 = vrot.slane %v1793, 4
  %vm1804 = vcmp.lt.s32.totalorder %v1793, %v1803
  %v1805 = vsel %vm1804, %v1793, %v1803
  %v1806 = vrot.slane %v1805, 2
  %vm1807 = vcmp.lt.s32.totalorder %v1805, %v1806
  %v1808 = vsel %vm1807, %v1805, %v1806
  %v1809 = vrot.slane %v1808, 1
  %vm1810 = vcmp.lt.s32.totalorder %v1808, %v1809
  %v1811 = vsel %vm1810, %v1808, %v1809
  %v1812 = vrot.slane %v1811, 7
  %vm1813 = vcmask 1040384
  %v1814 = vsel %vm1813, %v1802, %v1812
  %v1815 = vlaneseq
  %vm1816 = vcmp.ge.s32.totalorder %v1815, 0
  %vm1817 = vcmp.lt.s32.totalorder %v1815, 256
  %vm1818 = vmand %vm1816, %vm1817
  %1819 = vst.msk [vmem:[%s27] sm:$0x3] %vm1818, %v1814
  %vm1820 = vcmp.eq.s32.totalorder %v1777, %v1802
  %vm1821 = vcmp.eq.s32.totalorder %v1777, %v1811
  %v1822 = vsel %vm1820, 1, 0
  %v1823 = vsel %vm1821, 1, 0
  %v1824 = vcvt.s32.f32 %v1822
  %v1825 = vcvt.s32.f32 %v1823
  %v1826 = vld [vmem:[%s13] sm:$0xff]
  %v1827 = vld [vmem:[%s13 + $0x8] sm:$0xff]
  %v1829 = vsel %vm1036, %v1826, 0
  %v1832 = vsel %vm1036, %v1827, 0
  %1834 = vmatpush.msra.mxu0 0.0
  %1835 = vmatpush.msra.mxu0 0.0
  %1836 = vmatpush.msra.mxu0 0.0
  %1837 = vmatpush.msra.mxu0 0.0
  %1838 = vmatpush.msra.mxu0 0.0
  %1839 = vmatpush.msra.mxu0 0.0
  %1840 = vmatpush.msra.mxu0 0.0
  %1841 = vmatpush.msra.mxu0 0.0
  %1842 = vmatpush.msra.mxu0 0.0
  %1843 = vmatpush.msra.mxu0 0.0
  %1844 = vmatpush.msra.mxu0 0.0
  %1845 = vmatpush.msra.mxu0 0.0
  %1846 = vmatpush.msra.mxu0 0.0
  %1847 = vmatpush.msra.mxu0 0.0
  %1848 = vmatpush.msra.mxu0 0.0
  %v1849 = vand.u32 %v1824, 4294901760
  %1850 = vmatpush.msra.mxu0 %v1849
  %v1851 = vand.u32 %v1829, 4294901760
  %v1852 = vsub.f32 %v1829, %v1851
  %v1853 = vand.u32 %v1852, 4294901760
  %v1854 = vsub.f32 %v1852, %v1853
  %v1855 = vand.u32 %v1854, 4294901760
  %1856 = vmatmul.f32.gmra.mxu0 %v1855
  %v1857 = vpop.f32.mrf.mxu0
  %v1858 = vadd.f32 0.0, %v1857
  %v1859 = vand.u32 %v1832, 4294901760
  %v1860 = vsub.f32 %v1832, %v1859
  %v1861 = vand.u32 %v1860, 4294901760
  %v1862 = vsub.f32 %v1860, %v1861
  %v1863 = vand.u32 %v1862, 4294901760
  %1864 = vmatmul.f32.gmra.mxu0 %v1863
  %v1865 = vpop.f32.mrf.mxu0
  %v1866 = vadd.f32 0.0, %v1865
  %1867 = vdwg.mxu0
  %1868 = vmatpush.msra.mxu0 0.0
  %1869 = vmatpush.msra.mxu0 0.0
  %1870 = vmatpush.msra.mxu0 0.0
  %1871 = vmatpush.msra.mxu0 0.0
  %1872 = vmatpush.msra.mxu0 0.0
  %1873 = vmatpush.msra.mxu0 0.0
  %1874 = vmatpush.msra.mxu0 0.0
  %1875 = vmatpush.msra.mxu0 0.0
  %1876 = vmatpush.msra.mxu0 0.0
  %1877 = vmatpush.msra.mxu0 0.0
  %1878 = vmatpush.msra.mxu0 0.0
  %1879 = vmatpush.msra.mxu0 0.0
  %1880 = vmatpush.msra.mxu0 0.0
  %1881 = vmatpush.msra.mxu0 0.0
  %1882 = vmatpush.msra.mxu0 0.0
  %v1883 = vand.u32 %v1824, 4294901760
  %v1884 = vsub.f32 %v1824, %v1883
  %v1885 = vand.u32 %v1884, 4294901760
  %v1886 = vsub.f32 %v1884, %v1885
  %v1887 = vand.u32 %v1886, 4294901760
  %1888 = vmatpush.msra.mxu0 %v1887
  %v1889 = vand.u32 %v1829, 4294901760
  %1890 = vmatmul.f32.gmra.mxu0 %v1889
  %v1891 = vpop.f32.mrf.mxu0
  %v1892 = vadd.f32 %v1858, %v1891
  %v1893 = vand.u32 %v1832, 4294901760
  %1894 = vmatmul.f32.gmra.mxu0 %v1893
  %v1895 = vpop.f32.mrf.mxu0
  %v1896 = vadd.f32 %v1866, %v1895
  %1897 = vdwg.mxu0
  %1898 = vmatpush.msra.mxu0 0.0
  %1899 = vmatpush.msra.mxu0 0.0
  %1900 = vmatpush.msra.mxu0 0.0
  %1901 = vmatpush.msra.mxu0 0.0
  %1902 = vmatpush.msra.mxu0 0.0
  %1903 = vmatpush.msra.mxu0 0.0
  %1904 = vmatpush.msra.mxu0 0.0
  %1905 = vmatpush.msra.mxu0 0.0
  %1906 = vmatpush.msra.mxu0 0.0
  %1907 = vmatpush.msra.mxu0 0.0
  %1908 = vmatpush.msra.mxu0 0.0
  %1909 = vmatpush.msra.mxu0 0.0
  %1910 = vmatpush.msra.mxu0 0.0
  %1911 = vmatpush.msra.mxu0 0.0
  %1912 = vmatpush.msra.mxu0 0.0
  %v1913 = vand.u32 %v1824, 4294901760
  %v1914 = vsub.f32 %v1824, %v1913
  %1915 = vmatpush.msra.mxu0 %v1914
  %v1916 = vand.u32 %v1829, 4294901760
  %v1917 = vsub.f32 %v1829, %v1916
  %1918 = vmatmul.f32.gmra.mxu0 %v1917
  %v1919 = vpop.f32.mrf.mxu0
  %v1920 = vadd.f32 %v1892, %v1919
  %v1921 = vand.u32 %v1832, 4294901760
  %v1922 = vsub.f32 %v1832, %v1921
  %1923 = vmatmul.f32.gmra.mxu0 %v1922
  %v1924 = vpop.f32.mrf.mxu0
  %v1925 = vadd.f32 %v1896, %v1924
  %1926 = vdwg.mxu0
  %1927 = vmatpush.msra.mxu0 0.0
  %1928 = vmatpush.msra.mxu0 0.0
  %1929 = vmatpush.msra.mxu0 0.0
  %1930 = vmatpush.msra.mxu0 0.0
  %1931 = vmatpush.msra.mxu0 0.0
  %1932 = vmatpush.msra.mxu0 0.0
  %1933 = vmatpush.msra.mxu0 0.0
  %1934 = vmatpush.msra.mxu0 0.0
  %1935 = vmatpush.msra.mxu0 0.0
  %1936 = vmatpush.msra.mxu0 0.0
  %1937 = vmatpush.msra.mxu0 0.0
  %1938 = vmatpush.msra.mxu0 0.0
  %1939 = vmatpush.msra.mxu0 0.0
  %1940 = vmatpush.msra.mxu0 0.0
  %1941 = vmatpush.msra.mxu0 0.0
  %v1942 = vand.u32 %v1824, 4294901760
  %1943 = vmatpush.msra.mxu0 %v1942
  %v1944 = vand.u32 %v1829, 4294901760
  %v1945 = vsub.f32 %v1829, %v1944
  %v1946 = vand.u32 %v1945, 4294901760
  %1947 = vmatmul.f32.gmra.mxu0 %v1946
  %v1948 = vpop.f32.mrf.mxu0
  %v1949 = vadd.f32 %v1920, %v1948
  %v1950 = vand.u32 %v1832, 4294901760
  %v1951 = vsub.f32 %v1832, %v1950
  %v1952 = vand.u32 %v1951, 4294901760
  %1953 = vmatmul.f32.gmra.mxu0 %v1952
  %v1954 = vpop.f32.mrf.mxu0
  %v1955 = vadd.f32 %v1925, %v1954
  %1956 = vdwg.mxu0
  %1957 = vmatpush.msra.mxu0 0.0
  %1958 = vmatpush.msra.mxu0 0.0
  %1959 = vmatpush.msra.mxu0 0.0
  %1960 = vmatpush.msra.mxu0 0.0
  %1961 = vmatpush.msra.mxu0 0.0
  %1962 = vmatpush.msra.mxu0 0.0
  %1963 = vmatpush.msra.mxu0 0.0
  %1964 = vmatpush.msra.mxu0 0.0
  %1965 = vmatpush.msra.mxu0 0.0
  %1966 = vmatpush.msra.mxu0 0.0
  %1967 = vmatpush.msra.mxu0 0.0
  %1968 = vmatpush.msra.mxu0 0.0
  %1969 = vmatpush.msra.mxu0 0.0
  %1970 = vmatpush.msra.mxu0 0.0
  %1971 = vmatpush.msra.mxu0 0.0
  %v1972 = vand.u32 %v1824, 4294901760
  %v1973 = vsub.f32 %v1824, %v1972
  %v1974 = vand.u32 %v1973, 4294901760
  %1975 = vmatpush.msra.mxu0 %v1974
  %v1976 = vand.u32 %v1829, 4294901760
  %1977 = vmatmul.f32.gmra.mxu0 %v1976
  %v1978 = vpop.f32.mrf.mxu0
  %v1979 = vadd.f32 %v1949, %v1978
  %v1980 = vand.u32 %v1832, 4294901760
  %1981 = vmatmul.f32.gmra.mxu0 %v1980
  %v1982 = vpop.f32.mrf.mxu0
  %v1983 = vadd.f32 %v1955, %v1982
  %1984 = vdwg.mxu0
  %1985 = vmatpush.msra.mxu0 0.0
  %1986 = vmatpush.msra.mxu0 0.0
  %1987 = vmatpush.msra.mxu0 0.0
  %1988 = vmatpush.msra.mxu0 0.0
  %1989 = vmatpush.msra.mxu0 0.0
  %1990 = vmatpush.msra.mxu0 0.0
  %1991 = vmatpush.msra.mxu0 0.0
  %1992 = vmatpush.msra.mxu0 0.0
  %1993 = vmatpush.msra.mxu0 0.0
  %1994 = vmatpush.msra.mxu0 0.0
  %1995 = vmatpush.msra.mxu0 0.0
  %1996 = vmatpush.msra.mxu0 0.0
  %1997 = vmatpush.msra.mxu0 0.0
  %1998 = vmatpush.msra.mxu0 0.0
  %1999 = vmatpush.msra.mxu0 0.0
  %v2000 = vand.u32 %v1824, 4294901760
  %2001 = vmatpush.msra.mxu0 %v2000
  %v2002 = vand.u32 %v1829, 4294901760
  %2003 = vmatmul.f32.gmra.mxu0 %v2002
  %v2004 = vpop.f32.mrf.mxu0
  %v2005 = vadd.f32 %v1979, %v2004
  %v2006 = vand.u32 %v1832, 4294901760
  %2007 = vmatmul.f32.gmra.mxu0 %v2006
  %v2008 = vpop.f32.mrf.mxu0
  %v2009 = vadd.f32 %v1983, %v2008
  %2010 = vdwg.mxu0
  %2011 = vmatpush.msra.mxu0 0.0
  %2012 = vmatpush.msra.mxu0 0.0
  %2013 = vmatpush.msra.mxu0 0.0
  %2014 = vmatpush.msra.mxu0 0.0
  %2015 = vmatpush.msra.mxu0 0.0
  %2016 = vmatpush.msra.mxu0 0.0
  %2017 = vmatpush.msra.mxu0 0.0
  %2018 = vmatpush.msra.mxu0 0.0
  %2019 = vmatpush.msra.mxu0 0.0
  %2020 = vmatpush.msra.mxu0 0.0
  %2021 = vmatpush.msra.mxu0 0.0
  %2022 = vmatpush.msra.mxu0 0.0
  %2023 = vmatpush.msra.mxu0 0.0
  %2024 = vmatpush.msra.mxu0 0.0
  %2025 = vmatpush.msra.mxu0 0.0
  %v2026 = vand.u32 %v1825, 4294901760
  %2027 = vmatpush.msra.mxu0 %v2026
  %v2028 = vand.u32 %v1829, 4294901760
  %v2029 = vsub.f32 %v1829, %v2028
  %v2030 = vand.u32 %v2029, 4294901760
  %v2031 = vsub.f32 %v2029, %v2030
  %v2032 = vand.u32 %v2031, 4294901760
  %2033 = vmatmul.f32.gmra.mxu0 %v2032
  %v2034 = vpop.f32.mrf.mxu0
  %v2035 = vadd.f32 0.0, %v2034
  %v2036 = vand.u32 %v1832, 4294901760
  %v2037 = vsub.f32 %v1832, %v2036
  %v2038 = vand.u32 %v2037, 4294901760
  %v2039 = vsub.f32 %v2037, %v2038
  %v2040 = vand.u32 %v2039, 4294901760
  %2041 = vmatmul.f32.gmra.mxu0 %v2040
  %v2042 = vpop.f32.mrf.mxu0
  %v2043 = vadd.f32 0.0, %v2042
  %2044 = vdwg.mxu0
  %2045 = vmatpush.msra.mxu0 0.0
  %2046 = vmatpush.msra.mxu0 0.0
  %2047 = vmatpush.msra.mxu0 0.0
  %2048 = vmatpush.msra.mxu0 0.0
  %2049 = vmatpush.msra.mxu0 0.0
  %2050 = vmatpush.msra.mxu0 0.0
  %2051 = vmatpush.msra.mxu0 0.0
  %2052 = vmatpush.msra.mxu0 0.0
  %2053 = vmatpush.msra.mxu0 0.0
  %2054 = vmatpush.msra.mxu0 0.0
  %2055 = vmatpush.msra.mxu0 0.0
  %2056 = vmatpush.msra.mxu0 0.0
  %2057 = vmatpush.msra.mxu0 0.0
  %2058 = vmatpush.msra.mxu0 0.0
  %2059 = vmatpush.msra.mxu0 0.0
  %v2060 = vand.u32 %v1825, 4294901760
  %v2061 = vsub.f32 %v1825, %v2060
  %v2062 = vand.u32 %v2061, 4294901760
  %v2063 = vsub.f32 %v2061, %v2062
  %v2064 = vand.u32 %v2063, 4294901760
  %2065 = vmatpush.msra.mxu0 %v2064
  %v2066 = vand.u32 %v1829, 4294901760
  %2067 = vmatmul.f32.gmra.mxu0 %v2066
  %v2068 = vpop.f32.mrf.mxu0
  %v2069 = vadd.f32 %v2035, %v2068
  %v2070 = vand.u32 %v1832, 4294901760
  %2071 = vmatmul.f32.gmra.mxu0 %v2070
  %v2072 = vpop.f32.mrf.mxu0
  %v2073 = vadd.f32 %v2043, %v2072
  %2074 = vdwg.mxu0
  %2075 = vmatpush.msra.mxu0 0.0
  %2076 = vmatpush.msra.mxu0 0.0
  %2077 = vmatpush.msra.mxu0 0.0
  %2078 = vmatpush.msra.mxu0 0.0
  %2079 = vmatpush.msra.mxu0 0.0
  %2080 = vmatpush.msra.mxu0 0.0
  %2081 = vmatpush.msra.mxu0 0.0
  %2082 = vmatpush.msra.mxu0 0.0
  %2083 = vmatpush.msra.mxu0 0.0
  %2084 = vmatpush.msra.mxu0 0.0
  %2085 = vmatpush.msra.mxu0 0.0
  %2086 = vmatpush.msra.mxu0 0.0
  %2087 = vmatpush.msra.mxu0 0.0
  %2088 = vmatpush.msra.mxu0 0.0
  %2089 = vmatpush.msra.mxu0 0.0
  %v2090 = vand.u32 %v1825, 4294901760
  %v2091 = vsub.f32 %v1825, %v2090
  %2092 = vmatpush.msra.mxu0 %v2091
  %v2093 = vand.u32 %v1829, 4294901760
  %v2094 = vsub.f32 %v1829, %v2093
  %2095 = vmatmul.f32.gmra.mxu0 %v2094
  %v2096 = vpop.f32.mrf.mxu0
  %v2097 = vadd.f32 %v2069, %v2096
  %v2098 = vand.u32 %v1832, 4294901760
  %v2099 = vsub.f32 %v1832, %v2098
  %2100 = vmatmul.f32.gmra.mxu0 %v2099
  %v2101 = vpop.f32.mrf.mxu0
  %v2102 = vadd.f32 %v2073, %v2101
  %2103 = vdwg.mxu0
  %2104 = vmatpush.msra.mxu0 0.0
  %2105 = vmatpush.msra.mxu0 0.0
  %2106 = vmatpush.msra.mxu0 0.0
  %2107 = vmatpush.msra.mxu0 0.0
  %2108 = vmatpush.msra.mxu0 0.0
  %2109 = vmatpush.msra.mxu0 0.0
  %2110 = vmatpush.msra.mxu0 0.0
  %2111 = vmatpush.msra.mxu0 0.0
  %2112 = vmatpush.msra.mxu0 0.0
  %2113 = vmatpush.msra.mxu0 0.0
  %2114 = vmatpush.msra.mxu0 0.0
  %2115 = vmatpush.msra.mxu0 0.0
  %2116 = vmatpush.msra.mxu0 0.0
  %2117 = vmatpush.msra.mxu0 0.0
  %2118 = vmatpush.msra.mxu0 0.0
  %v2119 = vand.u32 %v1825, 4294901760
  %2120 = vmatpush.msra.mxu0 %v2119
  %v2121 = vand.u32 %v1829, 4294901760
  %v2122 = vsub.f32 %v1829, %v2121
  %v2123 = vand.u32 %v2122, 4294901760
  %2124 = vmatmul.f32.gmra.mxu0 %v2123
  %v2125 = vpop.f32.mrf.mxu0
  %v2126 = vadd.f32 %v2097, %v2125
  %v2127 = vand.u32 %v1832, 4294901760
  %v2128 = vsub.f32 %v1832, %v2127
  %v2129 = vand.u32 %v2128, 4294901760
  %2130 = vmatmul.f32.gmra.mxu0 %v2129
  %v2131 = vpop.f32.mrf.mxu0
  %v2132 = vadd.f32 %v2102, %v2131
  %2133 = vdwg.mxu0
  %2134 = vmatpush.msra.mxu0 0.0
  %2135 = vmatpush.msra.mxu0 0.0
  %2136 = vmatpush.msra.mxu0 0.0
  %2137 = vmatpush.msra.mxu0 0.0
  %2138 = vmatpush.msra.mxu0 0.0
  %2139 = vmatpush.msra.mxu0 0.0
  %2140 = vmatpush.msra.mxu0 0.0
  %2141 = vmatpush.msra.mxu0 0.0
  %2142 = vmatpush.msra.mxu0 0.0
  %2143 = vmatpush.msra.mxu0 0.0
  %2144 = vmatpush.msra.mxu0 0.0
  %2145 = vmatpush.msra.mxu0 0.0
  %2146 = vmatpush.msra.mxu0 0.0
  %2147 = vmatpush.msra.mxu0 0.0
  %2148 = vmatpush.msra.mxu0 0.0
  %v2149 = vand.u32 %v1825, 4294901760
  %v2150 = vsub.f32 %v1825, %v2149
  %v2151 = vand.u32 %v2150, 4294901760
  %2152 = vmatpush.msra.mxu0 %v2151
  %v2153 = vand.u32 %v1829, 4294901760
  %2154 = vmatmul.f32.gmra.mxu0 %v2153
  %v2155 = vpop.f32.mrf.mxu0
  %v2156 = vadd.f32 %v2126, %v2155
  %v2157 = vand.u32 %v1832, 4294901760
  %2158 = vmatmul.f32.gmra.mxu0 %v2157
  %v2159 = vpop.f32.mrf.mxu0
  %v2160 = vadd.f32 %v2132, %v2159
  %2161 = vdwg.mxu0
  %2162 = vmatpush.msra.mxu0 0.0
  %2163 = vmatpush.msra.mxu0 0.0
  %2164 = vmatpush.msra.mxu0 0.0
  %2165 = vmatpush.msra.mxu0 0.0
  %2166 = vmatpush.msra.mxu0 0.0
  %2167 = vmatpush.msra.mxu0 0.0
  %2168 = vmatpush.msra.mxu0 0.0
  %2169 = vmatpush.msra.mxu0 0.0
  %2170 = vmatpush.msra.mxu0 0.0
  %2171 = vmatpush.msra.mxu0 0.0
  %2172 = vmatpush.msra.mxu0 0.0
  %2173 = vmatpush.msra.mxu0 0.0
  %2174 = vmatpush.msra.mxu0 0.0
  %2175 = vmatpush.msra.mxu0 0.0
  %2176 = vmatpush.msra.mxu0 0.0
  %v2177 = vand.u32 %v1825, 4294901760
  %2178 = vmatpush.msra.mxu0 %v2177
  %v2179 = vand.u32 %v1829, 4294901760
  %2180 = vmatmul.f32.gmra.mxu0 %v2179
  %v2181 = vpop.f32.mrf.mxu0
  %v2182 = vadd.f32 %v2156, %v2181
  %v2183 = vand.u32 %v1832, 4294901760
  %2184 = vmatmul.f32.gmra.mxu0 %v2183
  %v2185 = vpop.f32.mrf.mxu0
  %v2186 = vadd.f32 %v2160, %v2185
  %2187 = vdwg.mxu0
  %v2188 = vmul.f32 %v2005, %v267
  %v2189 = vmul.f32 %v2182, %v268
  %v2190 = vmul.f32 %v2009, %v267
  %v2191 = vmul.f32 %v2186, %v268
  %2192 = vst [vmem:[%s25] sm:$0xff] %v2188
  %2193 = vst [vmem:[%s25 + $0x8] sm:$0xff] %v2189
  %2194 = vst [vmem:[%s25 + $0x10] sm:$0xff] %v2190
  %2195 = vst [vmem:[%s25 + $0x18] sm:$0xff] %v2191
  %v2196 = vsub.f32 %v2188, %v1418
  %v2197 = vsub.f32 %v2189, %v1419
  %v2198 = vsub.f32 %v2190, %v1420
  %v2199 = vsub.f32 %v2191, %v1421
  %v2200 = vadd.f32 %v1418, %v2196
  %v2201 = vadd.f32 %v1419, %v2197
  %v2202 = vadd.f32 %v1420, %v2198
  %v2203 = vadd.f32 %v1421, %v2199
  %v2204 = vld [vmem:[%s14] sm:$0xff]
  %v2205 = vld [vmem:[%s14 + $0x8] sm:$0xff]
  %v2206 = vld [vmem:[%s14 + $0x10] sm:$0xff]
  %v2207 = vld [vmem:[%s14 + $0x18] sm:$0xff]
  %2208 = vrot.lane.b32.xlu0 %v2200, 10
  %v2209 = vpop.permute.xlu0 %2208
  %2210 = vrot.lane.b32.xlu0 %v2202, 10
  %v2211 = vpop.permute.xlu0 %2210
  %2212 = vrot.lane.b32.xlu0 %v2201, 10
  %v2213 = vpop.permute.xlu0 %2212
  %2214 = vrot.lane.b32.xlu0 %v2203, 10
  %v2215 = vpop.permute.xlu0 %2214
  %v2216 = vsel %vm283, %v2209, %v2213
  %v2217 = vsel %vm283, %v2211, %v2215
  %v2218 = vsel %vm283, %v2213, %v2209
  %v2219 = vsel %vm283, %v2215, %v2211
  %2220 = vst [vmem:[#allocation2] sm:$0xff] %v2218
  %2221 = vst [vmem:[#allocation2 + $0x8] sm:$0xff] %v2216
  %2222 = vst [vmem:[#allocation2 + $0x10] sm:$0xff] %v2219
  %2223 = vst [vmem:[#allocation2 + $0x18] sm:$0xff] %v2217
  %2224 = vrot.lane.b32.xlu0 %v2200, 9
  %v2225 = vpop.permute.xlu0 %2224
  %2226 = vrot.lane.b32.xlu0 %v2202, 9
  %v2227 = vpop.permute.xlu0 %2226
  %2228 = vrot.lane.b32.xlu0 %v2201, 9
  %v2229 = vpop.permute.xlu0 %2228
  %2230 = vrot.lane.b32.xlu0 %v2203, 9
  %v2231 = vpop.permute.xlu0 %2230
  %v2232 = vsel %vm292, %v2225, %v2229
  %v2233 = vsel %vm292, %v2227, %v2231
  %v2234 = vsel %vm292, %v2229, %v2225
  %v2235 = vsel %vm292, %v2231, %v2227
  %2236 = vst [vmem:[#allocation2 + $0x20] sm:$0xff] %v2234
  %2237 = vst [vmem:[#allocation2 + $0x28] sm:$0xff] %v2232
  %2238 = vst [vmem:[#allocation2 + $0x30] sm:$0xff] %v2235
  %2239 = vst [vmem:[#allocation2 + $0x38] sm:$0xff] %v2233
  %2240 = vrot.lane.b32.xlu0 %v2200, 8
  %v2241 = vpop.permute.xlu0 %2240
  %2242 = vrot.lane.b32.xlu0 %v2202, 8
  %v2243 = vpop.permute.xlu0 %2242
  %2244 = vrot.lane.b32.xlu0 %v2201, 8
  %v2245 = vpop.permute.xlu0 %2244
  %2246 = vrot.lane.b32.xlu0 %v2203, 8
  %v2247 = vpop.permute.xlu0 %2246
  %v2248 = vsel %vm309, %v2241, %v2245
  %v2249 = vsel %vm309, %v2243, %v2247
  %v2250 = vsel %vm309, %v2245, %v2241
  %v2251 = vsel %vm309, %v2247, %v2243
  %2252 = vst [vmem:[#allocation2 + $0x40] sm:$0xff] %v2250
  %2253 = vst [vmem:[#allocation2 + $0x48] sm:$0xff] %v2248
  %2254 = vst [vmem:[#allocation2 + $0x50] sm:$0xff] %v2251
  %2255 = vst [vmem:[#allocation2 + $0x58] sm:$0xff] %v2249
  %2256 = vrot.lane.b32.xlu0 %v2200, 1
  %v2257 = vpop.permute.xlu0 %2256
  %2258 = vrot.lane.b32.xlu0 %v2202, 1
  %v2259 = vpop.permute.xlu0 %2258
  %2260 = vrot.lane.b32.xlu0 %v2201, 1
  %v2261 = vpop.permute.xlu0 %2260
  %2262 = vrot.lane.b32.xlu0 %v2203, 1
  %v2263 = vpop.permute.xlu0 %2262
  %v2264 = vsel %vm318, %v2257, %v2261
  %v2265 = vsel %vm318, %v2259, %v2263
  %v2266 = vsel %vm318, %v2261, %v2257
  %v2267 = vsel %vm318, %v2263, %v2259
  %2268 = vst [vmem:[#allocation2 + $0x60] sm:$0xff] %v2266
  %2269 = vst [vmem:[#allocation2 + $0x68] sm:$0xff] %v2264
  %2270 = vst [vmem:[#allocation2 + $0x70] sm:$0xff] %v2267
  %2271 = vst [vmem:[#allocation2 + $0x78] sm:$0xff] %v2265
  %2272 = vst [vmem:[#allocation2 + $0x80] sm:$0xff] %v2200
  %2273 = vst [vmem:[#allocation2 + $0x88] sm:$0xff] %v2201
  %2274 = vst [vmem:[#allocation2 + $0x90] sm:$0xff] %v2202
  %2275 = vst [vmem:[#allocation2 + $0x98] sm:$0xff] %v2203
  %2276 = vrot.lane.b32.xlu0 %v2200, 127
  %v2277 = vpop.permute.xlu0 %2276
  %2278 = vrot.lane.b32.xlu0 %v2202, 127
  %v2279 = vpop.permute.xlu0 %2278
  %2280 = vrot.lane.b32.xlu0 %v2201, 127
  %v2281 = vpop.permute.xlu0 %2280
  %2282 = vrot.lane.b32.xlu0 %v2203, 127
  %v2283 = vpop.permute.xlu0 %2282
  %v2284 = vsel %vm100, %v2277, %v2281
  %v2285 = vsel %vm100, %v2279, %v2283
  %v2286 = vsel %vm100, %v2281, %v2277
  %v2287 = vsel %vm100, %v2283, %v2279
  %2288 = vst [vmem:[#allocation2 + $0xa0] sm:$0xff] %v2284
  %2289 = vst [vmem:[#allocation2 + $0xa8] sm:$0xff] %v2286
  %2290 = vst [vmem:[#allocation2 + $0xb0] sm:$0xff] %v2285
  %2291 = vst [vmem:[#allocation2 + $0xb8] sm:$0xff] %v2287
  %2292 = vrot.lane.b32.xlu0 %v2200, 120
  %v2293 = vpop.permute.xlu0 %2292
  %2294 = vrot.lane.b32.xlu0 %v2202, 120
  %v2295 = vpop.permute.xlu0 %2294
  %2296 = vrot.lane.b32.xlu0 %v2201, 120
  %v2297 = vpop.permute.xlu0 %2296
  %2298 = vrot.lane.b32.xlu0 %v2203, 120
  %v2299 = vpop.permute.xlu0 %2298
  %v2300 = vsel %vm359, %v2293, %v2297
  %v2301 = vsel %vm359, %v2295, %v2299
  %v2302 = vsel %vm359, %v2297, %v2293
  %v2303 = vsel %vm359, %v2299, %v2295
  %2304 = vst [vmem:[#allocation2 + $0xc0] sm:$0xff] %v2300
  %2305 = vst [vmem:[#allocation2 + $0xc8] sm:$0xff] %v2302
  %2306 = vst [vmem:[#allocation2 + $0xd0] sm:$0xff] %v2301
  %2307 = vst [vmem:[#allocation2 + $0xd8] sm:$0xff] %v2303
  %2308 = vrot.lane.b32.xlu0 %v2200, 119
  %v2309 = vpop.permute.xlu0 %2308
  %2310 = vrot.lane.b32.xlu0 %v2202, 119
  %v2311 = vpop.permute.xlu0 %2310
  %2312 = vrot.lane.b32.xlu0 %v2201, 119
  %v2313 = vpop.permute.xlu0 %2312
  %2314 = vrot.lane.b32.xlu0 %v2203, 119
  %v2315 = vpop.permute.xlu0 %2314
  %v2316 = vsel %vm117, %v2309, %v2313
  %v2317 = vsel %vm117, %v2311, %v2315
  %v2318 = vsel %vm117, %v2313, %v2309
  %v2319 = vsel %vm117, %v2315, %v2311
  %2320 = vst [vmem:[#allocation2 + $0xe0] sm:$0xff] %v2316
  %2321 = vst [vmem:[#allocation2 + $0xe8] sm:$0xff] %v2318
  %2322 = vst [vmem:[#allocation2 + $0xf0] sm:$0xff] %v2317
  %2323 = vst [vmem:[#allocation2 + $0xf8] sm:$0xff] %v2319
  %2324 = vrot.lane.b32.xlu0 %v2200, 118
  %v2325 = vpop.permute.xlu0 %2324
  %2326 = vrot.lane.b32.xlu0 %v2202, 118
  %v2327 = vpop.permute.xlu0 %2326
  %2328 = vrot.lane.b32.xlu0 %v2201, 118
  %v2329 = vpop.permute.xlu0 %2328
  %2330 = vrot.lane.b32.xlu0 %v2203, 118
  %v2331 = vpop.permute.xlu0 %2330
  %v2332 = vsel %vm134, %v2325, %v2329
  %v2333 = vsel %vm134, %v2327, %v2331
  %v2334 = vsel %vm134, %v2329, %v2325
  %v2335 = vsel %vm134, %v2331, %v2327
  %2336 = vst [vmem:[#allocation2 + $0x100] sm:$0xff] %v2332
  %2337 = vst [vmem:[#allocation2 + $0x108] sm:$0xff] %v2334
  %2338 = vst [vmem:[#allocation2 + $0x110] sm:$0xff] %v2333
  %2339 = vst [vmem:[#allocation2 + $0x118] sm:$0xff] %v2335
  %v2340 = vld [vmem:[#allocation2] sm:$0xff]
  %v2341 = vld [vmem:[#allocation2 + $0x8] sm:$0xff]
  %v2342 = vld [vmem:[#allocation2 + $0x10] sm:$0xff]
  %v2343 = vld [vmem:[#allocation2 + $0x18] sm:$0xff]
  %v2344 = vld [vmem:[#allocation2 + $0x20] sm:$0xff]
  %v2345 = vld [vmem:[#allocation2 + $0x28] sm:$0xff]
  %v2346 = vld [vmem:[#allocation2 + $0x30] sm:$0xff]
  %v2347 = vld [vmem:[#allocation2 + $0x38] sm:$0xff]
  %v2348 = vld [vmem:[#allocation2 + $0x40] sm:$0xff]
  %v2349 = vld [vmem:[#allocation2 + $0x48] sm:$0xff]
  %v2350 = vld [vmem:[#allocation2 + $0x50] sm:$0xff]
  %v2351 = vld [vmem:[#allocation2 + $0x58] sm:$0xff]
  %v2352 = vld [vmem:[#allocation2 + $0x60] sm:$0xff]
  %v2353 = vld [vmem:[#allocation2 + $0x68] sm:$0xff]
  %v2354 = vld [vmem:[#allocation2 + $0x70] sm:$0xff]
  %v2355 = vld [vmem:[#allocation2 + $0x78] sm:$0xff]
  %v2356 = vld [vmem:[#allocation2 + $0x80] sm:$0xff]
  %v2357 = vld [vmem:[#allocation2 + $0x88] sm:$0xff]
  %v2358 = vld [vmem:[#allocation2 + $0x90] sm:$0xff]
  %v2359 = vld [vmem:[#allocation2 + $0x98] sm:$0xff]
  %v2360 = vld [vmem:[#allocation2 + $0xa0] sm:$0xff]
  %v2361 = vld [vmem:[#allocation2 + $0xa8] sm:$0xff]
  %v2362 = vld [vmem:[#allocation2 + $0xb0] sm:$0xff]
  %v2363 = vld [vmem:[#allocation2 + $0xb8] sm:$0xff]
  %v2364 = vld [vmem:[#allocation2 + $0xc0] sm:$0xff]
  %v2365 = vld [vmem:[#allocation2 + $0xc8] sm:$0xff]
  %v2366 = vld [vmem:[#allocation2 + $0xd0] sm:$0xff]
  %v2367 = vld [vmem:[#allocation2 + $0xd8] sm:$0xff]
  %v2368 = vld [vmem:[#allocation2 + $0xe0] sm:$0xff]
  %v2369 = vld [vmem:[#allocation2 + $0xe8] sm:$0xff]
  %v2370 = vld [vmem:[#allocation2 + $0xf0] sm:$0xff]
  %v2371 = vld [vmem:[#allocation2 + $0xf8] sm:$0xff]
  %v2372 = vld [vmem:[#allocation2 + $0x100] sm:$0xff]
  %v2373 = vld [vmem:[#allocation2 + $0x108] sm:$0xff]
  %v2374 = vld [vmem:[#allocation2 + $0x110] sm:$0xff]
  %v2375 = vld [vmem:[#allocation2 + $0x118] sm:$0xff]
  %v2376 = vld [vmem:[%s15] sm:$0xff]
  %v2377 = vld [vmem:[%s15 + $0x8] sm:$0xff]
  %2379 = vset.pattern.permute.xlu0 0
  %2380 = vperm.xlu0 %2379, %v2376
  %v2381 = vpop.permute.xlu0 %2380
  %2384 = vset.pattern.permute.xlu0 0
  %2385 = vperm.xlu0 %2384, %v2377
  %v2386 = vpop.permute.xlu0 %2385
  %v2389 = vsel %vm672, %v2205, 0
  %v2392 = vsel %vm672, %v2207, 0
  %2394 = vmatpush.msra.mxu0 %v2370
  %2395 = vmatpush.msra.mxu0 %v2368
  %2396 = vmatpush.msra.mxu0 %v2366
  %2397 = vmatpush.msra.mxu0 %v2364
  %2398 = vmatpush.msra.mxu0 %v2362
  %2399 = vmatpush.msra.mxu0 %v2360
  %2400 = vmatpush.msra.mxu0 %v2358
  %2401 = vmatpush.msra.mxu0 %v2356
  %2402 = vmatpush.msra.mxu0 %v2354
  %2403 = vmatpush.msra.mxu0 %v2352
  %2404 = vmatpush.msra.mxu0 %v2350
  %2405 = vmatpush.msra.mxu0 %v2348
  %2406 = vmatpush.msra.mxu0 %v2346
  %2407 = vmatpush.msra.mxu0 %v2344
  %2408 = vmatpush.msra.mxu0 %v2342
  %2409 = vmatpush.msra.mxu0 %v2340
  %2410 = vmatmul.f32.gmra.mxu0 %v2204
  %v2411 = vpop.f32.mrf.mxu0
  %v2412 = vadd.f32 %v2381, %v2411
  %2413 = vmatmul.f32.gmra.mxu0 %v2206
  %v2414 = vpop.f32.mrf.mxu0
  %v2415 = vadd.f32 %v2386, %v2414
  %2416 = vdwg.mxu0
  %2417 = vmatpush.msra.mxu0 0.0
  %2418 = vmatpush.msra.mxu0 0.0
  %2419 = vmatpush.msra.mxu0 0.0
  %2420 = vmatpush.msra.mxu0 0.0
  %2421 = vmatpush.msra.mxu0 0.0
  %2422 = vmatpush.msra.mxu0 0.0
  %2423 = vmatpush.msra.mxu0 0.0
  %2424 = vmatpush.msra.mxu0 0.0
  %2425 = vmatpush.msra.mxu0 0.0
  %2426 = vmatpush.msra.mxu0 0.0
  %2427 = vmatpush.msra.mxu0 0.0
  %2428 = vmatpush.msra.mxu0 0.0
  %2429 = vmatpush.msra.mxu0 0.0
  %2430 = vmatpush.msra.mxu0 0.0
  %2431 = vmatpush.msra.mxu0 %v2374
  %2432 = vmatpush.msra.mxu0 %v2372
  %2433 = vmatmul.f32.gmra.mxu0 %v2389
  %v2434 = vpop.f32.mrf.mxu0
  %v2435 = vadd.f32 %v2412, %v2434
  %2436 = vmatmul.f32.gmra.mxu0 %v2392
  %v2437 = vpop.f32.mrf.mxu0
  %v2438 = vadd.f32 %v2415, %v2437
  %2439 = vdwg.mxu0
  %2440 = vmatpush.msra.mxu0 %v2371
  %2441 = vmatpush.msra.mxu0 %v2369
  %2442 = vmatpush.msra.mxu0 %v2367
  %2443 = vmatpush.msra.mxu0 %v2365
  %2444 = vmatpush.msra.mxu0 %v2363
  %2445 = vmatpush.msra.mxu0 %v2361
  %2446 = vmatpush.msra.mxu0 %v2359
  %2447 = vmatpush.msra.mxu0 %v2357
  %2448 = vmatpush.msra.mxu0 %v2355
  %2449 = vmatpush.msra.mxu0 %v2353
  %2450 = vmatpush.msra.mxu0 %v2351
  %2451 = vmatpush.msra.mxu0 %v2349
  %2452 = vmatpush.msra.mxu0 %v2347
  %2453 = vmatpush.msra.mxu0 %v2345
  %2454 = vmatpush.msra.mxu0 %v2343
  %2455 = vmatpush.msra.mxu0 %v2341
  %2456 = vmatmul.f32.gmra.mxu0 %v2204
  %v2457 = vpop.f32.mrf.mxu0
  %v2458 = vadd.f32 %v2381, %v2457
  %2459 = vmatmul.f32.gmra.mxu0 %v2206
  %v2460 = vpop.f32.mrf.mxu0
  %v2461 = vadd.f32 %v2386, %v2460
  %2462 = vdwg.mxu0
  %2463 = vmatpush.msra.mxu0 0.0
  %2464 = vmatpush.msra.mxu0 0.0
  %2465 = vmatpush.msra.mxu0 0.0
  %2466 = vmatpush.msra.mxu0 0.0
  %2467 = vmatpush.msra.mxu0 0.0
  %2468 = vmatpush.msra.mxu0 0.0
  %2469 = vmatpush.msra.mxu0 0.0
  %2470 = vmatpush.msra.mxu0 0.0
  %2471 = vmatpush.msra.mxu0 0.0
  %2472 = vmatpush.msra.mxu0 0.0
  %2473 = vmatpush.msra.mxu0 0.0
  %2474 = vmatpush.msra.mxu0 0.0
  %2475 = vmatpush.msra.mxu0 0.0
  %2476 = vmatpush.msra.mxu0 0.0
  %2477 = vmatpush.msra.mxu0 %v2375
  %2478 = vmatpush.msra.mxu0 %v2373
  %2479 = vmatmul.f32.gmra.mxu0 %v2389
  %v2480 = vpop.f32.mrf.mxu0
  %v2481 = vadd.f32 %v2458, %v2480
  %2482 = vmatmul.f32.gmra.mxu0 %v2392
  %v2483 = vpop.f32.mrf.mxu0
  %v2484 = vadd.f32 %v2461, %v2483
  %2485 = vdwg.mxu0
  %v2486 = vmul.f32 %v2435, %v267
  %v2487 = vmul.f32 %v2481, %v268
  %v2488 = vmul.f32 %v2438, %v267
  %v2489 = vmul.f32 %v2484, %v268
  %v2490 = vld [vmem:[%s16] sm:$0xff]
  %v2491 = vld [vmem:[%s16 + $0x8] sm:$0xff]
  %v2492 = vld [vmem:[%s17] sm:$0xff]
  %v2493 = vld [vmem:[%s17 + $0x8] sm:$0xff]
  %v2494 = vmax.f32 %v2486, 0.0
  %v2495 = vmax.f32 %v2487, 0.0
  %v2496 = vmax.f32 %v2488, 0.0
  %v2497 = vmax.f32 %v2489, 0.0
  %2498 = vrot.lane.b32.xlu0 %v2494, 10
  %v2499 = vpop.permute.xlu0 %2498
  %2500 = vrot.lane.b32.xlu0 %v2496, 10
  %v2501 = vpop.permute.xlu0 %2500
  %2502 = vrot.lane.b32.xlu0 %v2495, 10
  %v2503 = vpop.permute.xlu0 %2502
  %2504 = vrot.lane.b32.xlu0 %v2497, 10
  %v2505 = vpop.permute.xlu0 %2504
  %v2506 = vsel %vm283, %v2499, %v2503
  %v2507 = vsel %vm283, %v2501, %v2505
  %v2508 = vsel %vm283, %v2503, %v2499
  %v2509 = vsel %vm283, %v2505, %v2501
  %2510 = vst [vmem:[#allocation2] sm:$0xff] %v2508
  %2511 = vst [vmem:[#allocation2 + $0x8] sm:$0xff] %v2506
  %2512 = vst [vmem:[#allocation2 + $0x10] sm:$0xff] %v2509
  %2513 = vst [vmem:[#allocation2 + $0x18] sm:$0xff] %v2507
  %2514 = vrot.lane.b32.xlu0 %v2494, 9
  %v2515 = vpop.permute.xlu0 %2514
  %2516 = vrot.lane.b32.xlu0 %v2496, 9
  %v2517 = vpop.permute.xlu0 %2516
  %2518 = vrot.lane.b32.xlu0 %v2495, 9
  %v2519 = vpop.permute.xlu0 %2518
  %2520 = vrot.lane.b32.xlu0 %v2497, 9
  %v2521 = vpop.permute.xlu0 %2520
  %v2522 = vsel %vm292, %v2515, %v2519
  %v2523 = vsel %vm292, %v2517, %v2521
  %v2524 = vsel %vm292, %v2519, %v2515
  %v2525 = vsel %vm292, %v2521, %v2517
  %2526 = vst [vmem:[#allocation2 + $0x20] sm:$0xff] %v2524
  %2527 = vst [vmem:[#allocation2 + $0x28] sm:$0xff] %v2522
  %2528 = vst [vmem:[#allocation2 + $0x30] sm:$0xff] %v2525
  %2529 = vst [vmem:[#allocation2 + $0x38] sm:$0xff] %v2523
  %2530 = vrot.lane.b32.xlu0 %v2494, 8
  %v2531 = vpop.permute.xlu0 %2530
  %2532 = vrot.lane.b32.xlu0 %v2496, 8
  %v2533 = vpop.permute.xlu0 %2532
  %2534 = vrot.lane.b32.xlu0 %v2495, 8
  %v2535 = vpop.permute.xlu0 %2534
  %2536 = vrot.lane.b32.xlu0 %v2497, 8
  %v2537 = vpop.permute.xlu0 %2536
  %v2538 = vsel %vm309, %v2531, %v2535
  %v2539 = vsel %vm309, %v2533, %v2537
  %v2540 = vsel %vm309, %v2535, %v2531
  %v2541 = vsel %vm309, %v2537, %v2533
  %2542 = vst [vmem:[#allocation2 + $0x40] sm:$0xff] %v2540
  %2543 = vst [vmem:[#allocation2 + $0x48] sm:$0xff] %v2538
  %2544 = vst [vmem:[#allocation2 + $0x50] sm:$0xff] %v2541
  %2545 = vst [vmem:[#allocation2 + $0x58] sm:$0xff] %v2539
  %2546 = vrot.lane.b32.xlu0 %v2494, 1
  %v2547 = vpop.permute.xlu0 %2546
  %2548 = vrot.lane.b32.xlu0 %v2496, 1
  %v2549 = vpop.permute.xlu0 %2548
  %2550 = vrot.lane.b32.xlu0 %v2495, 1
  %v2551 = vpop.permute.xlu0 %2550
  %2552 = vrot.lane.b32.xlu0 %v2497, 1
  %v2553 = vpop.permute.xlu0 %2552
  %v2554 = vsel %vm318, %v2547, %v2551
  %v2555 = vsel %vm318, %v2549, %v2553
  %v2556 = vsel %vm318, %v2551, %v2547
  %v2557 = vsel %vm318, %v2553, %v2549
  %2558 = vst [vmem:[#allocation2 + $0x60] sm:$0xff] %v2556
  %2559 = vst [vmem:[#allocation2 + $0x68] sm:$0xff] %v2554
  %2560 = vst [vmem:[#allocation2 + $0x70] sm:$0xff] %v2557
  %2561 = vst [vmem:[#allocation2 + $0x78] sm:$0xff] %v2555
  %2562 = vst [vmem:[#allocation2 + $0x80] sm:$0xff] %v2494
  %2563 = vst [vmem:[#allocation2 + $0x88] sm:$0xff] %v2495
  %2564 = vst [vmem:[#allocation2 + $0x90] sm:$0xff] %v2496
  %2565 = vst [vmem:[#allocation2 + $0x98] sm:$0xff] %v2497
  %2566 = vrot.lane.b32.xlu0 %v2494, 127
  %v2567 = vpop.permute.xlu0 %2566
  %2568 = vrot.lane.b32.xlu0 %v2496, 127
  %v2569 = vpop.permute.xlu0 %2568
  %2570 = vrot.lane.b32.xlu0 %v2495, 127
  %v2571 = vpop.permute.xlu0 %2570
  %2572 = vrot.lane.b32.xlu0 %v2497, 127
  %v2573 = vpop.permute.xlu0 %2572
  %v2574 = vsel %vm100, %v2567, %v2571
  %v2575 = vsel %vm100, %v2569, %v2573
  %v2576 = vsel %vm100, %v2571, %v2567
  %v2577 = vsel %vm100, %v2573, %v2569
  %2578 = vst [vmem:[#allocation2 + $0xa0] sm:$0xff] %v2574
  %2579 = vst [vmem:[#allocation2 + $0xa8] sm:$0xff] %v2576
  %2580 = vst [vmem:[#allocation2 + $0xb0] sm:$0xff] %v2575
  %2581 = vst [vmem:[#allocation2 + $0xb8] sm:$0xff] %v2577
  %2582 = vrot.lane.b32.xlu0 %v2494, 120
  %v2583 = vpop.permute.xlu0 %2582
  %2584 = vrot.lane.b32.xlu0 %v2496, 120
  %v2585 = vpop.permute.xlu0 %2584
  %2586 = vrot.lane.b32.xlu0 %v2495, 120
  %v2587 = vpop.permute.xlu0 %2586
  %2588 = vrot.lane.b32.xlu0 %v2497, 120
  %v2589 = vpop.permute.xlu0 %2588
  %v2590 = vsel %vm359, %v2583, %v2587
  %v2591 = vsel %vm359, %v2585, %v2589
  %v2592 = vsel %vm359, %v2587, %v2583
  %v2593 = vsel %vm359, %v2589, %v2585
  %2594 = vst [vmem:[#allocation2 + $0xc0] sm:$0xff] %v2590
  %2595 = vst [vmem:[#allocation2 + $0xc8] sm:$0xff] %v2592
  %2596 = vst [vmem:[#allocation2 + $0xd0] sm:$0xff] %v2591
  %2597 = vst [vmem:[#allocation2 + $0xd8] sm:$0xff] %v2593
  %2598 = vrot.lane.b32.xlu0 %v2494, 119
  %v2599 = vpop.permute.xlu0 %2598
  %2600 = vrot.lane.b32.xlu0 %v2496, 119
  %v2601 = vpop.permute.xlu0 %2600
  %2602 = vrot.lane.b32.xlu0 %v2495, 119
  %v2603 = vpop.permute.xlu0 %2602
  %2604 = vrot.lane.b32.xlu0 %v2497, 119
  %v2605 = vpop.permute.xlu0 %2604
  %v2606 = vsel %vm117, %v2599, %v2603
  %v2607 = vsel %vm117, %v2601, %v2605
  %v2608 = vsel %vm117, %v2603, %v2599
  %v2609 = vsel %vm117, %v2605, %v2601
  %2610 = vst [vmem:[#allocation2 + $0xe0] sm:$0xff] %v2606
  %2611 = vst [vmem:[#allocation2 + $0xe8] sm:$0xff] %v2608
  %2612 = vst [vmem:[#allocation2 + $0xf0] sm:$0xff] %v2607
  %2613 = vst [vmem:[#allocation2 + $0xf8] sm:$0xff] %v2609
  %2614 = vrot.lane.b32.xlu0 %v2494, 118
  %v2615 = vpop.permute.xlu0 %2614
  %2616 = vrot.lane.b32.xlu0 %v2496, 118
  %v2617 = vpop.permute.xlu0 %2616
  %2618 = vrot.lane.b32.xlu0 %v2495, 118
  %v2619 = vpop.permute.xlu0 %2618
  %2620 = vrot.lane.b32.xlu0 %v2497, 118
  %v2621 = vpop.permute.xlu0 %2620
  %v2622 = vsel %vm134, %v2615, %v2619
  %v2623 = vsel %vm134, %v2617, %v2621
  %v2624 = vsel %vm134, %v2619, %v2615
  %v2625 = vsel %vm134, %v2621, %v2617
  %2626 = vst [vmem:[#allocation2 + $0x100] sm:$0xff] %v2622
  %2627 = vst [vmem:[#allocation2 + $0x108] sm:$0xff] %v2624
  %2628 = vst [vmem:[#allocation2 + $0x110] sm:$0xff] %v2623
  %2629 = vst [vmem:[#allocation2 + $0x118] sm:$0xff] %v2625
  %v2630 = vld [vmem:[#allocation2] sm:$0xff]
  %v2631 = vld [vmem:[#allocation2 + $0x8] sm:$0xff]
  %v2632 = vld [vmem:[#allocation2 + $0x10] sm:$0xff]
  %v2633 = vld [vmem:[#allocation2 + $0x18] sm:$0xff]
  %v2634 = vld [vmem:[#allocation2 + $0x20] sm:$0xff]
  %v2635 = vld [vmem:[#allocation2 + $0x28] sm:$0xff]
  %v2636 = vld [vmem:[#allocation2 + $0x30] sm:$0xff]
  %v2637 = vld [vmem:[#allocation2 + $0x38] sm:$0xff]
  %v2638 = vld [vmem:[#allocation2 + $0x40] sm:$0xff]
  %v2639 = vld [vmem:[#allocation2 + $0x48] sm:$0xff]
  %v2640 = vld [vmem:[#allocation2 + $0x50] sm:$0xff]
  %v2641 = vld [vmem:[#allocation2 + $0x58] sm:$0xff]
  %v2642 = vld [vmem:[#allocation2 + $0x60] sm:$0xff]
  %v2643 = vld [vmem:[#allocation2 + $0x68] sm:$0xff]
  %v2644 = vld [vmem:[#allocation2 + $0x70] sm:$0xff]
  %v2645 = vld [vmem:[#allocation2 + $0x78] sm:$0xff]
  %v2646 = vld [vmem:[#allocation2 + $0x80] sm:$0xff]
  %v2647 = vld [vmem:[#allocation2 + $0x88] sm:$0xff]
  %v2648 = vld [vmem:[#allocation2 + $0x90] sm:$0xff]
  %v2649 = vld [vmem:[#allocation2 + $0x98] sm:$0xff]
  %v2650 = vld [vmem:[#allocation2 + $0xa0] sm:$0xff]
  %v2651 = vld [vmem:[#allocation2 + $0xa8] sm:$0xff]
  %v2652 = vld [vmem:[#allocation2 + $0xb0] sm:$0xff]
  %v2653 = vld [vmem:[#allocation2 + $0xb8] sm:$0xff]
  %v2654 = vld [vmem:[#allocation2 + $0xc0] sm:$0xff]
  %v2655 = vld [vmem:[#allocation2 + $0xc8] sm:$0xff]
  %v2656 = vld [vmem:[#allocation2 + $0xd0] sm:$0xff]
  %v2657 = vld [vmem:[#allocation2 + $0xd8] sm:$0xff]
  %v2658 = vld [vmem:[#allocation2 + $0xe0] sm:$0xff]
  %v2659 = vld [vmem:[#allocation2 + $0xe8] sm:$0xff]
  %v2660 = vld [vmem:[#allocation2 + $0xf0] sm:$0xff]
  %v2661 = vld [vmem:[#allocation2 + $0xf8] sm:$0xff]
  %v2662 = vld [vmem:[#allocation2 + $0x100] sm:$0xff]
  %v2663 = vld [vmem:[#allocation2 + $0x108] sm:$0xff]
  %v2664 = vld [vmem:[#allocation2 + $0x110] sm:$0xff]
  %v2665 = vld [vmem:[#allocation2 + $0x118] sm:$0xff]
  %v2667 = vsel %vm672, %v2491, 0
  %2669 = vmatpush.msra.mxu0 %v2660
  %2670 = vmatpush.msra.mxu0 %v2658
  %2671 = vmatpush.msra.mxu0 %v2656
  %2672 = vmatpush.msra.mxu0 %v2654
  %2673 = vmatpush.msra.mxu0 %v2652
  %2674 = vmatpush.msra.mxu0 %v2650
  %2675 = vmatpush.msra.mxu0 %v2648
  %2676 = vmatpush.msra.mxu0 %v2646
  %2677 = vmatpush.msra.mxu0 %v2644
  %2678 = vmatpush.msra.mxu0 %v2642
  %2679 = vmatpush.msra.mxu0 %v2640
  %2680 = vmatpush.msra.mxu0 %v2638
  %2681 = vmatpush.msra.mxu0 %v2636
  %2682 = vmatpush.msra.mxu0 %v2634
  %2683 = vmatpush.msra.mxu0 %v2632
  %2684 = vmatpush.msra.mxu0 %v2630
  %2685 = vmatmul.f32.gmra.mxu0 %v2490
  %v2686 = vpop.f32.mrf.mxu0
  %v2687 = vadd.f32 0.0, %v2686
  %2688 = vdwg.mxu0
  %2689 = vmatpush.msra.mxu0 0.0
  %2690 = vmatpush.msra.mxu0 0.0
  %2691 = vmatpush.msra.mxu0 0.0
  %2692 = vmatpush.msra.mxu0 0.0
  %2693 = vmatpush.msra.mxu0 0.0
  %2694 = vmatpush.msra.mxu0 0.0
  %2695 = vmatpush.msra.mxu0 0.0
  %2696 = vmatpush.msra.mxu0 0.0
  %2697 = vmatpush.msra.mxu0 0.0
  %2698 = vmatpush.msra.mxu0 0.0
  %2699 = vmatpush.msra.mxu0 0.0
  %2700 = vmatpush.msra.mxu0 0.0
  %2701 = vmatpush.msra.mxu0 0.0
  %2702 = vmatpush.msra.mxu0 0.0
  %2703 = vmatpush.msra.mxu0 %v2664
  %2704 = vmatpush.msra.mxu0 %v2662
  %2705 = vmatmul.f32.gmra.mxu0 %v2667
  %v2706 = vpop.f32.mrf.mxu0
  %v2707 = vadd.f32 %v2687, %v2706
  %2708 = vdwg.mxu0
  %2709 = vmatpush.msra.mxu0 %v2661
  %2710 = vmatpush.msra.mxu0 %v2659
  %2711 = vmatpush.msra.mxu0 %v2657
  %2712 = vmatpush.msra.mxu0 %v2655
  %2713 = vmatpush.msra.mxu0 %v2653
  %2714 = vmatpush.msra.mxu0 %v2651
  %2715 = vmatpush.msra.mxu0 %v2649
  %2716 = vmatpush.msra.mxu0 %v2647
  %2717 = vmatpush.msra.mxu0 %v2645
  %2718 = vmatpush.msra.mxu0 %v2643
  %2719 = vmatpush.msra.mxu0 %v2641
  %2720 = vmatpush.msra.mxu0 %v2639
  %2721 = vmatpush.msra.mxu0 %v2637
  %2722 = vmatpush.msra.mxu0 %v2635
  %2723 = vmatpush.msra.mxu0 %v2633
  %2724 = vmatpush.msra.mxu0 %v2631
  %2725 = vmatmul.f32.gmra.mxu0 %v2490
  %v2726 = vpop.f32.mrf.mxu0
  %v2727 = vadd.f32 0.0, %v2726
  %2728 = vdwg.mxu0
  %2729 = vmatpush.msra.mxu0 0.0
  %2730 = vmatpush.msra.mxu0 0.0
  %2731 = vmatpush.msra.mxu0 0.0
  %2732 = vmatpush.msra.mxu0 0.0
  %2733 = vmatpush.msra.mxu0 0.0
  %2734 = vmatpush.msra.mxu0 0.0
  %2735 = vmatpush.msra.mxu0 0.0
  %2736 = vmatpush.msra.mxu0 0.0
  %2737 = vmatpush.msra.mxu0 0.0
  %2738 = vmatpush.msra.mxu0 0.0
  %2739 = vmatpush.msra.mxu0 0.0
  %2740 = vmatpush.msra.mxu0 0.0
  %2741 = vmatpush.msra.mxu0 0.0
  %2742 = vmatpush.msra.mxu0 0.0
  %2743 = vmatpush.msra.mxu0 %v2665
  %2744 = vmatpush.msra.mxu0 %v2663
  %2745 = vmatmul.f32.gmra.mxu0 %v2667
  %v2746 = vpop.f32.mrf.mxu0
  %v2747 = vadd.f32 %v2727, %v2746
  %2748 = vdwg.mxu0
  %v2749 = vmax.f32 %v2707, 0.0
  %v2750 = vmax.f32 %v2747, 0.0
  %v2752 = vsel %vm1036, %v2492, 0
  %v2755 = vsel %vm1036, %v2493, 0
  %2757 = vmatpush.msra.mxu0 0.0
  %2758 = vmatpush.msra.mxu0 0.0
  %2759 = vmatpush.msra.mxu0 0.0
  %2760 = vmatpush.msra.mxu0 0.0
  %2761 = vmatpush.msra.mxu0 0.0
  %2762 = vmatpush.msra.mxu0 0.0
  %2763 = vmatpush.msra.mxu0 0.0
  %2764 = vmatpush.msra.mxu0 0.0
  %2765 = vmatpush.msra.mxu0 0.0
  %2766 = vmatpush.msra.mxu0 0.0
  %2767 = vmatpush.msra.mxu0 0.0
  %2768 = vmatpush.msra.mxu0 0.0
  %2769 = vmatpush.msra.mxu0 0.0
  %2770 = vmatpush.msra.mxu0 0.0
  %2771 = vmatpush.msra.mxu0 0.0
  %2772 = vmatpush.msra.mxu0 %v2749
  %2773 = vmatmul.f32.gmra.mxu0 %v2752
  %v2774 = vpop.f32.mrf.mxu0
  %v2775 = vadd.f32 0.0, %v2774
  %2776 = vmatmul.f32.gmra.mxu0 %v2755
  %v2777 = vpop.f32.mrf.mxu0
  %v2778 = vadd.f32 0.0, %v2777
  %2779 = vdwg.mxu0
  %2780 = vmatpush.msra.mxu0 0.0
  %2781 = vmatpush.msra.mxu0 0.0
  %2782 = vmatpush.msra.mxu0 0.0
  %2783 = vmatpush.msra.mxu0 0.0
  %2784 = vmatpush.msra.mxu0 0.0
  %2785 = vmatpush.msra.mxu0 0.0
  %2786 = vmatpush.msra.mxu0 0.0
  %2787 = vmatpush.msra.mxu0 0.0
  %2788 = vmatpush.msra.mxu0 0.0
  %2789 = vmatpush.msra.mxu0 0.0
  %2790 = vmatpush.msra.mxu0 0.0
  %2791 = vmatpush.msra.mxu0 0.0
  %2792 = vmatpush.msra.mxu0 0.0
  %2793 = vmatpush.msra.mxu0 0.0
  %2794 = vmatpush.msra.mxu0 0.0
  %2795 = vmatpush.msra.mxu0 %v2750
  %2796 = vmatmul.f32.gmra.mxu0 %v2752
  %v2797 = vpop.f32.mrf.mxu0
  %v2798 = vadd.f32 0.0, %v2797
  %2799 = vmatmul.f32.gmra.mxu0 %v2755
  %v2800 = vpop.f32.mrf.mxu0
  %v2801 = vadd.f32 0.0, %v2800
  %2802 = vdwg.mxu0
  %v2803 = vadd.f32 %v2486, %v2775
  %v2804 = vadd.f32 %v2487, %v2798
  %v2805 = vadd.f32 %v2488, %v2778
  %v2806 = vadd.f32 %v2489, %v2801
  %v2807 = vmul.f32 %v2803, %v267
  %v2808 = vmul.f32 %v2804, %v268
  %v2809 = vmul.f32 %v2805, %v267
  %v2810 = vmul.f32 %v2806, %v268
  %v2811 = vld [vmem:[%s18] sm:$0xff]
  %v2812 = vld [vmem:[%s18 + $0x8] sm:$0xff]
  %v2813 = vld [vmem:[%s19] sm:$0xff]
  %v2814 = vld [vmem:[%s19 + $0x8] sm:$0xff]
  %v2815 = vmax.f32 %v2807, 0.0
  %v2816 = vmax.f32 %v2808, 0.0
  %v2817 = vmax.f32 %v2809, 0.0
  %v2818 = vmax.f32 %v2810, 0.0
  %2819 = vrot.lane.b32.xlu0 %v2815, 10
  %v2820 = vpop.permute.xlu0 %2819
  %2821 = vrot.lane.b32.xlu0 %v2817, 10
  %v2822 = vpop.permute.xlu0 %2821
  %2823 = vrot.lane.b32.xlu0 %v2816, 10
  %v2824 = vpop.permute.xlu0 %2823
  %2825 = vrot.lane.b32.xlu0 %v2818, 10
  %v2826 = vpop.permute.xlu0 %2825
  %v2827 = vsel %vm283, %v2820, %v2824
  %v2828 = vsel %vm283, %v2822, %v2826
  %v2829 = vsel %vm283, %v2824, %v2820
  %v2830 = vsel %vm283, %v2826, %v2822
  %2831 = vst [vmem:[#allocation2] sm:$0xff] %v2829
  %2832 = vst [vmem:[#allocation2 + $0x8] sm:$0xff] %v2827
  %2833 = vst [vmem:[#allocation2 + $0x10] sm:$0xff] %v2830
  %2834 = vst [vmem:[#allocation2 + $0x18] sm:$0xff] %v2828
  %2835 = vrot.lane.b32.xlu0 %v2815, 9
  %v2836 = vpop.permute.xlu0 %2835
  %2837 = vrot.lane.b32.xlu0 %v2817, 9
  %v2838 = vpop.permute.xlu0 %2837
  %2839 = vrot.lane.b32.xlu0 %v2816, 9
  %v2840 = vpop.permute.xlu0 %2839
  %2841 = vrot.lane.b32.xlu0 %v2818, 9
  %v2842 = vpop.permute.xlu0 %2841
  %v2843 = vsel %vm292, %v2836, %v2840
  %v2844 = vsel %vm292, %v2838, %v2842
  %v2845 = vsel %vm292, %v2840, %v2836
  %v2846 = vsel %vm292, %v2842, %v2838
  %2847 = vst [vmem:[#allocation2 + $0x20] sm:$0xff] %v2845
  %2848 = vst [vmem:[#allocation2 + $0x28] sm:$0xff] %v2843
  %2849 = vst [vmem:[#allocation2 + $0x30] sm:$0xff] %v2846
  %2850 = vst [vmem:[#allocation2 + $0x38] sm:$0xff] %v2844
  %2851 = vrot.lane.b32.xlu0 %v2815, 8
  %v2852 = vpop.permute.xlu0 %2851
  %2853 = vrot.lane.b32.xlu0 %v2817, 8
  %v2854 = vpop.permute.xlu0 %2853
  %2855 = vrot.lane.b32.xlu0 %v2816, 8
  %v2856 = vpop.permute.xlu0 %2855
  %2857 = vrot.lane.b32.xlu0 %v2818, 8
  %v2858 = vpop.permute.xlu0 %2857
  %v2859 = vsel %vm309, %v2852, %v2856
  %v2860 = vsel %vm309, %v2854, %v2858
  %v2861 = vsel %vm309, %v2856, %v2852
  %v2862 = vsel %vm309, %v2858, %v2854
  %2863 = vst [vmem:[#allocation2 + $0x40] sm:$0xff] %v2861
  %2864 = vst [vmem:[#allocation2 + $0x48] sm:$0xff] %v2859
  %2865 = vst [vmem:[#allocation2 + $0x50] sm:$0xff] %v2862
  %2866 = vst [vmem:[#allocation2 + $0x58] sm:$0xff] %v2860
  %2867 = vrot.lane.b32.xlu0 %v2815, 1
  %v2868 = vpop.permute.xlu0 %2867
  %2869 = vrot.lane.b32.xlu0 %v2817, 1
  %v2870 = vpop.permute.xlu0 %2869
  %2871 = vrot.lane.b32.xlu0 %v2816, 1
  %v2872 = vpop.permute.xlu0 %2871
  %2873 = vrot.lane.b32.xlu0 %v2818, 1
  %v2874 = vpop.permute.xlu0 %2873
  %v2875 = vsel %vm318, %v2868, %v2872
  %v2876 = vsel %vm318, %v2870, %v2874
  %v2877 = vsel %vm318, %v2872, %v2868
  %v2878 = vsel %vm318, %v2874, %v2870
  %2879 = vst [vmem:[#allocation2 + $0x60] sm:$0xff] %v2877
  %2880 = vst [vmem:[#allocation2 + $0x68] sm:$0xff] %v2875
  %2881 = vst [vmem:[#allocation2 + $0x70] sm:$0xff] %v2878
  %2882 = vst [vmem:[#allocation2 + $0x78] sm:$0xff] %v2876
  %2883 = vst [vmem:[#allocation2 + $0x80] sm:$0xff] %v2815
  %2884 = vst [vmem:[#allocation2 + $0x88] sm:$0xff] %v2816
  %2885 = vst [vmem:[#allocation2 + $0x90] sm:$0xff] %v2817
  %2886 = vst [vmem:[#allocation2 + $0x98] sm:$0xff] %v2818
  %2887 = vrot.lane.b32.xlu0 %v2815, 127
  %v2888 = vpop.permute.xlu0 %2887
  %2889 = vrot.lane.b32.xlu0 %v2817, 127
  %v2890 = vpop.permute.xlu0 %2889
  %2891 = vrot.lane.b32.xlu0 %v2816, 127
  %v2892 = vpop.permute.xlu0 %2891
  %2893 = vrot.lane.b32.xlu0 %v2818, 127
  %v2894 = vpop.permute.xlu0 %2893
  %v2895 = vsel %vm100, %v2888, %v2892
  %v2896 = vsel %vm100, %v2890, %v2894
  %v2897 = vsel %vm100, %v2892, %v2888
  %v2898 = vsel %vm100, %v2894, %v2890
  %2899 = vst [vmem:[#allocation2 + $0xa0] sm:$0xff] %v2895
  %2900 = vst [vmem:[#allocation2 + $0xa8] sm:$0xff] %v2897
  %2901 = vst [vmem:[#allocation2 + $0xb0] sm:$0xff] %v2896
  %2902 = vst [vmem:[#allocation2 + $0xb8] sm:$0xff] %v2898
  %2903 = vrot.lane.b32.xlu0 %v2815, 120
  %v2904 = vpop.permute.xlu0 %2903
  %2905 = vrot.lane.b32.xlu0 %v2817, 120
  %v2906 = vpop.permute.xlu0 %2905
  %2907 = vrot.lane.b32.xlu0 %v2816, 120
  %v2908 = vpop.permute.xlu0 %2907
  %2909 = vrot.lane.b32.xlu0 %v2818, 120
  %v2910 = vpop.permute.xlu0 %2909
  %v2911 = vsel %vm359, %v2904, %v2908
  %v2912 = vsel %vm359, %v2906, %v2910
  %v2913 = vsel %vm359, %v2908, %v2904
  %v2914 = vsel %vm359, %v2910, %v2906
  %2915 = vst [vmem:[#allocation2 + $0xc0] sm:$0xff] %v2911
  %2916 = vst [vmem:[#allocation2 + $0xc8] sm:$0xff] %v2913
  %2917 = vst [vmem:[#allocation2 + $0xd0] sm:$0xff] %v2912
  %2918 = vst [vmem:[#allocation2 + $0xd8] sm:$0xff] %v2914
  %2919 = vrot.lane.b32.xlu0 %v2815, 119
  %v2920 = vpop.permute.xlu0 %2919
  %2921 = vrot.lane.b32.xlu0 %v2817, 119
  %v2922 = vpop.permute.xlu0 %2921
  %2923 = vrot.lane.b32.xlu0 %v2816, 119
  %v2924 = vpop.permute.xlu0 %2923
  %2925 = vrot.lane.b32.xlu0 %v2818, 119
  %v2926 = vpop.permute.xlu0 %2925
  %v2927 = vsel %vm117, %v2920, %v2924
  %v2928 = vsel %vm117, %v2922, %v2926
  %v2929 = vsel %vm117, %v2924, %v2920
  %v2930 = vsel %vm117, %v2926, %v2922
  %2931 = vst [vmem:[#allocation2 + $0xe0] sm:$0xff] %v2927
  %2932 = vst [vmem:[#allocation2 + $0xe8] sm:$0xff] %v2929
  %2933 = vst [vmem:[#allocation2 + $0xf0] sm:$0xff] %v2928
  %2934 = vst [vmem:[#allocation2 + $0xf8] sm:$0xff] %v2930
  %2935 = vrot.lane.b32.xlu0 %v2815, 118
  %v2936 = vpop.permute.xlu0 %2935
  %2937 = vrot.lane.b32.xlu0 %v2817, 118
  %v2938 = vpop.permute.xlu0 %2937
  %2939 = vrot.lane.b32.xlu0 %v2816, 118
  %v2940 = vpop.permute.xlu0 %2939
  %2941 = vrot.lane.b32.xlu0 %v2818, 118
  %v2942 = vpop.permute.xlu0 %2941
  %v2943 = vsel %vm134, %v2936, %v2940
  %v2944 = vsel %vm134, %v2938, %v2942
  %v2945 = vsel %vm134, %v2940, %v2936
  %v2946 = vsel %vm134, %v2942, %v2938
  %2947 = vst [vmem:[#allocation2 + $0x100] sm:$0xff] %v2943
  %2948 = vst [vmem:[#allocation2 + $0x108] sm:$0xff] %v2945
  %2949 = vst [vmem:[#allocation2 + $0x110] sm:$0xff] %v2944
  %2950 = vst [vmem:[#allocation2 + $0x118] sm:$0xff] %v2946
  %v2951 = vld [vmem:[#allocation2] sm:$0xff]
  %v2952 = vld [vmem:[#allocation2 + $0x8] sm:$0xff]
  %v2953 = vld [vmem:[#allocation2 + $0x10] sm:$0xff]
  %v2954 = vld [vmem:[#allocation2 + $0x18] sm:$0xff]
  %v2955 = vld [vmem:[#allocation2 + $0x20] sm:$0xff]
  %v2956 = vld [vmem:[#allocation2 + $0x28] sm:$0xff]
  %v2957 = vld [vmem:[#allocation2 + $0x30] sm:$0xff]
  %v2958 = vld [vmem:[#allocation2 + $0x38] sm:$0xff]
  %v2959 = vld [vmem:[#allocation2 + $0x40] sm:$0xff]
  %v2960 = vld [vmem:[#allocation2 + $0x48] sm:$0xff]
  %v2961 = vld [vmem:[#allocation2 + $0x50] sm:$0xff]
  %v2962 = vld [vmem:[#allocation2 + $0x58] sm:$0xff]
  %v2963 = vld [vmem:[#allocation2 + $0x60] sm:$0xff]
  %v2964 = vld [vmem:[#allocation2 + $0x68] sm:$0xff]
  %v2965 = vld [vmem:[#allocation2 + $0x70] sm:$0xff]
  %v2966 = vld [vmem:[#allocation2 + $0x78] sm:$0xff]
  %v2967 = vld [vmem:[#allocation2 + $0x80] sm:$0xff]
  %v2968 = vld [vmem:[#allocation2 + $0x88] sm:$0xff]
  %v2969 = vld [vmem:[#allocation2 + $0x90] sm:$0xff]
  %v2970 = vld [vmem:[#allocation2 + $0x98] sm:$0xff]
  %v2971 = vld [vmem:[#allocation2 + $0xa0] sm:$0xff]
  %v2972 = vld [vmem:[#allocation2 + $0xa8] sm:$0xff]
  %v2973 = vld [vmem:[#allocation2 + $0xb0] sm:$0xff]
  %v2974 = vld [vmem:[#allocation2 + $0xb8] sm:$0xff]
  %v2975 = vld [vmem:[#allocation2 + $0xc0] sm:$0xff]
  %v2976 = vld [vmem:[#allocation2 + $0xc8] sm:$0xff]
  %v2977 = vld [vmem:[#allocation2 + $0xd0] sm:$0xff]
  %v2978 = vld [vmem:[#allocation2 + $0xd8] sm:$0xff]
  %v2979 = vld [vmem:[#allocation2 + $0xe0] sm:$0xff]
  %v2980 = vld [vmem:[#allocation2 + $0xe8] sm:$0xff]
  %v2981 = vld [vmem:[#allocation2 + $0xf0] sm:$0xff]
  %v2982 = vld [vmem:[#allocation2 + $0xf8] sm:$0xff]
  %v2983 = vld [vmem:[#allocation2 + $0x100] sm:$0xff]
  %v2984 = vld [vmem:[#allocation2 + $0x108] sm:$0xff]
  %v2985 = vld [vmem:[#allocation2 + $0x110] sm:$0xff]
  %v2986 = vld [vmem:[#allocation2 + $0x118] sm:$0xff]
  %v2988 = vsel %vm672, %v2812, 0
  %2990 = vmatpush.msra.mxu0 %v2981
  %2991 = vmatpush.msra.mxu0 %v2979
  %2992 = vmatpush.msra.mxu0 %v2977
  %2993 = vmatpush.msra.mxu0 %v2975
  %2994 = vmatpush.msra.mxu0 %v2973
  %2995 = vmatpush.msra.mxu0 %v2971
  %2996 = vmatpush.msra.mxu0 %v2969
  %2997 = vmatpush.msra.mxu0 %v2967
  %2998 = vmatpush.msra.mxu0 %v2965
  %2999 = vmatpush.msra.mxu0 %v2963
  %3000 = vmatpush.msra.mxu0 %v2961
  %3001 = vmatpush.msra.mxu0 %v2959
  %3002 = vmatpush.msra.mxu0 %v2957
  %3003 = vmatpush.msra.mxu0 %v2955
  %3004 = vmatpush.msra.mxu0 %v2953
  %3005 = vmatpush.msra.mxu0 %v2951
  %3006 = vmatmul.f32.gmra.mxu0 %v2811
  %v3007 = vpop.f32.mrf.mxu0
  %v3008 = vadd.f32 0.0, %v3007
  %3009 = vdwg.mxu0
  %3010 = vmatpush.msra.mxu0 0.0
  %3011 = vmatpush.msra.mxu0 0.0
  %3012 = vmatpush.msra.mxu0 0.0
  %3013 = vmatpush.msra.mxu0 0.0
  %3014 = vmatpush.msra.mxu0 0.0
  %3015 = vmatpush.msra.mxu0 0.0
  %3016 = vmatpush.msra.mxu0 0.0
  %3017 = vmatpush.msra.mxu0 0.0
  %3018 = vmatpush.msra.mxu0 0.0
  %3019 = vmatpush.msra.mxu0 0.0
  %3020 = vmatpush.msra.mxu0 0.0
  %3021 = vmatpush.msra.mxu0 0.0
  %3022 = vmatpush.msra.mxu0 0.0
  %3023 = vmatpush.msra.mxu0 0.0
  %3024 = vmatpush.msra.mxu0 %v2985
  %3025 = vmatpush.msra.mxu0 %v2983
  %3026 = vmatmul.f32.gmra.mxu0 %v2988
  %v3027 = vpop.f32.mrf.mxu0
  %v3028 = vadd.f32 %v3008, %v3027
  %3029 = vdwg.mxu0
  %3030 = vmatpush.msra.mxu0 %v2982
  %3031 = vmatpush.msra.mxu0 %v2980
  %3032 = vmatpush.msra.mxu0 %v2978
  %3033 = vmatpush.msra.mxu0 %v2976
  %3034 = vmatpush.msra.mxu0 %v2974
  %3035 = vmatpush.msra.mxu0 %v2972
  %3036 = vmatpush.msra.mxu0 %v2970
  %3037 = vmatpush.msra.mxu0 %v2968
  %3038 = vmatpush.msra.mxu0 %v2966
  %3039 = vmatpush.msra.mxu0 %v2964
  %3040 = vmatpush.msra.mxu0 %v2962
  %3041 = vmatpush.msra.mxu0 %v2960
  %3042 = vmatpush.msra.mxu0 %v2958
  %3043 = vmatpush.msra.mxu0 %v2956
  %3044 = vmatpush.msra.mxu0 %v2954
  %3045 = vmatpush.msra.mxu0 %v2952
  %3046 = vmatmul.f32.gmra.mxu0 %v2811
  %v3047 = vpop.f32.mrf.mxu0
  %v3048 = vadd.f32 0.0, %v3047
  %3049 = vdwg.mxu0
  %3050 = vmatpush.msra.mxu0 0.0
  %3051 = vmatpush.msra.mxu0 0.0
  %3052 = vmatpush.msra.mxu0 0.0
  %3053 = vmatpush.msra.mxu0 0.0
  %3054 = vmatpush.msra.mxu0 0.0
  %3055 = vmatpush.msra.mxu0 0.0
  %3056 = vmatpush.msra.mxu0 0.0
  %3057 = vmatpush.msra.mxu0 0.0
  %3058 = vmatpush.msra.mxu0 0.0
  %3059 = vmatpush.msra.mxu0 0.0
  %3060 = vmatpush.msra.mxu0 0.0
  %3061 = vmatpush.msra.mxu0 0.0
  %3062 = vmatpush.msra.mxu0 0.0
  %3063 = vmatpush.msra.mxu0 0.0
  %3064 = vmatpush.msra.mxu0 %v2986
  %3065 = vmatpush.msra.mxu0 %v2984
  %3066 = vmatmul.f32.gmra.mxu0 %v2988
  %v3067 = vpop.f32.mrf.mxu0
  %v3068 = vadd.f32 %v3048, %v3067
  %3069 = vdwg.mxu0
  %v3070 = vmax.f32 %v3028, 0.0
  %v3071 = vmax.f32 %v3068, 0.0
  %v3073 = vsel %vm1036, %v2813, 0
  %v3076 = vsel %vm1036, %v2814, 0
  %3078 = vmatpush.msra.mxu0 0.0
  %3079 = vmatpush.msra.mxu0 0.0
  %3080 = vmatpush.msra.mxu0 0.0
  %3081 = vmatpush.msra.mxu0 0.0
  %3082 = vmatpush.msra.mxu0 0.0
  %3083 = vmatpush.msra.mxu0 0.0
  %3084 = vmatpush.msra.mxu0 0.0
  %3085 = vmatpush.msra.mxu0 0.0
  %3086 = vmatpush.msra.mxu0 0.0
  %3087 = vmatpush.msra.mxu0 0.0
  %3088 = vmatpush.msra.mxu0 0.0
  %3089 = vmatpush.msra.mxu0 0.0
  %3090 = vmatpush.msra.mxu0 0.0
  %3091 = vmatpush.msra.mxu0 0.0
  %3092 = vmatpush.msra.mxu0 0.0
  %3093 = vmatpush.msra.mxu0 %v3070
  %3094 = vmatmul.f32.gmra.mxu0 %v3073
  %v3095 = vpop.f32.mrf.mxu0
  %v3096 = vadd.f32 0.0, %v3095
  %3097 = vmatmul.f32.gmra.mxu0 %v3076
  %v3098 = vpop.f32.mrf.mxu0
  %v3099 = vadd.f32 0.0, %v3098
  %3100 = vdwg.mxu0
  %3101 = vmatpush.msra.mxu0 0.0
  %3102 = vmatpush.msra.mxu0 0.0
  %3103 = vmatpush.msra.mxu0 0.0
  %3104 = vmatpush.msra.mxu0 0.0
  %3105 = vmatpush.msra.mxu0 0.0
  %3106 = vmatpush.msra.mxu0 0.0
  %3107 = vmatpush.msra.mxu0 0.0
  %3108 = vmatpush.msra.mxu0 0.0
  %3109 = vmatpush.msra.mxu0 0.0
  %3110 = vmatpush.msra.mxu0 0.0
  %3111 = vmatpush.msra.mxu0 0.0
  %3112 = vmatpush.msra.mxu0 0.0
  %3113 = vmatpush.msra.mxu0 0.0
  %3114 = vmatpush.msra.mxu0 0.0
  %3115 = vmatpush.msra.mxu0 0.0
  %3116 = vmatpush.msra.mxu0 %v3071
  %3117 = vmatmul.f32.gmra.mxu0 %v3073
  %v3118 = vpop.f32.mrf.mxu0
  %v3119 = vadd.f32 0.0, %v3118
  %3120 = vmatmul.f32.gmra.mxu0 %v3076
  %v3121 = vpop.f32.mrf.mxu0
  %v3122 = vadd.f32 0.0, %v3121
  %3123 = vdwg.mxu0
  %v3124 = vadd.f32 %v2807, %v3096
  %v3125 = vadd.f32 %v2808, %v3119
  %v3126 = vadd.f32 %v2809, %v3099
  %v3127 = vadd.f32 %v2810, %v3122
  %v3128 = vmul.f32 %v3124, %v267
  %v3129 = vmul.f32 %v3125, %v268
  %v3130 = vmul.f32 %v3126, %v267
  %v3131 = vmul.f32 %v3127, %v268
  %v3132 = vmax.f32 %v3128, 0.0
  %v3133 = vmax.f32 %v3129, 0.0
  %v3134 = vmax.f32 %v3130, 0.0
  %v3135 = vmax.f32 %v3131, 0.0
  %v3136 = vld [vmem:[%s20] sm:$0xff]
  %v3137 = vld [vmem:[%s20 + $0x8] sm:$0xff]
  %v3138 = vld [vmem:[%s20 + $0x10] sm:$0xff]
  %v3139 = vld [vmem:[%s20 + $0x18] sm:$0xff]
  %v3140 = vld [vmem:[%s20 + $0x20] sm:$0xff]
  %v3141 = vld [vmem:[%s20 + $0x28] sm:$0xff]
  %v3142 = vld [vmem:[%s20 + $0x30] sm:$0xff]
  %v3143 = vld [vmem:[%s20 + $0x38] sm:$0xff]
  %3144 = vrot.lane.b32.xlu0 %v3132, 10
  %v3145 = vpop.permute.xlu0 %3144
  %3146 = vrot.lane.b32.xlu0 %v3134, 10
  %v3147 = vpop.permute.xlu0 %3146
  %3148 = vrot.lane.b32.xlu0 %v3133, 10
  %v3149 = vpop.permute.xlu0 %3148
  %3150 = vrot.lane.b32.xlu0 %v3135, 10
  %v3151 = vpop.permute.xlu0 %3150
  %v3152 = vsel %vm283, %v3145, %v3149
  %v3153 = vsel %vm283, %v3147, %v3151
  %v3154 = vsel %vm283, %v3149, %v3145
  %v3155 = vsel %vm283, %v3151, %v3147
  %3156 = vst [vmem:[#allocation2] sm:$0xff] %v3154
  %3157 = vst [vmem:[#allocation2 + $0x8] sm:$0xff] %v3152
  %3158 = vst [vmem:[#allocation2 + $0x10] sm:$0xff] %v3155
  %3159 = vst [vmem:[#allocation2 + $0x18] sm:$0xff] %v3153
  %3160 = vrot.lane.b32.xlu0 %v3132, 9
  %v3161 = vpop.permute.xlu0 %3160
  %3162 = vrot.lane.b32.xlu0 %v3134, 9
  %v3163 = vpop.permute.xlu0 %3162
  %3164 = vrot.lane.b32.xlu0 %v3133, 9
  %v3165 = vpop.permute.xlu0 %3164
  %3166 = vrot.lane.b32.xlu0 %v3135, 9
  %v3167 = vpop.permute.xlu0 %3166
  %v3168 = vsel %vm292, %v3161, %v3165
  %v3169 = vsel %vm292, %v3163, %v3167
  %v3170 = vsel %vm292, %v3165, %v3161
  %v3171 = vsel %vm292, %v3167, %v3163
  %3172 = vst [vmem:[#allocation2 + $0x20] sm:$0xff] %v3170
  %3173 = vst [vmem:[#allocation2 + $0x28] sm:$0xff] %v3168
  %3174 = vst [vmem:[#allocation2 + $0x30] sm:$0xff] %v3171
  %3175 = vst [vmem:[#allocation2 + $0x38] sm:$0xff] %v3169
  %3176 = vrot.lane.b32.xlu0 %v3132, 8
  %v3177 = vpop.permute.xlu0 %3176
  %3178 = vrot.lane.b32.xlu0 %v3134, 8
  %v3179 = vpop.permute.xlu0 %3178
  %3180 = vrot.lane.b32.xlu0 %v3133, 8
  %v3181 = vpop.permute.xlu0 %3180
  %3182 = vrot.lane.b32.xlu0 %v3135, 8
  %v3183 = vpop.permute.xlu0 %3182
  %v3184 = vsel %vm309, %v3177, %v3181
  %v3185 = vsel %vm309, %v3179, %v3183
  %v3186 = vsel %vm309, %v3181, %v3177
  %v3187 = vsel %vm309, %v3183, %v3179
  %3188 = vst [vmem:[#allocation2 + $0x40] sm:$0xff] %v3186
  %3189 = vst [vmem:[#allocation2 + $0x48] sm:$0xff] %v3184
  %3190 = vst [vmem:[#allocation2 + $0x50] sm:$0xff] %v3187
  %3191 = vst [vmem:[#allocation2 + $0x58] sm:$0xff] %v3185
  %3192 = vrot.lane.b32.xlu0 %v3132, 1
  %v3193 = vpop.permute.xlu0 %3192
  %3194 = vrot.lane.b32.xlu0 %v3134, 1
  %v3195 = vpop.permute.xlu0 %3194
  %3196 = vrot.lane.b32.xlu0 %v3133, 1
  %v3197 = vpop.permute.xlu0 %3196
  %3198 = vrot.lane.b32.xlu0 %v3135, 1
  %v3199 = vpop.permute.xlu0 %3198
  %v3200 = vsel %vm318, %v3193, %v3197
  %v3201 = vsel %vm318, %v3195, %v3199
  %v3202 = vsel %vm318, %v3197, %v3193
  %v3203 = vsel %vm318, %v3199, %v3195
  %3204 = vst [vmem:[#allocation2 + $0x60] sm:$0xff] %v3202
  %3205 = vst [vmem:[#allocation2 + $0x68] sm:$0xff] %v3200
  %3206 = vst [vmem:[#allocation2 + $0x70] sm:$0xff] %v3203
  %3207 = vst [vmem:[#allocation2 + $0x78] sm:$0xff] %v3201
  %3208 = vst [vmem:[#allocation2 + $0x80] sm:$0xff] %v3132
  %3209 = vst [vmem:[#allocation2 + $0x88] sm:$0xff] %v3133
  %3210 = vst [vmem:[#allocation2 + $0x90] sm:$0xff] %v3134
  %3211 = vst [vmem:[#allocation2 + $0x98] sm:$0xff] %v3135
  %3212 = vrot.lane.b32.xlu0 %v3132, 127
  %v3213 = vpop.permute.xlu0 %3212
  %3214 = vrot.lane.b32.xlu0 %v3134, 127
  %v3215 = vpop.permute.xlu0 %3214
  %3216 = vrot.lane.b32.xlu0 %v3133, 127
  %v3217 = vpop.permute.xlu0 %3216
  %3218 = vrot.lane.b32.xlu0 %v3135, 127
  %v3219 = vpop.permute.xlu0 %3218
  %v3220 = vsel %vm100, %v3213, %v3217
  %v3221 = vsel %vm100, %v3215, %v3219
  %v3222 = vsel %vm100, %v3217, %v3213
  %v3223 = vsel %vm100, %v3219, %v3215
  %3224 = vst [vmem:[#allocation2 + $0xa0] sm:$0xff] %v3220
  %3225 = vst [vmem:[#allocation2 + $0xa8] sm:$0xff] %v3222
  %3226 = vst [vmem:[#allocation2 + $0xb0] sm:$0xff] %v3221
  %3227 = vst [vmem:[#allocation2 + $0xb8] sm:$0xff] %v3223
  %3228 = vrot.lane.b32.xlu0 %v3132, 120
  %v3229 = vpop.permute.xlu0 %3228
  %3230 = vrot.lane.b32.xlu0 %v3134, 120
  %v3231 = vpop.permute.xlu0 %3230
  %3232 = vrot.lane.b32.xlu0 %v3133, 120
  %v3233 = vpop.permute.xlu0 %3232
  %3234 = vrot.lane.b32.xlu0 %v3135, 120
  %v3235 = vpop.permute.xlu0 %3234
  %v3236 = vsel %vm359, %v3229, %v3233
  %v3237 = vsel %vm359, %v3231, %v3235
  %v3238 = vsel %vm359, %v3233, %v3229
  %v3239 = vsel %vm359, %v3235, %v3231
  %3240 = vst [vmem:[#allocation2 + $0xc0] sm:$0xff] %v3236
  %3241 = vst [vmem:[#allocation2 + $0xc8] sm:$0xff] %v3238
  %3242 = vst [vmem:[#allocation2 + $0xd0] sm:$0xff] %v3237
  %3243 = vst [vmem:[#allocation2 + $0xd8] sm:$0xff] %v3239
  %3244 = vrot.lane.b32.xlu0 %v3132, 119
  %v3245 = vpop.permute.xlu0 %3244
  %3246 = vrot.lane.b32.xlu0 %v3134, 119
  %v3247 = vpop.permute.xlu0 %3246
  %3248 = vrot.lane.b32.xlu0 %v3133, 119
  %v3249 = vpop.permute.xlu0 %3248
  %3250 = vrot.lane.b32.xlu0 %v3135, 119
  %v3251 = vpop.permute.xlu0 %3250
  %v3252 = vsel %vm117, %v3245, %v3249
  %v3253 = vsel %vm117, %v3247, %v3251
  %v3254 = vsel %vm117, %v3249, %v3245
  %v3255 = vsel %vm117, %v3251, %v3247
  %3256 = vst [vmem:[#allocation2 + $0xe0] sm:$0xff] %v3252
  %3257 = vst [vmem:[#allocation2 + $0xe8] sm:$0xff] %v3254
  %3258 = vst [vmem:[#allocation2 + $0xf0] sm:$0xff] %v3253
  %3259 = vst [vmem:[#allocation2 + $0xf8] sm:$0xff] %v3255
  %3260 = vrot.lane.b32.xlu0 %v3132, 118
  %v3261 = vpop.permute.xlu0 %3260
  %3262 = vrot.lane.b32.xlu0 %v3134, 118
  %v3263 = vpop.permute.xlu0 %3262
  %3264 = vrot.lane.b32.xlu0 %v3133, 118
  %v3265 = vpop.permute.xlu0 %3264
  %3266 = vrot.lane.b32.xlu0 %v3135, 118
  %v3267 = vpop.permute.xlu0 %3266
  %v3268 = vsel %vm134, %v3261, %v3265
  %v3269 = vsel %vm134, %v3263, %v3267
  %v3270 = vsel %vm134, %v3265, %v3261
  %v3271 = vsel %vm134, %v3267, %v3263
  %3272 = vst [vmem:[#allocation2 + $0x100] sm:$0xff] %v3268
  %3273 = vst [vmem:[#allocation2 + $0x108] sm:$0xff] %v3270
  %3274 = vst [vmem:[#allocation2 + $0x110] sm:$0xff] %v3269
  %3275 = vst [vmem:[#allocation2 + $0x118] sm:$0xff] %v3271
  %v3276 = vld [vmem:[#allocation2] sm:$0xff]
  %v3277 = vld [vmem:[#allocation2 + $0x8] sm:$0xff]
  %v3278 = vld [vmem:[#allocation2 + $0x10] sm:$0xff]
  %v3279 = vld [vmem:[#allocation2 + $0x18] sm:$0xff]
  %v3280 = vld [vmem:[#allocation2 + $0x20] sm:$0xff]
  %v3281 = vld [vmem:[#allocation2 + $0x28] sm:$0xff]
  %v3282 = vld [vmem:[#allocation2 + $0x30] sm:$0xff]
  %v3283 = vld [vmem:[#allocation2 + $0x38] sm:$0xff]
  %v3284 = vld [vmem:[#allocation2 + $0x40] sm:$0xff]
  %v3285 = vld [vmem:[#allocation2 + $0x48] sm:$0xff]
  %v3286 = vld [vmem:[#allocation2 + $0x50] sm:$0xff]
  %v3287 = vld [vmem:[#allocation2 + $0x58] sm:$0xff]
  %v3288 = vld [vmem:[#allocation2 + $0x60] sm:$0xff]
  %v3289 = vld [vmem:[#allocation2 + $0x68] sm:$0xff]
  %v3290 = vld [vmem:[#allocation2 + $0x70] sm:$0xff]
  %v3291 = vld [vmem:[#allocation2 + $0x78] sm:$0xff]
  %v3292 = vld [vmem:[#allocation2 + $0x80] sm:$0xff]
  %v3293 = vld [vmem:[#allocation2 + $0x88] sm:$0xff]
  %v3294 = vld [vmem:[#allocation2 + $0x90] sm:$0xff]
  %v3295 = vld [vmem:[#allocation2 + $0x98] sm:$0xff]
  %v3296 = vld [vmem:[#allocation2 + $0xa0] sm:$0xff]
  %v3297 = vld [vmem:[#allocation2 + $0xa8] sm:$0xff]
  %v3298 = vld [vmem:[#allocation2 + $0xb0] sm:$0xff]
  %v3299 = vld [vmem:[#allocation2 + $0xb8] sm:$0xff]
  %v3300 = vld [vmem:[#allocation2 + $0xc0] sm:$0xff]
  %v3301 = vld [vmem:[#allocation2 + $0xc8] sm:$0xff]
  %v3302 = vld [vmem:[#allocation2 + $0xd0] sm:$0xff]
  %v3303 = vld [vmem:[#allocation2 + $0xd8] sm:$0xff]
  %v3304 = vld [vmem:[#allocation2 + $0xe0] sm:$0xff]
  %v3305 = vld [vmem:[#allocation2 + $0xe8] sm:$0xff]
  %v3306 = vld [vmem:[#allocation2 + $0xf0] sm:$0xff]
  %v3307 = vld [vmem:[#allocation2 + $0xf8] sm:$0xff]
  %v3308 = vld [vmem:[#allocation2 + $0x100] sm:$0xff]
  %v3309 = vld [vmem:[#allocation2 + $0x108] sm:$0xff]
  %v3310 = vld [vmem:[#allocation2 + $0x110] sm:$0xff]
  %v3311 = vld [vmem:[#allocation2 + $0x118] sm:$0xff]
  %v3312 = vld [vmem:[%s21] sm:$0xff]
  %v3313 = vld [vmem:[%s21 + $0x8] sm:$0xff]
  %v3314 = vld [vmem:[%s21 + $0x10] sm:$0xff]
  %v3315 = vld [vmem:[%s21 + $0x18] sm:$0xff]
  %3317 = vset.pattern.permute.xlu0 0
  %3318 = vperm.xlu0 %3317, %v3312
  %v3319 = vpop.permute.xlu0 %3318
  %3322 = vset.pattern.permute.xlu0 0
  %3323 = vperm.xlu0 %3322, %v3313
  %v3324 = vpop.permute.xlu0 %3323
  %3327 = vset.pattern.permute.xlu0 0
  %3328 = vperm.xlu0 %3327, %v3314
  %v3329 = vpop.permute.xlu0 %3328
  %3332 = vset.pattern.permute.xlu0 0
  %3333 = vperm.xlu0 %3332, %v3315
  %v3334 = vpop.permute.xlu0 %3333
  %v3337 = vsel %vm672, %v3137, 0
  %v3340 = vsel %vm672, %v3139, 0
  %v3343 = vsel %vm672, %v3141, 0
  %v3346 = vsel %vm672, %v3143, 0
  %3348 = vmatpush.msra.mxu0 %v3306
  %3349 = vmatpush.msra.mxu0 %v3304
  %3350 = vmatpush.msra.mxu0 %v3302
  %3351 = vmatpush.msra.mxu0 %v3300
  %3352 = vmatpush.msra.mxu0 %v3298
  %3353 = vmatpush.msra.mxu0 %v3296
  %3354 = vmatpush.msra.mxu0 %v3294
  %3355 = vmatpush.msra.mxu0 %v3292
  %3356 = vmatpush.msra.mxu0 %v3290
  %3357 = vmatpush.msra.mxu0 %v3288
  %3358 = vmatpush.msra.mxu0 %v3286
  %3359 = vmatpush.msra.mxu0 %v3284
  %3360 = vmatpush.msra.mxu0 %v3282
  %3361 = vmatpush.msra.mxu0 %v3280
  %3362 = vmatpush.msra.mxu0 %v3278
  %3363 = vmatpush.msra.mxu0 %v3276
  %3364 = vmatmul.f32.gmra.mxu0 %v3136
  %v3365 = vpop.f32.mrf.mxu0
  %v3366 = vadd.f32 %v3319, %v3365
  %3367 = vmatmul.f32.gmra.mxu0 %v3138
  %v3368 = vpop.f32.mrf.mxu0
  %v3369 = vadd.f32 %v3324, %v3368
  %3370 = vmatmul.f32.gmra.mxu0 %v3140
  %v3371 = vpop.f32.mrf.mxu0
  %v3372 = vadd.f32 %v3329, %v3371
  %3373 = vmatmul.f32.gmra.mxu0 %v3142
  %v3374 = vpop.f32.mrf.mxu0
  %v3375 = vadd.f32 %v3334, %v3374
  %3376 = vdwg.mxu0
  %3377 = vmatpush.msra.mxu0 0.0
  %3378 = vmatpush.msra.mxu0 0.0
  %3379 = vmatpush.msra.mxu0 0.0
  %3380 = vmatpush.msra.mxu0 0.0
  %3381 = vmatpush.msra.mxu0 0.0
  %3382 = vmatpush.msra.mxu0 0.0
  %3383 = vmatpush.msra.mxu0 0.0
  %3384 = vmatpush.msra.mxu0 0.0
  %3385 = vmatpush.msra.mxu0 0.0
  %3386 = vmatpush.msra.mxu0 0.0
  %3387 = vmatpush.msra.mxu0 0.0
  %3388 = vmatpush.msra.mxu0 0.0
  %3389 = vmatpush.msra.mxu0 0.0
  %3390 = vmatpush.msra.mxu0 0.0
  %3391 = vmatpush.msra.mxu0 %v3310
  %3392 = vmatpush.msra.mxu0 %v3308
  %3393 = vmatmul.f32.gmra.mxu0 %v3337
  %v3394 = vpop.f32.mrf.mxu0
  %v3395 = vadd.f32 %v3366, %v3394
  %3396 = vmatmul.f32.gmra.mxu0 %v3340
  %v3397 = vpop.f32.mrf.mxu0
  %v3398 = vadd.f32 %v3369, %v3397
  %3399 = vmatmul.f32.gmra.mxu0 %v3343
  %v3400 = vpop.f32.mrf.mxu0
  %v3401 = vadd.f32 %v3372, %v3400
  %3402 = vmatmul.f32.gmra.mxu0 %v3346
  %v3403 = vpop.f32.mrf.mxu0
  %v3404 = vadd.f32 %v3375, %v3403
  %3405 = vdwg.mxu0
  %3406 = vmatpush.msra.mxu0 %v3307
  %3407 = vmatpush.msra.mxu0 %v3305
  %3408 = vmatpush.msra.mxu0 %v3303
  %3409 = vmatpush.msra.mxu0 %v3301
  %3410 = vmatpush.msra.mxu0 %v3299
  %3411 = vmatpush.msra.mxu0 %v3297
  %3412 = vmatpush.msra.mxu0 %v3295
  %3413 = vmatpush.msra.mxu0 %v3293
  %3414 = vmatpush.msra.mxu0 %v3291
  %3415 = vmatpush.msra.mxu0 %v3289
  %3416 = vmatpush.msra.mxu0 %v3287
  %3417 = vmatpush.msra.mxu0 %v3285
  %3418 = vmatpush.msra.mxu0 %v3283
  %3419 = vmatpush.msra.mxu0 %v3281
  %3420 = vmatpush.msra.mxu0 %v3279
  %3421 = vmatpush.msra.mxu0 %v3277
  %3422 = vmatmul.f32.gmra.mxu0 %v3136
  %v3423 = vpop.f32.mrf.mxu0
  %v3424 = vadd.f32 %v3319, %v3423
  %3425 = vmatmul.f32.gmra.mxu0 %v3138
  %v3426 = vpop.f32.mrf.mxu0
  %v3427 = vadd.f32 %v3324, %v3426
  %3428 = vmatmul.f32.gmra.mxu0 %v3140
  %v3429 = vpop.f32.mrf.mxu0
  %v3430 = vadd.f32 %v3329, %v3429
  %3431 = vmatmul.f32.gmra.mxu0 %v3142
  %v3432 = vpop.f32.mrf.mxu0
  %v3433 = vadd.f32 %v3334, %v3432
  %3434 = vdwg.mxu0
  %3435 = vmatpush.msra.mxu0 0.0
  %3436 = vmatpush.msra.mxu0 0.0
  %3437 = vmatpush.msra.mxu0 0.0
  %3438 = vmatpush.msra.mxu0 0.0
  %3439 = vmatpush.msra.mxu0 0.0
  %3440 = vmatpush.msra.mxu0 0.0
  %3441 = vmatpush.msra.mxu0 0.0
  %3442 = vmatpush.msra.mxu0 0.0
  %3443 = vmatpush.msra.mxu0 0.0
  %3444 = vmatpush.msra.mxu0 0.0
  %3445 = vmatpush.msra.mxu0 0.0
  %3446 = vmatpush.msra.mxu0 0.0
  %3447 = vmatpush.msra.mxu0 0.0
  %3448 = vmatpush.msra.mxu0 0.0
  %3449 = vmatpush.msra.mxu0 %v3311
  %3450 = vmatpush.msra.mxu0 %v3309
  %3451 = vmatmul.f32.gmra.mxu0 %v3337
  %v3452 = vpop.f32.mrf.mxu0
  %v3453 = vadd.f32 %v3424, %v3452
  %3454 = vmatmul.f32.gmra.mxu0 %v3340
  %v3455 = vpop.f32.mrf.mxu0
  %v3456 = vadd.f32 %v3427, %v3455
  %3457 = vmatmul.f32.gmra.mxu0 %v3343
  %v3458 = vpop.f32.mrf.mxu0
  %v3459 = vadd.f32 %v3430, %v3458
  %3460 = vmatmul.f32.gmra.mxu0 %v3346
  %v3461 = vpop.f32.mrf.mxu0
  %v3462 = vadd.f32 %v3433, %v3461
  %3463 = vdwg.mxu0
  %v3464 = vmax.f32 %v3395, 0.0
  %v3465 = vmax.f32 %v3453, 0.0
  %v3466 = vmax.f32 %v3398, 0.0
  %v3467 = vmax.f32 %v3456, 0.0
  %v3468 = vmax.f32 %v3401, 0.0
  %v3469 = vmax.f32 %v3459, 0.0
  %v3470 = vmax.f32 %v3404, 0.0
  %v3471 = vmax.f32 %v3462, 0.0
  %v3472 = vmul.f32 %v3464, %v267
  %v3473 = vmul.f32 %v3465, %v268
  %v3474 = vmul.f32 %v3466, %v267
  %v3475 = vmul.f32 %v3467, %v268
  %v3476 = vmul.f32 %v3468, %v267
  %v3477 = vmul.f32 %v3469, %v268
  %v3478 = vmul.f32 %v3470, %v267
  %v3479 = vmul.f32 %v3471, %v268
  %3480 = vst [vmem:[#allocation2] sm:$0xff] %v3472
  %3481 = vst [vmem:[#allocation2 + $0x8] sm:$0xff] %v3473
  %3482 = vrot.lane.b32.xlu0 %v3474, 1
  %v3483 = vpop.permute.xlu0 %3482
  %3484 = vrot.lane.b32.xlu0 %v3475, 1
  %v3485 = vpop.permute.xlu0 %3484
  %v3486 = vsel %vm318, %v3483, %v3485
  %v3487 = vsel %vm318, %v3485, %v3483
  %3488 = vst [vmem:[#allocation2 + $0x10] sm:$0xff] %v3487
  %3489 = vst [vmem:[#allocation2 + $0x18] sm:$0xff] %v3486
  %3490 = vst [vmem:[#allocation2 + $0x20] sm:$0xff] %v3474
  %3491 = vst [vmem:[#allocation2 + $0x28] sm:$0xff] %v3475
  %3492 = vrot.lane.b32.xlu0 %v3472, 127
  %v3493 = vpop.permute.xlu0 %3492
  %3494 = vrot.lane.b32.xlu0 %v3473, 127
  %v3495 = vpop.permute.xlu0 %3494
  %v3496 = vsel %vm100, %v3493, %v3495
  %v3497 = vsel %vm100, %v3495, %v3493
  %3498 = vst [vmem:[#allocation2 + $0x30] sm:$0xff] %v3496
  %3499 = vst [vmem:[#allocation2 + $0x38] sm:$0xff] %v3497
  %3500 = vrot.lane.b32.xlu0 %v3476, 9
  %v3501 = vpop.permute.xlu0 %3500
  %3502 = vrot.lane.b32.xlu0 %v3477, 9
  %v3503 = vpop.permute.xlu0 %3502
  %v3504 = vsel %vm292, %v3501, %v3503
  %v3505 = vsel %vm292, %v3503, %v3501
  %3506 = vst [vmem:[#allocation2 + $0x40] sm:$0xff] %v3505
  %3507 = vst [vmem:[#allocation2 + $0x48] sm:$0xff] %v3504
  %3508 = vrot.lane.b32.xlu0 %v3478, 10
  %v3509 = vpop.permute.xlu0 %3508
  %3510 = vrot.lane.b32.xlu0 %v3479, 10
  %v3511 = vpop.permute.xlu0 %3510
  %v3512 = vsel %vm283, %v3509, %v3511
  %v3513 = vsel %vm283, %v3511, %v3509
  %3514 = vst [vmem:[#allocation2 + $0x50] sm:$0xff] %v3513
  %3515 = vst [vmem:[#allocation2 + $0x58] sm:$0xff] %v3512
  %3516 = vrot.lane.b32.xlu0 %v3478, 9
  %v3517 = vpop.permute.xlu0 %3516
  %3518 = vrot.lane.b32.xlu0 %v3479, 9
  %v3519 = vpop.permute.xlu0 %3518
  %v3520 = vsel %vm292, %v3517, %v3519
  %v3521 = vsel %vm292, %v3519, %v3517
  %3522 = vst [vmem:[#allocation2 + $0x60] sm:$0xff] %v3521
  %3523 = vst [vmem:[#allocation2 + $0x68] sm:$0xff] %v3520
  %3524 = vrot.lane.b32.xlu0 %v3476, 8
  %v3525 = vpop.permute.xlu0 %3524
  %3526 = vrot.lane.b32.xlu0 %v3477, 8
  %v3527 = vpop.permute.xlu0 %3526
  %v3528 = vsel %vm309, %v3525, %v3527
  %v3529 = vsel %vm309, %v3527, %v3525
  %3530 = vst [vmem:[#allocation2 + $0x70] sm:$0xff] %v3529
  %3531 = vst [vmem:[#allocation2 + $0x78] sm:$0xff] %v3528
  %3532 = vst [vmem:[#allocation2 + $0x80] sm:$0xff] %v3476
  %3533 = vst [vmem:[#allocation2 + $0x88] sm:$0xff] %v3477
  %3534 = vrot.lane.b32.xlu0 %v3478, 1
  %v3535 = vpop.permute.xlu0 %3534
  %3536 = vrot.lane.b32.xlu0 %v3479, 1
  %v3537 = vpop.permute.xlu0 %3536
  %v3538 = vsel %vm318, %v3535, %v3537
  %v3539 = vsel %vm318, %v3537, %v3535
  %3540 = vst [vmem:[#allocation2 + $0x90] sm:$0xff] %v3539
  %3541 = vst [vmem:[#allocation2 + $0x98] sm:$0xff] %v3538
  %3542 = vst [vmem:[#allocation2 + $0xa0] sm:$0xff] %v3478
  %3543 = vst [vmem:[#allocation2 + $0xa8] sm:$0xff] %v3479
  %3544 = vrot.lane.b32.xlu0 %v3476, 127
  %v3545 = vpop.permute.xlu0 %3544
  %3546 = vrot.lane.b32.xlu0 %v3477, 127
  %v3547 = vpop.permute.xlu0 %3546
  %v3548 = vsel %vm100, %v3545, %v3547
  %v3549 = vsel %vm100, %v3547, %v3545
  %3550 = vst [vmem:[#allocation2 + $0xb0] sm:$0xff] %v3548
  %3551 = vst [vmem:[#allocation2 + $0xb8] sm:$0xff] %v3549
  %3552 = vrot.lane.b32.xlu0 %v3472, 119
  %v3553 = vpop.permute.xlu0 %3552
  %3554 = vrot.lane.b32.xlu0 %v3473, 119
  %v3555 = vpop.permute.xlu0 %3554
  %v3556 = vsel %vm117, %v3553, %v3555
  %v3557 = vsel %vm117, %v3555, %v3553
  %3558 = vst [vmem:[#allocation2 + $0xc0] sm:$0xff] %v3556
  %3559 = vst [vmem:[#allocation2 + $0xc8] sm:$0xff] %v3557
  %3560 = vrot.lane.b32.xlu0 %v3474, 120
  %v3561 = vpop.permute.xlu0 %3560
  %3562 = vrot.lane.b32.xlu0 %v3475, 120
  %v3563 = vpop.permute.xlu0 %3562
  %v3564 = vsel %vm359, %v3561, %v3563
  %v3565 = vsel %vm359, %v3563, %v3561
  %3566 = vst [vmem:[#allocation2 + $0xd0] sm:$0xff] %v3564
  %3567 = vst [vmem:[#allocation2 + $0xd8] sm:$0xff] %v3565
  %3568 = vrot.lane.b32.xlu0 %v3474, 119
  %v3569 = vpop.permute.xlu0 %3568
  %3570 = vrot.lane.b32.xlu0 %v3475, 119
  %v3571 = vpop.permute.xlu0 %3570
  %v3572 = vsel %vm117, %v3569, %v3571
  %v3573 = vsel %vm117, %v3571, %v3569
  %3574 = vst [vmem:[#allocation2 + $0xe0] sm:$0xff] %v3572
  %3575 = vst [vmem:[#allocation2 + $0xe8] sm:$0xff] %v3573
  %3576 = vrot.lane.b32.xlu0 %v3472, 118
  %v3577 = vpop.permute.xlu0 %3576
  %3578 = vrot.lane.b32.xlu0 %v3473, 118
  %v3579 = vpop.permute.xlu0 %3578
  %v3580 = vsel %vm134, %v3577, %v3579
  %v3581 = vsel %vm134, %v3579, %v3577
  %3582 = vst [vmem:[#allocation2 + $0xf0] sm:$0xff] %v3580
  %3583 = vst [vmem:[#allocation2 + $0xf8] sm:$0xff] %v3581
  %v3584 = vld [vmem:[%s22] sm:$0xff]
  %v3585 = vld [vmem:[%s22 + $0x8] sm:$0xff]
  %v3586 = vld [vmem:[#allocation2] sm:$0xff]
  %v3587 = vld [vmem:[#allocation2 + $0x8] sm:$0xff]
  %v3588 = vld [vmem:[#allocation2 + $0x10] sm:$0xff]
  %v3589 = vld [vmem:[#allocation2 + $0x18] sm:$0xff]
  %v3590 = vld [vmem:[#allocation2 + $0x20] sm:$0xff]
  %v3591 = vld [vmem:[#allocation2 + $0x28] sm:$0xff]
  %v3592 = vld [vmem:[#allocation2 + $0x30] sm:$0xff]
  %v3593 = vld [vmem:[#allocation2 + $0x38] sm:$0xff]
  %v3594 = vld [vmem:[#allocation2 + $0x40] sm:$0xff]
  %v3595 = vld [vmem:[#allocation2 + $0x48] sm:$0xff]
  %v3596 = vld [vmem:[#allocation2 + $0x50] sm:$0xff]
  %v3597 = vld [vmem:[#allocation2 + $0x58] sm:$0xff]
  %v3598 = vld [vmem:[#allocation2 + $0x60] sm:$0xff]
  %v3599 = vld [vmem:[#allocation2 + $0x68] sm:$0xff]
  %v3600 = vld [vmem:[#allocation2 + $0x70] sm:$0xff]
  %v3601 = vld [vmem:[#allocation2 + $0x78] sm:$0xff]
  %v3602 = vld [vmem:[#allocation2 + $0x80] sm:$0xff]
  %v3603 = vld [vmem:[#allocation2 + $0x88] sm:$0xff]
  %v3604 = vld [vmem:[#allocation2 + $0x90] sm:$0xff]
  %v3605 = vld [vmem:[#allocation2 + $0x98] sm:$0xff]
  %v3606 = vld [vmem:[#allocation2 + $0xa0] sm:$0xff]
  %v3607 = vld [vmem:[#allocation2 + $0xa8] sm:$0xff]
  %v3608 = vld [vmem:[#allocation2 + $0xb0] sm:$0xff]
  %v3609 = vld [vmem:[#allocation2 + $0xb8] sm:$0xff]
  %v3610 = vld [vmem:[#allocation2 + $0xc0] sm:$0xff]
  %v3611 = vld [vmem:[#allocation2 + $0xc8] sm:$0xff]
  %v3612 = vld [vmem:[#allocation2 + $0xd0] sm:$0xff]
  %v3613 = vld [vmem:[#allocation2 + $0xd8] sm:$0xff]
  %v3614 = vld [vmem:[#allocation2 + $0xe0] sm:$0xff]
  %v3615 = vld [vmem:[#allocation2 + $0xe8] sm:$0xff]
  %v3616 = vld [vmem:[#allocation2 + $0xf0] sm:$0xff]
  %v3617 = vld [vmem:[#allocation2 + $0xf8] sm:$0xff]
  %v3618 = vld [vmem:[%s23] sm:$0xff]
  %v3619 = vld [vmem:[%s23 + $0x8] sm:$0xff]
  %3621 = vset.pattern.permute.xlu0 0
  %3622 = vperm.xlu0 %3621, %v3618
  %v3623 = vpop.permute.xlu0 %3622
  %3626 = vset.pattern.permute.xlu0 0
  %3627 = vperm.xlu0 %3626, %v3619
  %v3628 = vpop.permute.xlu0 %3627
  %3630 = vmatpush.msra.mxu0 %v3616
  %3631 = vmatpush.msra.mxu0 %v3614
  %3632 = vmatpush.msra.mxu0 %v3612
  %3633 = vmatpush.msra.mxu0 %v3610
  %3634 = vmatpush.msra.mxu0 %v3608
  %3635 = vmatpush.msra.mxu0 %v3606
  %3636 = vmatpush.msra.mxu0 %v3604
  %3637 = vmatpush.msra.mxu0 %v3602
  %3638 = vmatpush.msra.mxu0 %v3600
  %3639 = vmatpush.msra.mxu0 %v3598
  %3640 = vmatpush.msra.mxu0 %v3596
  %3641 = vmatpush.msra.mxu0 %v3594
  %3642 = vmatpush.msra.mxu0 %v3592
  %3643 = vmatpush.msra.mxu0 %v3590
  %3644 = vmatpush.msra.mxu0 %v3588
  %3645 = vmatpush.msra.mxu0 %v3586
  %3646 = vmatmul.f32.gmra.mxu0 %v3584
  %v3647 = vpop.f32.mrf.mxu0
  %v3648 = vadd.f32 %v3623, %v3647
  %3649 = vmatmul.f32.gmra.mxu0 %v3585
  %v3650 = vpop.f32.mrf.mxu0
  %v3651 = vadd.f32 %v3628, %v3650
  %3652 = vdwg.mxu0
  %3653 = vmatpush.msra.mxu0 %v3617
  %3654 = vmatpush.msra.mxu0 %v3615
  %3655 = vmatpush.msra.mxu0 %v3613
  %3656 = vmatpush.msra.mxu0 %v3611
  %3657 = vmatpush.msra.mxu0 %v3609
  %3658 = vmatpush.msra.mxu0 %v3607
  %3659 = vmatpush.msra.mxu0 %v3605
  %3660 = vmatpush.msra.mxu0 %v3603
  %3661 = vmatpush.msra.mxu0 %v3601
  %3662 = vmatpush.msra.mxu0 %v3599
  %3663 = vmatpush.msra.mxu0 %v3597
  %3664 = vmatpush.msra.mxu0 %v3595
  %3665 = vmatpush.msra.mxu0 %v3593
  %3666 = vmatpush.msra.mxu0 %v3591
  %3667 = vmatpush.msra.mxu0 %v3589
  %3668 = vmatpush.msra.mxu0 %v3587
  %3669 = vmatmul.f32.gmra.mxu0 %v3584
  %v3670 = vpop.f32.mrf.mxu0
  %v3671 = vadd.f32 %v3623, %v3670
  %3672 = vmatmul.f32.gmra.mxu0 %v3585
  %v3673 = vpop.f32.mrf.mxu0
  %v3674 = vadd.f32 %v3628, %v3673
  %3675 = vdwg.mxu0
  %3676 = vst [vmem:[%s26] sm:$0xff] %v3648
  %3677 = vst [vmem:[%s26 + $0x8] sm:$0xff] %v3671
  %3678 = vst [vmem:[%s26 + $0x10] sm:$0xff] %v3651
  %3679 = vst [vmem:[%s26 + $0x18] sm:$0xff] %v3674
  // Predicated region
  $region98: #{vqvae_forward.1} parent=0 // pred_check
    _
  $region99: #{vqvae_forward.1} parent=0 // pred_check_branch
    %3681 = sbr.rel (0) target = $region101
  $region100: #{vqvae_forward.1} parent=0 // pred_region
    _
  $region101: #{vqvae_forward.1} parent=0 // pred_fallthru
    _
  // Predicated region
  $region102: #{vqvae_forward.1} parent=0 // pred_check
    _
  $region103: #{vqvae_forward.1} parent=0 // pred_check_branch
    %3683 = sbr.rel (0) target = $region105
  $region104: #{vqvae_forward.1} parent=0 // pred_region
    _
  $region105: #{vqvae_forward.1} parent=0 // pred_fallthru
    _
  // Predicated region
  $region106: #{vqvae_forward.1} parent=0 // pred_check
    _
  $region107: #{vqvae_forward.1} parent=0 // pred_check_branch
    %3685 = sbr.rel (0) target = $region109
  $region108: #{vqvae_forward.1} parent=0 // pred_region
    _
  $region109: #{vqvae_forward.1} parent=0 // pred_fallthru
    _
  // Predicated region
  $region110: #{vqvae_forward.1} parent=0 // pred_check
    _
  $region111: #{vqvae_forward.1} parent=0 // pred_check_branch
    %3687 = sbr.rel (0) target = $region113
  $region112: #{vqvae_forward.1} parent=0 // pred_region
    _
  $region113: #{vqvae_forward.1} parent=0 // pred_fallthru
    _
  // Predicated region
  $region114: #{vqvae_forward.1} parent=0 // pred_check
    _
  $region115: #{vqvae_forward.1} parent=0 // pred_check_branch
    %3689 = sbr.rel (0) target = $region117
  $region116: #{vqvae_forward.1} parent=0 // pred_region
    _
  $region117: #{vqvae_forward.1} parent=0 // pred_fallthru
    _
  // Predicated region
  $region118: #{vqvae_forward.1} parent=0 // pred_check
    _
  $region119: #{vqvae_forward.1} parent=0 // pred_check_branch
    %3691 = sbr.rel (0) target = $region121
  $region120: #{vqvae_forward.1} parent=0 // pred_region
    _
  $region121: #{vqvae_forward.1} parent=0 // pred_fallthru
    _
  // Predicated region
  $region122: #{vqvae_forward.1} parent=0 // pred_check
    _
  $region123: #{vqvae_forward.1} parent=0 // pred_check_branch
    %3693 = sbr.rel (0) target = $region125
  $region124: #{vqvae_forward.1} parent=0 // pred_region
    _
  $region125: #{vqvae_forward.1} parent=0 // pred_fallthru
    _
  // Predicated region
  $region126: #{vqvae_forward.1} parent=0 // pred_check
    _
  $region127: #{vqvae_forward.1} parent=0 // pred_check_branch
    %3695 = sbr.rel (0) target = $region129
  $region128: #{vqvae_forward.1} parent=0 // pred_region
    _
  $region129: #{vqvae_forward.1} parent=0 // pred_fallthru
    _

</llo_original>
